<compile_context>
chip_gen: v7x
topology: tpu7x:2x2x1
jax: 0.10.0
libtpu: 0.0.40
codegen_flags: <defaults>
</compile_context>

<pallas_src>
import functools

import jax
import jax.numpy as jnp
from jax import lax
from jax.experimental import pallas as pl
from jax.experimental.pallas import tpu as pltpu

BN_EPS = 1e-5
LANES = 128  # conv output channels are zero-padded to this many lanes
# Set to jnp.bfloat16 on v6e/v7x for higher MXU throughput (accumulation stays
# f32 via preferred_element_type); kept f32 here to preserve the module's f32
# numerics and the tight reference tolerance.
MATMUL_DTYPE = jnp.float32


def _conv1_relu_stats_kernel(xp_ref, w1_ref, b1_ref,
                             h_ref, sum_ref, sq_ref,
                             patch_sc, *, H, W, Cin):
    """3x3 conv (input pre-padded) + bias + ReLU for one image; emits raw h and
    accumulates per-channel sum / sum-of-squares across the batch grid axis."""
    # In-kernel im2col (VMEM only): folded (H*W, 9*Cin) patch matrix.
    for idx in range(9):
        dy, dx = idx // 3, idx % 3
        piece = xp_ref[dy:dy + H, dx:dx + W, :]                  # (H, W, Cin)
        patch_sc[:, idx * Cin:(idx + 1) * Cin] = (
            piece.reshape(H * W, Cin).astype(patch_sc.dtype))

    # Single folded matmul over all 9 taps * Cin, f32 accumulation on the MXU.
    y = jnp.dot(patch_sc[...], w1_ref[...], preferred_element_type=jnp.float32)
    y = jnp.maximum(y + b1_ref[...], 0.0)                        # bias + ReLU
    h_ref[...] = y.astype(h_ref.dtype)

    # BatchNorm batch statistics: grid accumulator (init at step 0, add every step).
    @pl.when(pl.program_id(0) == 0)
    def _():
        sum_ref[...] = jnp.zeros_like(sum_ref)
        sq_ref[...] = jnp.zeros_like(sq_ref)

    sum_ref[...] += jnp.sum(y, axis=0, keepdims=True)
    sq_ref[...] += jnp.sum(y * y, axis=0, keepdims=True)


def _bn_conv2_kernel(h_ref, scale_ref, shift_ref, w2_ref, b2_ref,
                     o_ref, hp_sc, taps_sc, *, H, W, Cout):
    """BN affine (folded batch stats) + 4x4 stride-2 conv for one image."""
    Ho, Wo = H // 2, W // 2
    # Per-channel BN affine applied in VMEM (no extra HBM pass over h).
    hn = (h_ref[...] * scale_ref[...] + shift_ref[...])[:, :Cout]  # (H*W, Cout)

    # Zero-padded spatial scratch: the conv pads the *normalized* h with zeros,
    # so only the interior is written (border stays 0).
    hp_sc[...] = jnp.zeros_like(hp_sc)
    hp_sc[1:H + 1, 1:W + 1, :] = hn.reshape(H, W, Cout)

    # Strided in-kernel im2col for the 4x4 / stride-2 conv, folded into one dot.
    for idx in range(16):
        ky, kx = idx // 4, idx % 4
        piece = hp_sc[pl.ds(ky, Ho, 2), pl.ds(kx, Wo, 2), :]       # (Ho, Wo, Cout)
        taps_sc[:, idx * Cout:(idx + 1) * Cout] = (
            piece.reshape(Ho * Wo, Cout).astype(taps_sc.dtype))

    acc = jnp.dot(taps_sc[...], w2_ref[...], preferred_element_type=jnp.float32)
    o_ref[...] = (acc + b2_ref[...]).astype(o_ref.dtype)


def block_forward(x_nchw, params):
    """Pallas forward pass for Block(in_ch, out_ch, up=False). Input/output NCHW."""
    w1, b1 = params["w1"], params["b1"]          # (3,3,Cin,Cout), (Cout,)
    gamma, beta = params["gamma"], params["beta"]
    w2, b2 = params["w2"], params["b2"]          # (4,4,Cout,Cout), (Cout,)

    x = jnp.transpose(x_nchw, (0, 2, 3, 1)).astype(jnp.float32)  # NCHW -> NHWC
    N, H, W, Cin = x.shape
    Cout = w1.shape[-1]
    assert H % 2 == 0 and W % 2 == 0, "stride-2 transform assumes even H, W"
    assert Cout <= LANES
    M = N * H * W
    Ho, Wo = H // 2, W // 2
    Cp = LANES

    # ---- one-time weight / bias layout prep (tiny, host-side) ----------------
    w1f = jnp.pad(w1.reshape(9 * Cin, Cout),
                  ((0, 0), (0, Cp - Cout))).astype(MATMUL_DTYPE)
    b1p = jnp.pad(b1, (0, Cp - Cout)).reshape(1, Cp).astype(jnp.float32)
    w2f = jnp.pad(w2.reshape(16 * Cout, Cout),
                  ((0, 0), (0, Cp - Cout))).astype(MATMUL_DTYPE)
    b2p = jnp.pad(b2, (0, Cp - Cout)).reshape(1, Cp).astype(jnp.float32)
    gammap = jnp.pad(gamma, (0, Cp - Cout)).astype(jnp.float32)
    betap = jnp.pad(beta, (0, Cp - Cout)).astype(jnp.float32)

    xp = jnp.pad(x, ((0, 0), (1, 1), (1, 1), (0, 0)))  # cheap halo pad (no im2col blowup)

    # ---- pass 1: conv1 + bias + ReLU, raw h + BN stats accumulator -----------
    kernel1 = functools.partial(_conv1_relu_stats_kernel, H=H, W=W, Cin=Cin)
    h2d, csum, csq = pl.pallas_call(
        kernel1,
        out_shape=(jax.ShapeDtypeStruct((M, Cp), jnp.float32),
                   jax.ShapeDtypeStruct((1, Cp), jnp.float32),
                   jax.ShapeDtypeStruct((1, Cp), jnp.float32)),
        grid_spec=pltpu.PrefetchScalarGridSpec(
            num_scalar_prefetch=0, grid=(N,),
            in_specs=[pl.BlockSpec((None, H + 2, W + 2, Cin), lambda n: (n, 0, 0, 0)),
                      pl.BlockSpec((9 * Cin, Cp), lambda n: (0, 0)),
                      pl.BlockSpec((1, Cp), lambda n: (0, 0))],
            out_specs=[pl.BlockSpec((H * W, Cp), lambda n: (n, 0)),
                       pl.BlockSpec((1, Cp), lambda n: (0, 0)),
                       pl.BlockSpec((1, Cp), lambda n: (0, 0))],
            scratch_shapes=[pltpu.VMEM((H * W, 9 * Cin), MATMUL_DTYPE)]),
        compiler_params=pltpu.CompilerParams(
            dimension_semantics=("arbitrary",),        # stats accumulator axis
            vmem_limit_bytes=32 * 1024 * 1024),
    )(xp, w1f, b1p)

    # ---- fold BN (training-mode batch stats) into per-channel scale/shift ----
    mean = csum[0] / M
    var = jnp.maximum(csq[0] / M - mean * mean, 0.0)   # biased var; guard cancellation
    inv = lax.rsqrt(var + BN_EPS)
    scale = (gammap * inv).reshape(1, Cp)
    shift = (betap - mean * gammap * inv).reshape(1, Cp)

    # ---- pass 2: BN affine + conv2d (4x4, stride=2, pad=1) --------------------
    kernel2 = functools.partial(_bn_conv2_kernel, H=H, W=W, Cout=Cout)
    o2d = pl.pallas_call(
        kernel2,
        out_shape=jax.ShapeDtypeStruct((N * Ho * Wo, Cp), jnp.float32),
        grid_spec=pltpu.PrefetchScalarGridSpec(
            num_scalar_prefetch=0, grid=(N,),
            in_specs=[pl.BlockSpec((H * W, Cp), lambda n: (n, 0)),
                      pl.BlockSpec((1, Cp), lambda n: (0, 0)),
                      pl.BlockSpec((1, Cp), lambda n: (0, 0)),
                      pl.BlockSpec((16 * Cout, Cp), lambda n: (0, 0)),
                      pl.BlockSpec((1, Cp), lambda n: (0, 0))],
            out_specs=pl.BlockSpec((Ho * Wo, Cp), lambda n: (n, 0)),
            scratch_shapes=[pltpu.VMEM((H + 2, W + 2, Cout), jnp.float32),
                            pltpu.VMEM((Ho * Wo, 16 * Cout), MATMUL_DTYPE)]),
        compiler_params=pltpu.CompilerParams(
            dimension_semantics=("parallel",),          # shardable across cores
            vmem_limit_bytes=32 * 1024 * 1024),
    )(h2d, scale, shift, w2f, b2p)

    out = o2d[:, :Cout].reshape(N, Ho, Wo, Cout)
    return jnp.transpose(out, (0, 3, 1, 2))                       # NHWC -> NCHW


def ref_forward(x_nchw, params):
    """Pure-JAX reference (mirrors the PyTorch forward in training mode)."""
    x = jnp.transpose(x_nchw, (0, 2, 3, 1)).astype(jnp.float32)
    dn = ("NHWC", "HWIO", "NHWC")
    y = lax.conv_general_dilated(x, params["w1"], (1, 1), ((1, 1), (1, 1)),
                                 dimension_numbers=dn) + params["b1"]
    y = jnp.maximum(y, 0.0)
    mean = y.mean(axis=(0, 1, 2))
    var = y.var(axis=(0, 1, 2))          # biased, as used by BN training normalization
    y = (y - mean) * lax.rsqrt(var + BN_EPS) * params["gamma"] + params["beta"]
    out = lax.conv_general_dilated(y, params["w2"], (2, 2), ((1, 1), (1, 1)),
                                   dimension_numbers=dn) + params["b2"]
    return jnp.transpose(out, (0, 3, 1, 2))


if __name__ == "__main__":
    in_ch, out_ch = 4, 8
    N, H, W = 2, 16, 16

    key = jax.random.PRNGKey(0)
    kx, k1, kb1, kg, kbt, k2, kb2 = jax.random.split(key, 7)

    x = jax.random.normal(kx, (N, in_ch, H, W), jnp.float32)      # NCHW, like PyTorch
    params = {
        "w1":    0.1 * jax.random.normal(k1, (3, 3, in_ch, out_ch), jnp.float32),
        "b1":    0.1 * jax.random.normal(kb1, (out_ch,), jnp.float32),
        "gamma": 1.0 + 0.1 * jax.random.normal(kg, (out_ch,), jnp.float32),
        "beta":  0.1 * jax.random.normal(kbt, (out_ch,), jnp.float32),
        "w2":    0.1 * jax.random.normal(k2, (4, 4, out_ch, out_ch), jnp.float32),
        "b2":    0.1 * jax.random.normal(kb2, (out_ch,), jnp.float32),
    }

    fwd = jax.jit(block_forward)
    out = jax.block_until_ready(fwd(x, params))
    ref = jax.block_until_ready(ref_forward(x, params))

    assert out.shape == (N, out_ch, H // 2, W // 2), out.shape
    err = float(jnp.max(jnp.abs(out - ref)))
    assert err < 2e-4, err
    print("KERNEL_OK")
</pallas_src>

<mosaic_0001>
module attributes {stable_mosaic.version = 11 : i64} {
  func.func @_conv1_relu_stats_kernel(%arg0: i32, %arg1: memref<1x18x18x4xf32, #tpu.memory_space<vmem>>, %arg2: memref<36x128xf32, #tpu.memory_space<vmem>>, %arg3: memref<1x128xf32, #tpu.memory_space<vmem>>, %arg4: memref<256x128xf32, #tpu.memory_space<vmem>>, %arg5: memref<1x128xf32, #tpu.memory_space<vmem>>, %arg6: memref<1x128xf32, #tpu.memory_space<vmem>>, %arg7: memref<256x36xf32, #tpu.memory_space<vmem>>) attributes {dimension_semantics = [#tpu.dimension_semantics<arbitrary>], iteration_bounds = array<i64: 2>, scalar_prefetch = 0 : i64, scratch_operands = 1 : i64, tpu.core_type = #tpu.core_type<tc>, window_params = [{transform_indices = @transform_0, window_bounds = array<i64: 1, 18, 18, 4>}, {pipeline_mode = #tpu.pipeline_mode<synchronous>, transform_indices = @transform_1, window_bounds = array<i64: 36, 128>}, {pipeline_mode = #tpu.pipeline_mode<synchronous>, transform_indices = @transform_2, window_bounds = array<i64: 1, 128>}, {transform_indices = @transform_3, window_bounds = array<i64: 256, 128>}, {pipeline_mode = #tpu.pipeline_mode<synchronous>, transform_indices = @transform_4, window_bounds = array<i64: 1, 128>}, {pipeline_mode = #tpu.pipeline_mode<synchronous>, transform_indices = @transform_5, window_bounds = array<i64: 1, 128>}]} {
    %c0 = arith.constant 0 : index
    %c0_0 = arith.constant 0 : index
    %c0_1 = arith.constant 0 : index
    %c0_2 = arith.constant 0 : index
    %0 = vector.load %arg1[%c0, %c0_0, %c0_1, %c0_2] : memref<1x18x18x4xf32, #tpu.memory_space<vmem>>, vector<1x16x16x4xf32>
    %1 = vector.shape_cast %0 : vector<1x16x16x4xf32> to vector<16x16x4xf32>
    %2 = vector.shape_cast %1 : vector<16x16x4xf32> to vector<256x4xf32>
    %c0_3 = arith.constant 0 : index
    %c0_4 = arith.constant 0 : index
    %3 = vector.load %arg7[%c0_3, %c0_4] : memref<256x36xf32, #tpu.memory_space<vmem>>, vector<256x4xf32>
    tpu.vector_store %arg7[%c0_3, %c0_4], %2 {strides = array<i32>} : memref<256x36xf32, #tpu.memory_space<vmem>>, vector<256x4xf32>,
    %c0_5 = arith.constant 0 : index
    %c0_6 = arith.constant 0 : index
    %c1 = arith.constant 1 : index
    %c0_7 = arith.constant 0 : index
    %4 = vector.load %arg1[%c0_5, %c0_6, %c1, %c0_7] : memref<1x18x18x4xf32, #tpu.memory_space<vmem>>, vector<1x16x16x4xf32>
    %5 = vector.shape_cast %4 : vector<1x16x16x4xf32> to vector<16x16x4xf32>
    %6 = vector.shape_cast %5 : vector<16x16x4xf32> to vector<256x4xf32>
    %c0_8 = arith.constant 0 : index
    %c4 = arith.constant 4 : index
    %7 = vector.load %arg7[%c0_8, %c4] : memref<256x36xf32, #tpu.memory_space<vmem>>, vector<256x4xf32>
    tpu.vector_store %arg7[%c0_8, %c4], %6 {strides = array<i32>} : memref<256x36xf32, #tpu.memory_space<vmem>>, vector<256x4xf32>,
    %c0_9 = arith.constant 0 : index
    %c0_10 = arith.constant 0 : index
    %c2 = arith.constant 2 : index
    %c0_11 = arith.constant 0 : index
    %8 = vector.load %arg1[%c0_9, %c0_10, %c2, %c0_11] : memref<1x18x18x4xf32, #tpu.memory_space<vmem>>, vector<1x16x16x4xf32>
    %9 = vector.shape_cast %8 : vector<1x16x16x4xf32> to vector<16x16x4xf32>
    %10 = vector.shape_cast %9 : vector<16x16x4xf32> to vector<256x4xf32>
    %c0_12 = arith.constant 0 : index
    %c8 = arith.constant 8 : index
    %11 = vector.load %arg7[%c0_12, %c8] : memref<256x36xf32, #tpu.memory_space<vmem>>, vector<256x4xf32>
    tpu.vector_store %arg7[%c0_12, %c8], %10 {strides = array<i32>} : memref<256x36xf32, #tpu.memory_space<vmem>>, vector<256x4xf32>,
    %c0_13 = arith.constant 0 : index
    %c1_14 = arith.constant 1 : index
    %c0_15 = arith.constant 0 : index
    %c0_16 = arith.constant 0 : index
    %12 = vector.load %arg1[%c0_13, %c1_14, %c0_15, %c0_16] : memref<1x18x18x4xf32, #tpu.memory_space<vmem>>, vector<1x16x16x4xf32>
    %13 = vector.shape_cast %12 : vector<1x16x16x4xf32> to vector<16x16x4xf32>
    %14 = vector.shape_cast %13 : vector<16x16x4xf32> to vector<256x4xf32>
    %c0_17 = arith.constant 0 : index
    %c12 = arith.constant 12 : index
    %15 = vector.load %arg7[%c0_17, %c12] : memref<256x36xf32, #tpu.memory_space<vmem>>, vector<256x4xf32>
    tpu.vector_store %arg7[%c0_17, %c12], %14 {strides = array<i32>} : memref<256x36xf32, #tpu.memory_space<vmem>>, vector<256x4xf32>,
    %c0_18 = arith.constant 0 : index
    %c1_19 = arith.constant 1 : index
    %c1_20 = arith.constant 1 : index
    %c0_21 = arith.constant 0 : index
    %16 = vector.load %arg1[%c0_18, %c1_19, %c1_20, %c0_21] : memref<1x18x18x4xf32, #tpu.memory_space<vmem>>, vector<1x16x16x4xf32>
    %17 = vector.shape_cast %16 : vector<1x16x16x4xf32> to vector<16x16x4xf32>
    %18 = vector.shape_cast %17 : vector<16x16x4xf32> to vector<256x4xf32>
    %c0_22 = arith.constant 0 : index
    %c16 = arith.constant 16 : index
    %19 = vector.load %arg7[%c0_22, %c16] : memref<256x36xf32, #tpu.memory_space<vmem>>, vector<256x4xf32>
    tpu.vector_store %arg7[%c0_22, %c16], %18 {strides = array<i32>} : memref<256x36xf32, #tpu.memory_space<vmem>>, vector<256x4xf32>,
    %c0_23 = arith.constant 0 : index
    %c1_24 = arith.constant 1 : index
    %c2_25 = arith.constant 2 : index
    %c0_26 = arith.constant 0 : index
    %20 = vector.load %arg1[%c0_23, %c1_24, %c2_25, %c0_26] : memref<1x18x18x4xf32, #tpu.memory_space<vmem>>, vector<1x16x16x4xf32>
    %21 = vector.shape_cast %20 : vector<1x16x16x4xf32> to vector<16x16x4xf32>
    %22 = vector.shape_cast %21 : vector<16x16x4xf32> to vector<256x4xf32>
    %c0_27 = arith.constant 0 : index
    %c20 = arith.constant 20 : index
    %23 = vector.load %arg7[%c0_27, %c20] : memref<256x36xf32, #tpu.memory_space<vmem>>, vector<256x4xf32>
    tpu.vector_store %arg7[%c0_27, %c20], %22 {strides = array<i32>} : memref<256x36xf32, #tpu.memory_space<vmem>>, vector<256x4xf32>,
    %c0_28 = arith.constant 0 : index
    %c2_29 = arith.constant 2 : index
    %c0_30 = arith.constant 0 : index
    %c0_31 = arith.constant 0 : index
    %24 = vector.load %arg1[%c0_28, %c2_29, %c0_30, %c0_31] : memref<1x18x18x4xf32, #tpu.memory_space<vmem>>, vector<1x16x16x4xf32>
    %25 = vector.shape_cast %24 : vector<1x16x16x4xf32> to vector<16x16x4xf32>
    %26 = vector.shape_cast %25 : vector<16x16x4xf32> to vector<256x4xf32>
    %c0_32 = arith.constant 0 : index
    %c24 = arith.constant 24 : index
    %27 = vector.load %arg7[%c0_32, %c24] : memref<256x36xf32, #tpu.memory_space<vmem>>, vector<256x4xf32>
    tpu.vector_store %arg7[%c0_32, %c24], %26 {strides = array<i32>} : memref<256x36xf32, #tpu.memory_space<vmem>>, vector<256x4xf32>,
    %c0_33 = arith.constant 0 : index
    %c2_34 = arith.constant 2 : index
    %c1_35 = arith.constant 1 : index
    %c0_36 = arith.constant 0 : index
    %28 = vector.load %arg1[%c0_33, %c2_34, %c1_35, %c0_36] : memref<1x18x18x4xf32, #tpu.memory_space<vmem>>, vector<1x16x16x4xf32>
    %29 = vector.shape_cast %28 : vector<1x16x16x4xf32> to vector<16x16x4xf32>
    %30 = vector.shape_cast %29 : vector<16x16x4xf32> to vector<256x4xf32>
    %c0_37 = arith.constant 0 : index
    %c28 = arith.constant 28 : index
    %31 = vector.load %arg7[%c0_37, %c28] : memref<256x36xf32, #tpu.memory_space<vmem>>, vector<256x4xf32>
    tpu.vector_store %arg7[%c0_37, %c28], %30 {strides = array<i32>} : memref<256x36xf32, #tpu.memory_space<vmem>>, vector<256x4xf32>,
    %c0_38 = arith.constant 0 : index
    %c2_39 = arith.constant 2 : index
    %c2_40 = arith.constant 2 : index
    %c0_41 = arith.constant 0 : index
    %32 = vector.load %arg1[%c0_38, %c2_39, %c2_40, %c0_41] : memref<1x18x18x4xf32, #tpu.memory_space<vmem>>, vector<1x16x16x4xf32>
    %33 = vector.shape_cast %32 : vector<1x16x16x4xf32> to vector<16x16x4xf32>
    %34 = vector.shape_cast %33 : vector<16x16x4xf32> to vector<256x4xf32>
    %c0_42 = arith.constant 0 : index
    %c32 = arith.constant 32 : index
    %35 = vector.load %arg7[%c0_42, %c32] : memref<256x36xf32, #tpu.memory_space<vmem>>, vector<256x4xf32>
    tpu.vector_store %arg7[%c0_42, %c32], %34 {strides = array<i32>} : memref<256x36xf32, #tpu.memory_space<vmem>>, vector<256x4xf32>,
    %c0_43 = arith.constant 0 : index
    %c0_44 = arith.constant 0 : index
    %36 = vector.load %arg7[%c0_43, %c0_44] : memref<256x36xf32, #tpu.memory_space<vmem>>, vector<256x36xf32>
    %c0_45 = arith.constant 0 : index
    %c0_46 = arith.constant 0 : index
    %37 = vector.load %arg2[%c0_45, %c0_46] : memref<36x128xf32, #tpu.memory_space<vmem>>, vector<36x128xf32>
    %cst = arith.constant dense<0.000000e+00> : vector<256x128xf32>
    %38 = tpu.matmul %36, %37, %cst {dimension_numbers = #tpu.dot_dimension_numbers<[1], [0], [0], [1], [0, 0, 1, 1], [], []>} : vector<256x36xf32>, vector<36x128xf32>, vector<256x128xf32> -> vector<256x128xf32>
    %c0_47 = arith.constant 0 : index
    %c0_48 = arith.constant 0 : index
    %39 = vector.load %arg3[%c0_47, %c0_48] : memref<1x128xf32, #tpu.memory_space<vmem>>, vector<1x128xf32>
    %40 = vector.broadcast %39 : vector<1x128xf32> to vector<256x128xf32>
    %41 = arith.addf %38, %40 : vector<256x128xf32>
    %cst_49 = arith.constant 0.000000e+00 : f32
    %42 = vector.broadcast %cst_49 : f32 to vector<256x128xf32>
    %43 = arith.maximumf %41, %42 : vector<256x128xf32>
    %c0_50 = arith.constant 0 : index
    %c0_51 = arith.constant 0 : index
    %44 = vector.load %arg4[%c0_50, %c0_51] : memref<256x128xf32, #tpu.memory_space<vmem>>, vector<256x128xf32>
    tpu.vector_store %arg4[%c0_50, %c0_51], %43 {strides = array<i32>} : memref<256x128xf32, #tpu.memory_space<vmem>>, vector<256x128xf32>,
    %c0_i32 = arith.constant 0 : i32
    %45 = arith.cmpi eq, %arg0, %c0_i32 : i32
    %46 = arith.extui %45 : i1 to i32
    %c0_i32_52 = arith.constant 0 : i32
    %47 = arith.cmpi ne, %46, %c0_i32_52 : i32
    scf.if %47 {
      %cst_63 = arith.constant 0.000000e+00 : f32
      %59 = vector.broadcast %cst_63 : f32 to vector<1x128xf32>
      %c0_64 = arith.constant 0 : index
      %c0_65 = arith.constant 0 : index
      %60 = vector.load %arg5[%c0_64, %c0_65] : memref<1x128xf32, #tpu.memory_space<vmem>>, vector<1x128xf32>
      tpu.vector_store %arg5[%c0_64, %c0_65], %59 {strides = array<i32>} : memref<1x128xf32, #tpu.memory_space<vmem>>, vector<1x128xf32>,
      %cst_66 = arith.constant 0.000000e+00 : f32
      %61 = vector.broadcast %cst_66 : f32 to vector<1x128xf32>
      %c0_67 = arith.constant 0 : index
      %c0_68 = arith.constant 0 : index
      %62 = vector.load %arg6[%c0_67, %c0_68] : memref<1x128xf32, #tpu.memory_space<vmem>>, vector<1x128xf32>
      tpu.vector_store %arg6[%c0_67, %c0_68], %61 {strides = array<i32>} : memref<1x128xf32, #tpu.memory_space<vmem>>, vector<1x128xf32>,
    } else {
    }
    %c0_53 = arith.constant 0 : index
    %c0_54 = arith.constant 0 : index
    %48 = vector.load %arg5[%c0_53, %c0_54] : memref<1x128xf32, #tpu.memory_space<vmem>>, vector<1x128xf32>
    %cst_55 = arith.constant dense<0.000000e+00> : vector<128xf32>
    %49 = vector.multi_reduction <add>, %43, %cst_55 [0] : vector<256x128xf32> to vector<128xf32>
    %50 = vector.shape_cast %49 : vector<128xf32> to vector<1x128xf32>
    %51 = arith.addf %48, %50 : vector<1x128xf32>
    %c0_56 = arith.constant 0 : index
    %c0_57 = arith.constant 0 : index
    %52 = vector.load %arg5[%c0_56, %c0_57] : memref<1x128xf32, #tpu.memory_space<vmem>>, vector<1x128xf32>
    tpu.vector_store %arg5[%c0_56, %c0_57], %51 {strides = array<i32>} : memref<1x128xf32, #tpu.memory_space<vmem>>, vector<1x128xf32>,
    %c0_58 = arith.constant 0 : index
    %c0_59 = arith.constant 0 : index
    %53 = vector.load %arg6[%c0_58, %c0_59] : memref<1x128xf32, #tpu.memory_space<vmem>>, vector<1x128xf32>
    %54 = arith.mulf %43, %43 : vector<256x128xf32>
    %cst_60 = arith.constant dense<0.000000e+00> : vector<128xf32>
    %55 = vector.multi_reduction <add>, %54, %cst_60 [0] : vector<256x128xf32> to vector<128xf32>
    %56 = vector.shape_cast %55 : vector<128xf32> to vector<1x128xf32>
    %57 = arith.addf %53, %56 : vector<1x128xf32>
    %c0_61 = arith.constant 0 : index
    %c0_62 = arith.constant 0 : index
    %58 = vector.load %arg6[%c0_61, %c0_62] : memref<1x128xf32, #tpu.memory_space<vmem>>, vector<1x128xf32>
    tpu.vector_store %arg6[%c0_61, %c0_62], %57 {strides = array<i32>} : memref<1x128xf32, #tpu.memory_space<vmem>>, vector<1x128xf32>,
    return
  }
  func.func @transform_0(%arg0: i32) -> (i32, i32, i32, i32) {
    %c0_i32 = arith.constant 0 : i32
    %c0_i32_0 = arith.constant 0 : i32
    %c0_i32_1 = arith.constant 0 : i32
    %c0_i32_2 = arith.constant 0 : i32
    return %arg0, %c0_i32, %c0_i32_0, %c0_i32_1 : i32, i32, i32, i32
  }
  func.func @transform_1(%arg0: i32) -> (i32, i32) {
    %c0_i32 = arith.constant 0 : i32
    %c0_i32_0 = arith.constant 0 : i32
    %c0_i32_1 = arith.constant 0 : i32
    return %c0_i32, %c0_i32_0 : i32, i32
  }
  func.func @transform_2(%arg0: i32) -> (i32, i32) {
    %c0_i32 = arith.constant 0 : i32
    %c0_i32_0 = arith.constant 0 : i32
    %c0_i32_1 = arith.constant 0 : i32
    return %c0_i32, %c0_i32_0 : i32, i32
  }
  func.func @transform_3(%arg0: i32) -> (i32, i32) {
    %c0_i32 = arith.constant 0 : i32
    %c0_i32_0 = arith.constant 0 : i32
    return %arg0, %c0_i32 : i32, i32
  }
  func.func @transform_4(%arg0: i32) -> (i32, i32) {
    %c0_i32 = arith.constant 0 : i32
    %c0_i32_0 = arith.constant 0 : i32
    %c0_i32_1 = arith.constant 0 : i32
    return %c0_i32, %c0_i32_0 : i32, i32
  }
  func.func @transform_5(%arg0: i32) -> (i32, i32) {
    %c0_i32 = arith.constant 0 : i32
    %c0_i32_0 = arith.constant 0 : i32
    %c0_i32_1 = arith.constant 0 : i32
    return %c0_i32, %c0_i32_0 : i32, i32
  }
}

module attributes {stable_mosaic.version = 11 : i64} {
  func.func @_bn_conv2_kernel(%arg0: i32, %arg1: memref<256x128xf32, #tpu.memory_space<vmem>>, %arg2: memref<1x128xf32, #tpu.memory_space<vmem>>, %arg3: memref<1x128xf32, #tpu.memory_space<vmem>>, %arg4: memref<128x128xf32, #tpu.memory_space<vmem>>, %arg5: memref<1x128xf32, #tpu.memory_space<vmem>>, %arg6: memref<64x128xf32, #tpu.memory_space<vmem>>, %arg7: memref<18x18x8xf32, #tpu.memory_space<vmem>>, %arg8: memref<64x128xf32, #tpu.memory_space<vmem>>) attributes {dimension_semantics = [#tpu.dimension_semantics<parallel>], iteration_bounds = array<i64: 2>, scalar_prefetch = 0 : i64, scratch_operands = 2 : i64, tpu.core_type = #tpu.core_type<tc>, window_params = [{transform_indices = @transform_0, window_bounds = array<i64: 256, 128>}, {pipeline_mode = #tpu.pipeline_mode<synchronous>, transform_indices = @transform_1, window_bounds = array<i64: 1, 128>}, {pipeline_mode = #tpu.pipeline_mode<synchronous>, transform_indices = @transform_2, window_bounds = array<i64: 1, 128>}, {pipeline_mode = #tpu.pipeline_mode<synchronous>, transform_indices = @transform_3, window_bounds = array<i64: 128, 128>}, {pipeline_mode = #tpu.pipeline_mode<synchronous>, transform_indices = @transform_4, window_bounds = array<i64: 1, 128>}, {transform_indices = @transform_5, window_bounds = array<i64: 64, 128>}]} {
    %c0 = arith.constant 0 : index
    %c0_0 = arith.constant 0 : index
    %0 = vector.load %arg1[%c0, %c0_0] : memref<256x128xf32, #tpu.memory_space<vmem>>, vector<256x128xf32>
    %c0_1 = arith.constant 0 : index
    %c0_2 = arith.constant 0 : index
    %1 = vector.load %arg2[%c0_1, %c0_2] : memref<1x128xf32, #tpu.memory_space<vmem>>, vector<1x128xf32>
    %2 = vector.broadcast %1 : vector<1x128xf32> to vector<256x128xf32>
    %3 = arith.mulf %0, %2 : vector<256x128xf32>
    %c0_3 = arith.constant 0 : index
    %c0_4 = arith.constant 0 : index
    %4 = vector.load %arg3[%c0_3, %c0_4] : memref<1x128xf32, #tpu.memory_space<vmem>>, vector<1x128xf32>
    %5 = vector.broadcast %4 : vector<1x128xf32> to vector<256x128xf32>
    %6 = arith.addf %3, %5 : vector<256x128xf32>
    %7 = vector.extract_strided_slice %6 {offsets = [0, 0], sizes = [256, 8], strides = [1, 1]} : vector<256x128xf32> to vector<256x8xf32>
    %cst = arith.constant 0.000000e+00 : f32
    %8 = vector.broadcast %cst : f32 to vector<18x18x8xf32>
    %c0_5 = arith.constant 0 : index
    %c0_6 = arith.constant 0 : index
    %c0_7 = arith.constant 0 : index
    %9 = vector.load %arg7[%c0_5, %c0_6, %c0_7] : memref<18x18x8xf32, #tpu.memory_space<vmem>>, vector<18x18x8xf32>
    tpu.vector_store %arg7[%c0_5, %c0_6, %c0_7], %8 {strides = array<i32>} : memref<18x18x8xf32, #tpu.memory_space<vmem>>, vector<18x18x8xf32>,
    %10 = vector.shape_cast %7 : vector<256x8xf32> to vector<16x16x8xf32>
    %c1 = arith.constant 1 : index
    %c1_8 = arith.constant 1 : index
    %c0_9 = arith.constant 0 : index
    %11 = vector.load %arg7[%c1, %c1_8, %c0_9] : memref<18x18x8xf32, #tpu.memory_space<vmem>>, vector<16x16x8xf32>
    tpu.vector_store %arg7[%c1, %c1_8, %c0_9], %10 {strides = array<i32>} : memref<18x18x8xf32, #tpu.memory_space<vmem>>, vector<16x16x8xf32>,
    %c0_10 = arith.constant 0 : index
    %c0_11 = arith.constant 0 : index
    %c0_12 = arith.constant 0 : index
    %12 = tpu.strided_load %arg7[%c0_10, %c0_11, %c0_12] {strides = array<i32: 2, 2, 1>} : memref<18x18x8xf32, #tpu.memory_space<vmem>>, vector<8x8x8xf32>
    %13 = vector.shape_cast %12 : vector<8x8x8xf32> to vector<64x8xf32>
    %c0_13 = arith.constant 0 : index
    %c0_14 = arith.constant 0 : index
    %14 = vector.load %arg8[%c0_13, %c0_14] : memref<64x128xf32, #tpu.memory_space<vmem>>, vector<64x8xf32>
    tpu.vector_store %arg8[%c0_13, %c0_14], %13 {strides = array<i32>} : memref<64x128xf32, #tpu.memory_space<vmem>>, vector<64x8xf32>,
    %c0_15 = arith.constant 0 : index
    %c1_16 = arith.constant 1 : index
    %c0_17 = arith.constant 0 : index
    %15 = tpu.strided_load %arg7[%c0_15, %c1_16, %c0_17] {strides = array<i32: 2, 2, 1>} : memref<18x18x8xf32, #tpu.memory_space<vmem>>, vector<8x8x8xf32>
    %16 = vector.shape_cast %15 : vector<8x8x8xf32> to vector<64x8xf32>
    %c0_18 = arith.constant 0 : index
    %c8 = arith.constant 8 : index
    %17 = vector.load %arg8[%c0_18, %c8] : memref<64x128xf32, #tpu.memory_space<vmem>>, vector<64x8xf32>
    tpu.vector_store %arg8[%c0_18, %c8], %16 {strides = array<i32>} : memref<64x128xf32, #tpu.memory_space<vmem>>, vector<64x8xf32>,
    %c0_19 = arith.constant 0 : index
    %c2 = arith.constant 2 : index
    %c0_20 = arith.constant 0 : index
    %18 = tpu.strided_load %arg7[%c0_19, %c2, %c0_20] {strides = array<i32: 2, 2, 1>} : memref<18x18x8xf32, #tpu.memory_space<vmem>>, vector<8x8x8xf32>
    %19 = vector.shape_cast %18 : vector<8x8x8xf32> to vector<64x8xf32>
    %c0_21 = arith.constant 0 : index
    %c16 = arith.constant 16 : index
    %20 = vector.load %arg8[%c0_21, %c16] : memref<64x128xf32, #tpu.memory_space<vmem>>, vector<64x8xf32>
    tpu.vector_store %arg8[%c0_21, %c16], %19 {strides = array<i32>} : memref<64x128xf32, #tpu.memory_space<vmem>>, vector<64x8xf32>,
    %c0_22 = arith.constant 0 : index
    %c3 = arith.constant 3 : index
    %c0_23 = arith.constant 0 : index
    %21 = tpu.strided_load %arg7[%c0_22, %c3, %c0_23] {strides = array<i32: 2, 2, 1>} : memref<18x18x8xf32, #tpu.memory_space<vmem>>, vector<8x8x8xf32>
    %22 = vector.shape_cast %21 : vector<8x8x8xf32> to vector<64x8xf32>
    %c0_24 = arith.constant 0 : index
    %c24 = arith.constant 24 : index
    %23 = vector.load %arg8[%c0_24, %c24] : memref<64x128xf32, #tpu.memory_space<vmem>>, vector<64x8xf32>
    tpu.vector_store %arg8[%c0_24, %c24], %22 {strides = array<i32>} : memref<64x128xf32, #tpu.memory_space<vmem>>, vector<64x8xf32>,
    %c1_25 = arith.constant 1 : index
    %c0_26 = arith.constant 0 : index
    %c0_27 = arith.constant 0 : index
    %24 = tpu.strided_load %arg7[%c1_25, %c0_26, %c0_27] {strides = array<i32: 2, 2, 1>} : memref<18x18x8xf32, #tpu.memory_space<vmem>>, vector<8x8x8xf32>
    %25 = vector.shape_cast %24 : vector<8x8x8xf32> to vector<64x8xf32>
    %c0_28 = arith.constant 0 : index
    %c32 = arith.constant 32 : index
    %26 = vector.load %arg8[%c0_28, %c32] : memref<64x128xf32, #tpu.memory_space<vmem>>, vector<64x8xf32>
    tpu.vector_store %arg8[%c0_28, %c32], %25 {strides = array<i32>} : memref<64x128xf32, #tpu.memory_space<vmem>>, vector<64x8xf32>,
    %c1_29 = arith.constant 1 : index
    %c1_30 = arith.constant 1 : index
    %c0_31 = arith.constant 0 : index
    %27 = tpu.strided_load %arg7[%c1_29, %c1_30, %c0_31] {strides = array<i32: 2, 2, 1>} : memref<18x18x8xf32, #tpu.memory_space<vmem>>, vector<8x8x8xf32>
    %28 = vector.shape_cast %27 : vector<8x8x8xf32> to vector<64x8xf32>
    %c0_32 = arith.constant 0 : index
    %c40 = arith.constant 40 : index
    %29 = vector.load %arg8[%c0_32, %c40] : memref<64x128xf32, #tpu.memory_space<vmem>>, vector<64x8xf32>
    tpu.vector_store %arg8[%c0_32, %c40], %28 {strides = array<i32>} : memref<64x128xf32, #tpu.memory_space<vmem>>, vector<64x8xf32>,
    %c1_33 = arith.constant 1 : index
    %c2_34 = arith.constant 2 : index
    %c0_35 = arith.constant 0 : index
    %30 = tpu.strided_load %arg7[%c1_33, %c2_34, %c0_35] {strides = array<i32: 2, 2, 1>} : memref<18x18x8xf32, #tpu.memory_space<vmem>>, vector<8x8x8xf32>
    %31 = vector.shape_cast %30 : vector<8x8x8xf32> to vector<64x8xf32>
    %c0_36 = arith.constant 0 : index
    %c48 = arith.constant 48 : index
    %32 = vector.load %arg8[%c0_36, %c48] : memref<64x128xf32, #tpu.memory_space<vmem>>, vector<64x8xf32>
    tpu.vector_store %arg8[%c0_36, %c48], %31 {strides = array<i32>} : memref<64x128xf32, #tpu.memory_space<vmem>>, vector<64x8xf32>,
    %c1_37 = arith.constant 1 : index
    %c3_38 = arith.constant 3 : index
    %c0_39 = arith.constant 0 : index
    %33 = tpu.strided_load %arg7[%c1_37, %c3_38, %c0_39] {strides = array<i32: 2, 2, 1>} : memref<18x18x8xf32, #tpu.memory_space<vmem>>, vector<8x8x8xf32>
    %34 = vector.shape_cast %33 : vector<8x8x8xf32> to vector<64x8xf32>
    %c0_40 = arith.constant 0 : index
    %c56 = arith.constant 56 : index
    %35 = vector.load %arg8[%c0_40, %c56] : memref<64x128xf32, #tpu.memory_space<vmem>>, vector<64x8xf32>
    tpu.vector_store %arg8[%c0_40, %c56], %34 {strides = array<i32>} : memref<64x128xf32, #tpu.memory_space<vmem>>, vector<64x8xf32>,
    %c2_41 = arith.constant 2 : index
    %c0_42 = arith.constant 0 : index
    %c0_43 = arith.constant 0 : index
    %36 = tpu.strided_load %arg7[%c2_41, %c0_42, %c0_43] {strides = array<i32: 2, 2, 1>} : memref<18x18x8xf32, #tpu.memory_space<vmem>>, vector<8x8x8xf32>
    %37 = vector.shape_cast %36 : vector<8x8x8xf32> to vector<64x8xf32>
    %c0_44 = arith.constant 0 : index
    %c64 = arith.constant 64 : index
    %38 = vector.load %arg8[%c0_44, %c64] : memref<64x128xf32, #tpu.memory_space<vmem>>, vector<64x8xf32>
    tpu.vector_store %arg8[%c0_44, %c64], %37 {strides = array<i32>} : memref<64x128xf32, #tpu.memory_space<vmem>>, vector<64x8xf32>,
    %c2_45 = arith.constant 2 : index
    %c1_46 = arith.constant 1 : index
    %c0_47 = arith.constant 0 : index
    %39 = tpu.strided_load %arg7[%c2_45, %c1_46, %c0_47] {strides = array<i32: 2, 2, 1>} : memref<18x18x8xf32, #tpu.memory_space<vmem>>, vector<8x8x8xf32>
    %40 = vector.shape_cast %39 : vector<8x8x8xf32> to vector<64x8xf32>
    %c0_48 = arith.constant 0 : index
    %c72 = arith.constant 72 : index
    %41 = vector.load %arg8[%c0_48, %c72] : memref<64x128xf32, #tpu.memory_space<vmem>>, vector<64x8xf32>
    tpu.vector_store %arg8[%c0_48, %c72], %40 {strides = array<i32>} : memref<64x128xf32, #tpu.memory_space<vmem>>, vector<64x8xf32>,
    %c2_49 = arith.constant 2 : index
    %c2_50 = arith.constant 2 : index
    %c0_51 = arith.constant 0 : index
    %42 = tpu.strided_load %arg7[%c2_49, %c2_50, %c0_51] {strides = array<i32: 2, 2, 1>} : memref<18x18x8xf32, #tpu.memory_space<vmem>>, vector<8x8x8xf32>
    %43 = vector.shape_cast %42 : vector<8x8x8xf32> to vector<64x8xf32>
    %c0_52 = arith.constant 0 : index
    %c80 = arith.constant 80 : index
    %44 = vector.load %arg8[%c0_52, %c80] : memref<64x128xf32, #tpu.memory_space<vmem>>, vector<64x8xf32>
    tpu.vector_store %arg8[%c0_52, %c80], %43 {strides = array<i32>} : memref<64x128xf32, #tpu.memory_space<vmem>>, vector<64x8xf32>,
    %c2_53 = arith.constant 2 : index
    %c3_54 = arith.constant 3 : index
    %c0_55 = arith.constant 0 : index
    %45 = tpu.strided_load %arg7[%c2_53, %c3_54, %c0_55] {strides = array<i32: 2, 2, 1>} : memref<18x18x8xf32, #tpu.memory_space<vmem>>, vector<8x8x8xf32>
    %46 = vector.shape_cast %45 : vector<8x8x8xf32> to vector<64x8xf32>
    %c0_56 = arith.constant 0 : index
    %c88 = arith.constant 88 : index
    %47 = vector.load %arg8[%c0_56, %c88] : memref<64x128xf32, #tpu.memory_space<vmem>>, vector<64x8xf32>
    tpu.vector_store %arg8[%c0_56, %c88], %46 {strides = array<i32>} : memref<64x128xf32, #tpu.memory_space<vmem>>, vector<64x8xf32>,
    %c3_57 = arith.constant 3 : index
    %c0_58 = arith.constant 0 : index
    %c0_59 = arith.constant 0 : index
    %48 = tpu.strided_load %arg7[%c3_57, %c0_58, %c0_59] {strides = array<i32: 2, 2, 1>} : memref<18x18x8xf32, #tpu.memory_space<vmem>>, vector<8x8x8xf32>
    %49 = vector.shape_cast %48 : vector<8x8x8xf32> to vector<64x8xf32>
    %c0_60 = arith.constant 0 : index
    %c96 = arith.constant 96 : index
    %50 = vector.load %arg8[%c0_60, %c96] : memref<64x128xf32, #tpu.memory_space<vmem>>, vector<64x8xf32>
    tpu.vector_store %arg8[%c0_60, %c96], %49 {strides = array<i32>} : memref<64x128xf32, #tpu.memory_space<vmem>>, vector<64x8xf32>,
    %c3_61 = arith.constant 3 : index
    %c1_62 = arith.constant 1 : index
    %c0_63 = arith.constant 0 : index
    %51 = tpu.strided_load %arg7[%c3_61, %c1_62, %c0_63] {strides = array<i32: 2, 2, 1>} : memref<18x18x8xf32, #tpu.memory_space<vmem>>, vector<8x8x8xf32>
    %52 = vector.shape_cast %51 : vector<8x8x8xf32> to vector<64x8xf32>
    %c0_64 = arith.constant 0 : index
    %c104 = arith.constant 104 : index
    %53 = vector.load %arg8[%c0_64, %c104] : memref<64x128xf32, #tpu.memory_space<vmem>>, vector<64x8xf32>
    tpu.vector_store %arg8[%c0_64, %c104], %52 {strides = array<i32>} : memref<64x128xf32, #tpu.memory_space<vmem>>, vector<64x8xf32>,
    %c3_65 = arith.constant 3 : index
    %c2_66 = arith.constant 2 : index
    %c0_67 = arith.constant 0 : index
    %54 = tpu.strided_load %arg7[%c3_65, %c2_66, %c0_67] {strides = array<i32: 2, 2, 1>} : memref<18x18x8xf32, #tpu.memory_space<vmem>>, vector<8x8x8xf32>
    %55 = vector.shape_cast %54 : vector<8x8x8xf32> to vector<64x8xf32>
    %c0_68 = arith.constant 0 : index
    %c112 = arith.constant 112 : index
    %56 = vector.load %arg8[%c0_68, %c112] : memref<64x128xf32, #tpu.memory_space<vmem>>, vector<64x8xf32>
    tpu.vector_store %arg8[%c0_68, %c112], %55 {strides = array<i32>} : memref<64x128xf32, #tpu.memory_space<vmem>>, vector<64x8xf32>,
    %c3_69 = arith.constant 3 : index
    %c3_70 = arith.constant 3 : index
    %c0_71 = arith.constant 0 : index
    %57 = tpu.strided_load %arg7[%c3_69, %c3_70, %c0_71] {strides = array<i32: 2, 2, 1>} : memref<18x18x8xf32, #tpu.memory_space<vmem>>, vector<8x8x8xf32>
    %58 = vector.shape_cast %57 : vector<8x8x8xf32> to vector<64x8xf32>
    %c0_72 = arith.constant 0 : index
    %c120 = arith.constant 120 : index
    %59 = vector.load %arg8[%c0_72, %c120] : memref<64x128xf32, #tpu.memory_space<vmem>>, vector<64x8xf32>
    tpu.vector_store %arg8[%c0_72, %c120], %58 {strides = array<i32>} : memref<64x128xf32, #tpu.memory_space<vmem>>, vector<64x8xf32>,
    %c0_73 = arith.constant 0 : index
    %c0_74 = arith.constant 0 : index
    %60 = vector.load %arg8[%c0_73, %c0_74] : memref<64x128xf32, #tpu.memory_space<vmem>>, vector<64x128xf32>
    %c0_75 = arith.constant 0 : index
    %c0_76 = arith.constant 0 : index
    %61 = vector.load %arg4[%c0_75, %c0_76] : memref<128x128xf32, #tpu.memory_space<vmem>>, vector<128x128xf32>
    %cst_77 = arith.constant dense<0.000000e+00> : vector<64x128xf32>
    %62 = tpu.matmul %60, %61, %cst_77 {dimension_numbers = #tpu.dot_dimension_numbers<[1], [0], [0], [1], [0, 0, 1, 1], [], []>} : vector<64x128xf32>, vector<128x128xf32>, vector<64x128xf32> -> vector<64x128xf32>
    %c0_78 = arith.constant 0 : index
    %c0_79 = arith.constant 0 : index
    %63 = vector.load %arg5[%c0_78, %c0_79] : memref<1x128xf32, #tpu.memory_space<vmem>>, vector<1x128xf32>
    %64 = vector.broadcast %63 : vector<1x128xf32> to vector<64x128xf32>
    %65 = arith.addf %62, %64 : vector<64x128xf32>
    %c0_80 = arith.constant 0 : index
    %c0_81 = arith.constant 0 : index
    %66 = vector.load %arg6[%c0_80, %c0_81] : memref<64x128xf32, #tpu.memory_space<vmem>>, vector<64x128xf32>
    tpu.vector_store %arg6[%c0_80, %c0_81], %65 {strides = array<i32>} : memref<64x128xf32, #tpu.memory_space<vmem>>, vector<64x128xf32>,
    return
  }
  func.func @transform_0(%arg0: i32) -> (i32, i32) {
    %c0_i32 = arith.constant 0 : i32
    %c0_i32_0 = arith.constant 0 : i32
    return %arg0, %c0_i32 : i32, i32
  }
  func.func @transform_1(%arg0: i32) -> (i32, i32) {
    %c0_i32 = arith.constant 0 : i32
    %c0_i32_0 = arith.constant 0 : i32
    %c0_i32_1 = arith.constant 0 : i32
    return %c0_i32, %c0_i32_0 : i32, i32
  }
  func.func @transform_2(%arg0: i32) -> (i32, i32) {
    %c0_i32 = arith.constant 0 : i32
    %c0_i32_0 = arith.constant 0 : i32
    %c0_i32_1 = arith.constant 0 : i32
    return %c0_i32, %c0_i32_0 : i32, i32
  }
  func.func @transform_3(%arg0: i32) -> (i32, i32) {
    %c0_i32 = arith.constant 0 : i32
    %c0_i32_0 = arith.constant 0 : i32
    %c0_i32_1 = arith.constant 0 : i32
    return %c0_i32, %c0_i32_0 : i32, i32
  }
  func.func @transform_4(%arg0: i32) -> (i32, i32) {
    %c0_i32 = arith.constant 0 : i32
    %c0_i32_0 = arith.constant 0 : i32
    %c0_i32_1 = arith.constant 0 : i32
    return %c0_i32, %c0_i32_0 : i32, i32
  }
  func.func @transform_5(%arg0: i32) -> (i32, i32) {
    %c0_i32 = arith.constant 0 : i32
    %c0_i32_0 = arith.constant 0 : i32
    return %arg0, %c0_i32 : i32, i32
  }
}

</mosaic_0001>

<llo_original>
// kernel: block_forward.3
$region0: #{block_forward.3}
  #allocation0 [shape = 'u32[]', space=smem, size = 0x4, offset = 0x4, fixed_abs, tag = 'smem constant byte address 0x4 - core index']
  #allocation1 [shape = 'u32[144,128]{1,0:T(1,128)}', space=vmem, size = 0x12000, scoped, tag = 'internal scratch']
  #allocation2 [shape = 'f32[18,18,8]{2,1,0:T(8,128)}', space=vmem, size = 0x36000, scoped, tag = 'scratch operand']
  #allocation3 [shape = 'f32[64,128]{1,0:T(8,128)}', space=vmem, size = 0x8000, scoped, tag = 'scratch operand']
  %s0 = inlined_call_operand.vmem [shape: f32[512,128], index: 0, kind: input, shape index: {}]
  %s1 = inlined_call_operand.vmem [shape: f32[1,128], index: 1, kind: input, shape index: {}]
  %s2 = inlined_call_operand.vmem [shape: f32[1,128], index: 2, kind: input, shape index: {}]
  %s3 = inlined_call_operand.vmem [shape: f32[128,128], index: 3, kind: input, shape index: {}]
  %s4 = inlined_call_operand.vmem [shape: f32[1,128], index: 4, kind: input, shape index: {}]
  %s5 = inlined_call_operand.vmem [shape: f32[128,128], index: 5, kind: output, shape index: {}]
  %s6 = sld [smem:[#allocation0]]
  $region53: #{block_forward.3} parent=0
    _
  %s8 = ssub.s32 1, %s6
  %s9 = scalar_select 0, %s8, %s6
  loop: start=0, step=1, limit=4
  $region2: #{block_forward.3} parent=0 // loop_pre_header
    _
  $region3: #{block_forward.3} parent=0 // loop_header
    %s11 = sphi 0, %s15
    %p12 = scmp.ge.s32.totalorder %s11, 4
    %s21 = sphi 0, %s23
    %s24 = sphi 0, %s21
    %s25 = sphi 0, %s24
    %s41 = sphi 0, %s25
    %s45 = sphi 0, %s45
    %s47 = sphi 0, %s45
    %s48 = sphi 0, %s47
    %s62 = sphi 0, %s48
    %s66 = sphi 0, %s66
    %s68 = sphi 0, %s66
    %s69 = sphi 0, %s68
    %s83 = sphi 0, %s69
    %s87 = sphi 0, %s87
    %s89 = sphi 0, %s87
    %s90 = sphi 0, %s89
    %s104 = sphi 0, %s90
    %s108 = sphi 0, %s108
    %s110 = sphi 0, %s108
    %s111 = sphi 0, %s110
    %s125 = sphi 0, %s111
    %s131 = sphi 0, %s133
    %s134 = sphi 0, %s131
    %s135 = sphi 0, %s134
    %s151 = sphi 0, %s135
  $region4: #{block_forward.3} parent=0 // loop_header_branch
    %14 = sbr.rel (%p12) target = $region8
  $region5: #{block_forward.3} parent=0 // loop_body
    %s16 = ssub.s32 %s11, 1
    %s17 = ssub.s32 %s11, 2
    %s18 = sadd.s32 %s11, 1
    %s19 = ssub.s32 %s11, %s18
    %p20 = scmp.eq.s32.totalorder %s19, 0
    %s22 = sadd.s32 %s21, 1
    %s23 = scalar_select %p20, %s21, %s22
    %p26 = pneg %p20
    %p27 = scmp.eq.s32.totalorder %s11, 1
    %p28 = por %p26, %p27
    %p29 = scmp.ne.s32.totalorder %s21, %s24
    %p30 = scmp.eq.s32.totalorder %s11, 0
    %p31 = por %p29, %p30
    %p32 = scmp.ne.s32.totalorder %s21, %s24
    %p33 = scmp.eq.s32.totalorder %s16, 1
    %p34 = por %p32, %p33
    %p35 = scmp.ne.s32.totalorder %s24, %s25
    %p36 = scmp.eq.s32.totalorder %s16, 0
    %p37 = por %p35, %p36
    %p38 = scmp.ne.s32.totalorder %s24, %s25
    %p39 = scmp.eq.s32.totalorder %s17, 1
    %p40 = por %p38, %p39
    %p42 = scmp.ne.s32.totalorder %s25, %s41
    %p43 = scmp.eq.s32.totalorder %s17, 0
    %p44 = por %p42, %p43
    %s46 = sadd.s32 %s45, 1
    %p49 = scmp.eq.s32.totalorder %s11, 1
    %p50 = scmp.ne.s32.totalorder %s45, %s47
    %p51 = scmp.eq.s32.totalorder %s11, 0
    %p52 = por %p50, %p51
    %p53 = scmp.ne.s32.totalorder %s45, %s47
    %p54 = scmp.eq.s32.totalorder %s16, 1
    %p55 = por %p53, %p54
    %p56 = scmp.ne.s32.totalorder %s47, %s48
    %p57 = scmp.eq.s32.totalorder %s16, 0
    %p58 = por %p56, %p57
    %p59 = scmp.ne.s32.totalorder %s47, %s48
    %p60 = scmp.eq.s32.totalorder %s17, 1
    %p61 = por %p59, %p60
    %p63 = scmp.ne.s32.totalorder %s48, %s62
    %p64 = scmp.eq.s32.totalorder %s17, 0
    %p65 = por %p63, %p64
    %s67 = sadd.s32 %s66, 1
    %p70 = scmp.eq.s32.totalorder %s11, 1
    %p71 = scmp.ne.s32.totalorder %s66, %s68
    %p72 = scmp.eq.s32.totalorder %s11, 0
    %p73 = por %p71, %p72
    %p74 = scmp.ne.s32.totalorder %s66, %s68
    %p75 = scmp.eq.s32.totalorder %s16, 1
    %p76 = por %p74, %p75
    %p77 = scmp.ne.s32.totalorder %s68, %s69
    %p78 = scmp.eq.s32.totalorder %s16, 0
    %p79 = por %p77, %p78
    %p80 = scmp.ne.s32.totalorder %s68, %s69
    %p81 = scmp.eq.s32.totalorder %s17, 1
    %p82 = por %p80, %p81
    %p84 = scmp.ne.s32.totalorder %s69, %s83
    %p85 = scmp.eq.s32.totalorder %s17, 0
    %p86 = por %p84, %p85
    %s88 = sadd.s32 %s87, 1
    %p91 = scmp.eq.s32.totalorder %s11, 1
    %p92 = scmp.ne.s32.totalorder %s87, %s89
    %p93 = scmp.eq.s32.totalorder %s11, 0
    %p94 = por %p92, %p93
    %p95 = scmp.ne.s32.totalorder %s87, %s89
    %p96 = scmp.eq.s32.totalorder %s16, 1
    %p97 = por %p95, %p96
    %p98 = scmp.ne.s32.totalorder %s89, %s90
    %p99 = scmp.eq.s32.totalorder %s16, 0
    %p100 = por %p98, %p99
    %p101 = scmp.ne.s32.totalorder %s89, %s90
    %p102 = scmp.eq.s32.totalorder %s17, 1
    %p103 = por %p101, %p102
    %p105 = scmp.ne.s32.totalorder %s90, %s104
    %p106 = scmp.eq.s32.totalorder %s17, 0
    %p107 = por %p105, %p106
    %s109 = sadd.s32 %s108, 1
    %p112 = scmp.eq.s32.totalorder %s11, 1
    %p113 = scmp.ne.s32.totalorder %s108, %s110
    %p114 = scmp.eq.s32.totalorder %s11, 0
    %p115 = por %p113, %p114
    %p116 = scmp.ne.s32.totalorder %s108, %s110
    %p117 = scmp.eq.s32.totalorder %s16, 1
    %p118 = por %p116, %p117
    %p119 = scmp.ne.s32.totalorder %s110, %s111
    %p120 = scmp.eq.s32.totalorder %s16, 0
    %p121 = por %p119, %p120
    %p122 = scmp.ne.s32.totalorder %s110, %s111
    %p123 = scmp.eq.s32.totalorder %s17, 1
    %p124 = por %p122, %p123
    %p126 = scmp.ne.s32.totalorder %s111, %s125
    %p127 = scmp.eq.s32.totalorder %s17, 0
    %p128 = por %p126, %p127
    %s129 = ssub.s32 %s11, %s18
    %p130 = scmp.eq.s32.totalorder %s129, 0
    %s132 = sadd.s32 %s131, 1
    %s133 = scalar_select %p130, %s131, %s132
    %p136 = pneg %p130
    %p137 = scmp.eq.s32.totalorder %s11, 1
    %p138 = por %p136, %p137
    %p139 = scmp.ne.s32.totalorder %s131, %s134
    %p140 = scmp.eq.s32.totalorder %s11, 0
    %p141 = por %p139, %p140
    %p142 = scmp.ne.s32.totalorder %s131, %s134
    %p143 = scmp.eq.s32.totalorder %s16, 1
    %p144 = por %p142, %p143
    %p145 = scmp.ne.s32.totalorder %s134, %s135
    %p146 = scmp.eq.s32.totalorder %s16, 0
    %p147 = por %p145, %p146
    %p148 = scmp.ne.s32.totalorder %s134, %s135
    %p149 = scmp.eq.s32.totalorder %s17, 1
    %p150 = por %p148, %p149
    %p152 = scmp.ne.s32.totalorder %s135, %s151
    %p153 = scmp.eq.s32.totalorder %s17, 0
    %p154 = por %p152, %p153
    %p155 = scmp.le.s32.totalorder 1, %s11
    %p156 = scmp.lt.s32.totalorder %s11, 3
    %p157 = pnand %p155, %p156
    %p158 = pneg %p157
    // Predicated region
    $region9: #{block_forward.3} parent=5 // pred_check
      _
    $region10: #{block_forward.3} parent=5 // pred_check_branch
      %160 = sbr.rel (%p157) target = $region12
    $region11: #{block_forward.3} parent=5 // pred_region
      %s161 = ssub.s32 %s11, 1
      // Predicated region
      $region13: #{block_forward.3} parent=11 // pred_check
        %p162 = pneg %p58
      $region14: #{block_forward.3} parent=11 // pred_check_branch
        %164 = sbr.rel (%p162) target = $region16
      $region15: #{block_forward.3} parent=11 // pred_region
        _
      $region16: #{block_forward.3} parent=11 // pred_fallthru
        _
      // Predicated region
      $region17: #{block_forward.3} parent=11 // pred_check
        %p165 = pneg %p79
      $region18: #{block_forward.3} parent=11 // pred_check_branch
        %167 = sbr.rel (%p165) target = $region20
      $region19: #{block_forward.3} parent=11 // pred_region
        _
      $region20: #{block_forward.3} parent=11 // pred_fallthru
        _
      // Predicated region
      $region21: #{block_forward.3} parent=11 // pred_check
        %p168 = pneg %p100
      $region22: #{block_forward.3} parent=11 // pred_check_branch
        %170 = sbr.rel (%p168) target = $region24
      $region23: #{block_forward.3} parent=11 // pred_region
        _
      $region24: #{block_forward.3} parent=11 // pred_fallthru
        _
      // Predicated region
      $region25: #{block_forward.3} parent=11 // pred_check
        %p171 = pneg %p121
      $region26: #{block_forward.3} parent=11 // pred_check_branch
        %173 = sbr.rel (%p171) target = $region28
      $region27: #{block_forward.3} parent=11 // pred_region
        _
      $region28: #{block_forward.3} parent=11 // pred_fallthru
        _
    $region12: #{block_forward.3} parent=5 // pred_fallthru
      _
    %p174 = scmp.lt.s32.totalorder %s11, 2
    // Predicated region
    $region29: #{block_forward.3} parent=5 // pred_check
      %p175 = pneg %p174
    $region30: #{block_forward.3} parent=5 // pred_check_branch
      %177 = sbr.rel (%p175) target = $region32
    $region31: #{block_forward.3} parent=5 // pred_region
      // Predicated region
      $region33: #{block_forward.3} parent=31 // pred_check
        %p178 = pneg %p31
      $region34: #{block_forward.3} parent=31 // pred_check_branch
        %180 = sbr.rel (%p178) target = $region36
      $region35: #{block_forward.3} parent=31 // pred_region
        %s181 = smul.u32 32, %s11
        %p182 = scmp.lt.s32.totalorder %s181, 63
        %s183 = scalar_select %p182, %s181, 63
        %s184 = smul.addr %s183, 8
        %s185 = scalar_lea.vmem %s0, %s184
        %s186 = smul.u32 32, %s11
      $region36: #{block_forward.3} parent=31 // pred_fallthru
        _
    $region32: #{block_forward.3} parent=5 // pred_fallthru
      _
    %p187 = scmp.le.s32.totalorder 1, %s11
    %p188 = scmp.lt.s32.totalorder %s11, 3
    %p189 = pnand %p187, %p188
    %p190 = pneg %p189
    // Predicated region
    $region37: #{block_forward.3} parent=5 // pred_check
      _
    $region38: #{block_forward.3} parent=5 // pred_check_branch
      %192 = sbr.rel (%p189) target = $region40
    $region39: #{block_forward.3} parent=5 // pred_region
      %s193 = ssub.s32 %s11, 1
      %s194 = smul.u32 32, %s16
      %p195 = scmp.lt.s32.totalorder %s194, 63
      %s196 = scalar_select %p195, %s194, 63
      %s197 = smul.addr %s196, 8
      %s198 = scalar_lea.vmem %s0, %s197
      %p199 = pneg %p37
      %p200 = pneg %p34
      %p201 = pneg %p58
      %p202 = pneg %p55
      %p203 = pneg %p79
      %p204 = pneg %p76
      %p205 = pneg %p100
      %p206 = pneg %p97
      %p207 = pneg %p121
      %p208 = pneg %p118
      %p209 = pneg %p147
      %p210 = pneg %p144
      %s211 = smul.u32 8, %s16
      %p212 = scmp.lt.s32.totalorder %s211, 15
      %s213 = scalar_select %p212, %s211, 15
      %s214 = smul.addr %s213, 8
      %s215 = scalar_lea.vmem %s5, %s214
      %s216 = smul.u32 32, %s16
      %p217 = scmp.lt.s32.totalorder %s216, 63
      %s218 = scalar_select %p217, %s216, 63
      %s219 = smul.addr %s218, 8
      %s220 = scalar_lea.vmem %s0, %s219
      %s221 = smul.u32 32, %s16
      %s222 = smul.u32 8, %s16
      %p223 = scmp.lt.s32.totalorder %s222, 15
      %s224 = scalar_select %p223, %s222, 15
      %s225 = smul.addr %s224, 8
      %s226 = scalar_lea.vmem %s5, %s225
      %s227 = smul.u32 8, %s16
      %v228 = vld [vmem:[%s220] sm:$0xff]
      %v229 = vld [vmem:[%s220 + $0x8] sm:$0xff]
      %v230 = vld [vmem:[%s220 + $0x10] sm:$0xff]
      %v231 = vld [vmem:[%s220 + $0x18] sm:$0xff]
      %v232 = vld [vmem:[%s220 + $0x20] sm:$0xff]
      %v233 = vld [vmem:[%s220 + $0x28] sm:$0xff]
      %v234 = vld [vmem:[%s220 + $0x30] sm:$0xff]
      %v235 = vld [vmem:[%s220 + $0x38] sm:$0xff]
      %v236 = vld [vmem:[%s220 + $0x40] sm:$0xff]
      %v237 = vld [vmem:[%s220 + $0x48] sm:$0xff]
      %v238 = vld [vmem:[%s220 + $0x50] sm:$0xff]
      %v239 = vld [vmem:[%s220 + $0x58] sm:$0xff]
      %v240 = vld [vmem:[%s220 + $0x60] sm:$0xff]
      %v241 = vld [vmem:[%s220 + $0x68] sm:$0xff]
      %v242 = vld [vmem:[%s220 + $0x70] sm:$0xff]
      %v243 = vld [vmem:[%s220 + $0x78] sm:$0xff]
      %v244 = vld [vmem:[%s220 + $0x80] sm:$0xff]
      %v245 = vld [vmem:[%s220 + $0x88] sm:$0xff]
      %v246 = vld [vmem:[%s220 + $0x90] sm:$0xff]
      %v247 = vld [vmem:[%s220 + $0x98] sm:$0xff]
      %v248 = vld [vmem:[%s220 + $0xa0] sm:$0xff]
      %v249 = vld [vmem:[%s220 + $0xa8] sm:$0xff]
      %v250 = vld [vmem:[%s220 + $0xb0] sm:$0xff]
      %v251 = vld [vmem:[%s220 + $0xb8] sm:$0xff]
      %v252 = vld [vmem:[%s220 + $0xc0] sm:$0xff]
      %v253 = vld [vmem:[%s220 + $0xc8] sm:$0xff]
      %v254 = vld [vmem:[%s220 + $0xd0] sm:$0xff]
      %v255 = vld [vmem:[%s220 + $0xd8] sm:$0xff]
      %v256 = vld [vmem:[%s220 + $0xe0] sm:$0xff]
      %v257 = vld [vmem:[%s220 + $0xe8] sm:$0xff]
      %v258 = vld [vmem:[%s220 + $0xf0] sm:$0xff]
      %v259 = vld [vmem:[%s220 + $0xf8] sm:$0xff]
      %v260 = vld [vmem:[%s1] sm:$0x1]
      %v262 = vlaneseq
      %v263 = vshrl.u32 %v262, 7
      %v264 = vsub.s32 0, %v263
      %v265 = vrot.slane %v260, %v264
      %v267 = vmul.f32 %v228, %v265
      %v268 = vmul.f32 %v229, %v265
      %v269 = vmul.f32 %v230, %v265
      %v270 = vmul.f32 %v231, %v265
      %v271 = vmul.f32 %v232, %v265
      %v272 = vmul.f32 %v233, %v265
      %v273 = vmul.f32 %v234, %v265
      %v274 = vmul.f32 %v235, %v265
      %v275 = vmul.f32 %v236, %v265
      %v276 = vmul.f32 %v237, %v265
      %v277 = vmul.f32 %v238, %v265
      %v278 = vmul.f32 %v239, %v265
      %v279 = vmul.f32 %v240, %v265
      %v280 = vmul.f32 %v241, %v265
      %v281 = vmul.f32 %v242, %v265
      %v282 = vmul.f32 %v243, %v265
      %v283 = vmul.f32 %v244, %v265
      %v284 = vmul.f32 %v245, %v265
      %v285 = vmul.f32 %v246, %v265
      %v286 = vmul.f32 %v247, %v265
      %v287 = vmul.f32 %v248, %v265
      %v288 = vmul.f32 %v249, %v265
      %v289 = vmul.f32 %v250, %v265
      %v290 = vmul.f32 %v251, %v265
      %v291 = vmul.f32 %v252, %v265
      %v292 = vmul.f32 %v253, %v265
      %v293 = vmul.f32 %v254, %v265
      %v294 = vmul.f32 %v255, %v265
      %v295 = vmul.f32 %v256, %v265
      %v296 = vmul.f32 %v257, %v265
      %v297 = vmul.f32 %v258, %v265
      %v298 = vmul.f32 %v259, %v265
      %v299 = vld [vmem:[%s2] sm:$0x1]
      %v301 = vlaneseq
      %v302 = vshrl.u32 %v301, 7
      %v303 = vsub.s32 0, %v302
      %v304 = vrot.slane %v299, %v303
      %v306 = vadd.f32 %v267, %v304
      %v307 = vadd.f32 %v268, %v304
      %v308 = vadd.f32 %v269, %v304
      %v309 = vadd.f32 %v270, %v304
      %v310 = vadd.f32 %v271, %v304
      %v311 = vadd.f32 %v272, %v304
      %v312 = vadd.f32 %v273, %v304
      %v313 = vadd.f32 %v274, %v304
      %v314 = vadd.f32 %v275, %v304
      %v315 = vadd.f32 %v276, %v304
      %v316 = vadd.f32 %v277, %v304
      %v317 = vadd.f32 %v278, %v304
      %v318 = vadd.f32 %v279, %v304
      %v319 = vadd.f32 %v280, %v304
      %v320 = vadd.f32 %v281, %v304
      %v321 = vadd.f32 %v282, %v304
      %v322 = vadd.f32 %v283, %v304
      %v323 = vadd.f32 %v284, %v304
      %v324 = vadd.f32 %v285, %v304
      %v325 = vadd.f32 %v286, %v304
      %v326 = vadd.f32 %v287, %v304
      %v327 = vadd.f32 %v288, %v304
      %v328 = vadd.f32 %v289, %v304
      %v329 = vadd.f32 %v290, %v304
      %v330 = vadd.f32 %v291, %v304
      %v331 = vadd.f32 %v292, %v304
      %v332 = vadd.f32 %v293, %v304
      %v333 = vadd.f32 %v294, %v304
      %v334 = vadd.f32 %v295, %v304
      %v335 = vadd.f32 %v296, %v304
      %v336 = vadd.f32 %v297, %v304
      %v337 = vadd.f32 %v298, %v304
      %vm338 = vcmask 64512
      %339 = vst.msk [vmem:[#allocation2] sm:$0xff] %vm338, 0.0
      %340 = vst.msk [vmem:[#allocation2 + $0x8] sm:$0xff] %vm338, 0.0
      %vm341 = vcmask 58368
      %342 = vst.msk [vmem:[#allocation2 + $0x10] sm:$0x3] %vm341, 0.0
      %343 = vst.msk [vmem:[#allocation2 + $0x18] sm:$0xff] %vm338, 0.0
      %344 = vst.msk [vmem:[#allocation2 + $0x20] sm:$0xff] %vm338, 0.0
      %345 = vst.msk [vmem:[#allocation2 + $0x28] sm:$0x3] %vm341, 0.0
      %346 = vst.msk [vmem:[#allocation2 + $0x30] sm:$0xff] %vm338, 0.0
      %347 = vst.msk [vmem:[#allocation2 + $0x38] sm:$0xff] %vm338, 0.0
      %348 = vst.msk [vmem:[#allocation2 + $0x40] sm:$0x3] %vm341, 0.0
      %349 = vst.msk [vmem:[#allocation2 + $0x48] sm:$0xff] %vm338, 0.0
      %350 = vst.msk [vmem:[#allocation2 + $0x50] sm:$0xff] %vm338, 0.0
      %351 = vst.msk [vmem:[#allocation2 + $0x58] sm:$0x3] %vm341, 0.0
      %352 = vst.msk [vmem:[#allocation2 + $0x60] sm:$0xff] %vm338, 0.0
      %353 = vst.msk [vmem:[#allocation2 + $0x68] sm:$0xff] %vm338, 0.0
      %354 = vst.msk [vmem:[#allocation2 + $0x70] sm:$0x3] %vm341, 0.0
      %355 = vst.msk [vmem:[#allocation2 + $0x78] sm:$0xff] %vm338, 0.0
      %356 = vst.msk [vmem:[#allocation2 + $0x80] sm:$0xff] %vm338, 0.0
      %357 = vst.msk [vmem:[#allocation2 + $0x88] sm:$0x3] %vm341, 0.0
      %358 = vst.msk [vmem:[#allocation2 + $0x90] sm:$0xff] %vm338, 0.0
      %359 = vst.msk [vmem:[#allocation2 + $0x98] sm:$0xff] %vm338, 0.0
      %360 = vst.msk [vmem:[#allocation2 + $0xa0] sm:$0x3] %vm341, 0.0
      %361 = vst.msk [vmem:[#allocation2 + $0xa8] sm:$0xff] %vm338, 0.0
      %362 = vst.msk [vmem:[#allocation2 + $0xb0] sm:$0xff] %vm338, 0.0
      %363 = vst.msk [vmem:[#allocation2 + $0xb8] sm:$0x3] %vm341, 0.0
      %364 = vst.msk [vmem:[#allocation2 + $0xc0] sm:$0xff] %vm338, 0.0
      %365 = vst.msk [vmem:[#allocation2 + $0xc8] sm:$0xff] %vm338, 0.0
      %366 = vst.msk [vmem:[#allocation2 + $0xd0] sm:$0x3] %vm341, 0.0
      %367 = vst.msk [vmem:[#allocation2 + $0xd8] sm:$0xff] %vm338, 0.0
      %368 = vst.msk [vmem:[#allocation2 + $0xe0] sm:$0xff] %vm338, 0.0
      %369 = vst.msk [vmem:[#allocation2 + $0xe8] sm:$0x3] %vm341, 0.0
      %370 = vst.msk [vmem:[#allocation2 + $0xf0] sm:$0xff] %vm338, 0.0
      %371 = vst.msk [vmem:[#allocation2 + $0xf8] sm:$0xff] %vm338, 0.0
      %372 = vst.msk [vmem:[#allocation2 + $0x100] sm:$0x3] %vm341, 0.0
      %373 = vst.msk [vmem:[#allocation2 + $0x108] sm:$0xff] %vm338, 0.0
      %374 = vst.msk [vmem:[#allocation2 + $0x110] sm:$0xff] %vm338, 0.0
      %375 = vst.msk [vmem:[#allocation2 + $0x118] sm:$0x3] %vm341, 0.0
      %376 = vst.msk [vmem:[#allocation2 + $0x120] sm:$0xff] %vm338, 0.0
      %377 = vst.msk [vmem:[#allocation2 + $0x128] sm:$0xff] %vm338, 0.0
      %378 = vst.msk [vmem:[#allocation2 + $0x130] sm:$0x3] %vm341, 0.0
      %379 = vst.msk [vmem:[#allocation2 + $0x138] sm:$0xff] %vm338, 0.0
      %380 = vst.msk [vmem:[#allocation2 + $0x140] sm:$0xff] %vm338, 0.0
      %381 = vst.msk [vmem:[#allocation2 + $0x148] sm:$0x3] %vm341, 0.0
      %382 = vst.msk [vmem:[#allocation2 + $0x150] sm:$0xff] %vm338, 0.0
      %383 = vst.msk [vmem:[#allocation2 + $0x158] sm:$0xff] %vm338, 0.0
      %384 = vst.msk [vmem:[#allocation2 + $0x160] sm:$0x3] %vm341, 0.0
      %385 = vst.msk [vmem:[#allocation2 + $0x168] sm:$0xff] %vm338, 0.0
      %386 = vst.msk [vmem:[#allocation2 + $0x170] sm:$0xff] %vm338, 0.0
      %387 = vst.msk [vmem:[#allocation2 + $0x178] sm:$0x3] %vm341, 0.0
      %388 = vst.msk [vmem:[#allocation2 + $0x180] sm:$0xff] %vm338, 0.0
      %389 = vst.msk [vmem:[#allocation2 + $0x188] sm:$0xff] %vm338, 0.0
      %390 = vst.msk [vmem:[#allocation2 + $0x190] sm:$0x3] %vm341, 0.0
      %391 = vst.msk [vmem:[#allocation2 + $0x198] sm:$0xff] %vm338, 0.0
      %392 = vst.msk [vmem:[#allocation2 + $0x1a0] sm:$0xff] %vm338, 0.0
      %393 = vst.msk [vmem:[#allocation2 + $0x1a8] sm:$0x3] %vm341, 0.0
      %s394 = scalar_lea.vmem [#allocation2], 24
      %395 = vst.msk [vmem:[%s394 + $0x1] sm:$0xff] %vm338, %v306
      %396 = vst.msk [vmem:[%s394 + $0x9] sm:$0xff] %vm338, %v307
      %397 = vst.msk [vmem:[%s394 + $0x19] sm:$0xff] %vm338, %v308
      %398 = vst.msk [vmem:[%s394 + $0x21] sm:$0xff] %vm338, %v309
      %399 = vst.msk [vmem:[%s394 + $0x31] sm:$0xff] %vm338, %v310
      %400 = vst.msk [vmem:[%s394 + $0x39] sm:$0xff] %vm338, %v311
      %401 = vst.msk [vmem:[%s394 + $0x49] sm:$0xff] %vm338, %v312
      %402 = vst.msk [vmem:[%s394 + $0x51] sm:$0xff] %vm338, %v313
      %403 = vst.msk [vmem:[%s394 + $0x61] sm:$0xff] %vm338, %v314
      %404 = vst.msk [vmem:[%s394 + $0x69] sm:$0xff] %vm338, %v315
      %405 = vst.msk [vmem:[%s394 + $0x79] sm:$0xff] %vm338, %v316
      %406 = vst.msk [vmem:[%s394 + $0x81] sm:$0xff] %vm338, %v317
      %407 = vst.msk [vmem:[%s394 + $0x91] sm:$0xff] %vm338, %v318
      %408 = vst.msk [vmem:[%s394 + $0x99] sm:$0xff] %vm338, %v319
      %409 = vst.msk [vmem:[%s394 + $0xa9] sm:$0xff] %vm338, %v320
      %410 = vst.msk [vmem:[%s394 + $0xb1] sm:$0xff] %vm338, %v321
      %411 = vst.msk [vmem:[%s394 + $0xc1] sm:$0xff] %vm338, %v322
      %412 = vst.msk [vmem:[%s394 + $0xc9] sm:$0xff] %vm338, %v323
      %413 = vst.msk [vmem:[%s394 + $0xd9] sm:$0xff] %vm338, %v324
      %414 = vst.msk [vmem:[%s394 + $0xe1] sm:$0xff] %vm338, %v325
      %415 = vst.msk [vmem:[%s394 + $0xf1] sm:$0xff] %vm338, %v326
      %416 = vst.msk [vmem:[%s394 + $0xf9] sm:$0xff] %vm338, %v327
      %417 = vst.msk [vmem:[%s394 + $0x109] sm:$0xff] %vm338, %v328
      %418 = vst.msk [vmem:[%s394 + $0x111] sm:$0xff] %vm338, %v329
      %419 = vst.msk [vmem:[%s394 + $0x121] sm:$0xff] %vm338, %v330
      %420 = vst.msk [vmem:[%s394 + $0x129] sm:$0xff] %vm338, %v331
      %421 = vst.msk [vmem:[%s394 + $0x139] sm:$0xff] %vm338, %v332
      %422 = vst.msk [vmem:[%s394 + $0x141] sm:$0xff] %vm338, %v333
      %423 = vst.msk [vmem:[%s394 + $0x151] sm:$0xff] %vm338, %v334
      %424 = vst.msk [vmem:[%s394 + $0x159] sm:$0xff] %vm338, %v335
      %425 = vst.msk [vmem:[%s394 + $0x169] sm:$0xff] %vm338, %v336
      %426 = vst.msk [vmem:[%s394 + $0x171] sm:$0xff] %vm338, %v337
      %v427 = vld [vmem:[#allocation2] ss:$2 sm:$0xff]
      %s428 = scalar_lea.vmem [#allocation2], 48
      %v429 = vld [vmem:[%s428] ss:$2 sm:$0xff]
      %s430 = scalar_lea.vmem [#allocation2], 96
      %v431 = vld [vmem:[%s430] ss:$2 sm:$0xff]
      %s432 = scalar_lea.vmem [#allocation2], 144
      %v433 = vld [vmem:[%s432] ss:$2 sm:$0xff]
      %s434 = scalar_lea.vmem [#allocation2], 192
      %v435 = vld [vmem:[%s434] ss:$2 sm:$0xff]
      %s436 = scalar_lea.vmem [#allocation2], 240
      %v437 = vld [vmem:[%s436] ss:$2 sm:$0xff]
      %s438 = scalar_lea.vmem [#allocation2], 288
      %v439 = vld [vmem:[%s438] ss:$2 sm:$0xff]
      %s440 = scalar_lea.vmem [#allocation2], 336
      %v441 = vld [vmem:[%s440] ss:$2 sm:$0xff]
      %442 = vst.msk [vmem:[#allocation3] sm:$0xff] %vm338, %v427
      %443 = vst.msk [vmem:[#allocation3 + $0x8] sm:$0xff] %vm338, %v429
      %444 = vst.msk [vmem:[#allocation3 + $0x10] sm:$0xff] %vm338, %v431
      %445 = vst.msk [vmem:[#allocation3 + $0x18] sm:$0xff] %vm338, %v433
      %446 = vst.msk [vmem:[#allocation3 + $0x20] sm:$0xff] %vm338, %v435
      %447 = vst.msk [vmem:[#allocation3 + $0x28] sm:$0xff] %vm338, %v437
      %448 = vst.msk [vmem:[#allocation3 + $0x30] sm:$0xff] %vm338, %v439
      %449 = vst.msk [vmem:[#allocation3 + $0x38] sm:$0xff] %vm338, %v441
      %s450 = scalar_lea.vmem [#allocation2], 1
      %v451 = vld [vmem:[%s450] ss:$2 sm:$0xff]
      %s452 = scalar_lea.vmem [#allocation2], 49
      %v453 = vld [vmem:[%s452] ss:$2 sm:$0xff]
      %s454 = scalar_lea.vmem [#allocation2], 97
      %v455 = vld [vmem:[%s454] ss:$2 sm:$0xff]
      %s456 = scalar_lea.vmem [#allocation2], 145
      %v457 = vld [vmem:[%s456] ss:$2 sm:$0xff]
      %s458 = scalar_lea.vmem [#allocation2], 193
      %v459 = vld [vmem:[%s458] ss:$2 sm:$0xff]
      %s460 = scalar_lea.vmem [#allocation2], 241
      %v461 = vld [vmem:[%s460] ss:$2 sm:$0xff]
      %s462 = scalar_lea.vmem [#allocation2], 289
      %v463 = vld [vmem:[%s462] ss:$2 sm:$0xff]
      %s464 = scalar_lea.vmem [#allocation2], 337
      %v465 = vld [vmem:[%s464] ss:$2 sm:$0xff]
      %474 = vrot.lane.b32.xlu0 %v451, 8
      %v475 = vpop.permute.xlu0 %474
      %476 = vrot.lane.b32.xlu0 %v453, 8
      %v477 = vpop.permute.xlu0 %476
      %478 = vrot.lane.b32.xlu0 %v455, 8
      %v479 = vpop.permute.xlu0 %478
      %480 = vrot.lane.b32.xlu0 %v457, 8
      %v481 = vpop.permute.xlu0 %480
      %482 = vrot.lane.b32.xlu0 %v459, 8
      %v483 = vpop.permute.xlu0 %482
      %484 = vrot.lane.b32.xlu0 %v461, 8
      %v485 = vpop.permute.xlu0 %484
      %486 = vrot.lane.b32.xlu0 %v463, 8
      %v487 = vpop.permute.xlu0 %486
      %488 = vrot.lane.b32.xlu0 %v465, 8
      %v489 = vpop.permute.xlu0 %488
      %vm498 = vcmask 130112
      %499 = vst.msk [vmem:[#allocation3] sm:$0xff] %vm498, %v475
      %500 = vst.msk [vmem:[#allocation3 + $0x8] sm:$0xff] %vm498, %v477
      %501 = vst.msk [vmem:[#allocation3 + $0x10] sm:$0xff] %vm498, %v479
      %502 = vst.msk [vmem:[#allocation3 + $0x18] sm:$0xff] %vm498, %v481
      %503 = vst.msk [vmem:[#allocation3 + $0x20] sm:$0xff] %vm498, %v483
      %504 = vst.msk [vmem:[#allocation3 + $0x28] sm:$0xff] %vm498, %v485
      %505 = vst.msk [vmem:[#allocation3 + $0x30] sm:$0xff] %vm498, %v487
      %506 = vst.msk [vmem:[#allocation3 + $0x38] sm:$0xff] %vm498, %v489
      %s507 = scalar_lea.vmem [#allocation2], 2
      %v508 = vld [vmem:[%s507] ss:$2 sm:$0xff]
      %s509 = scalar_lea.vmem [#allocation2], 50
      %v510 = vld [vmem:[%s509] ss:$2 sm:$0xff]
      %s511 = scalar_lea.vmem [#allocation2], 98
      %v512 = vld [vmem:[%s511] ss:$2 sm:$0xff]
      %s513 = scalar_lea.vmem [#allocation2], 146
      %v514 = vld [vmem:[%s513] ss:$2 sm:$0xff]
      %s515 = scalar_lea.vmem [#allocation2], 194
      %v516 = vld [vmem:[%s515] ss:$2 sm:$0xff]
      %s517 = scalar_lea.vmem [#allocation2], 242
      %v518 = vld [vmem:[%s517] ss:$2 sm:$0xff]
      %s519 = scalar_lea.vmem [#allocation2], 290
      %v520 = vld [vmem:[%s519] ss:$2 sm:$0xff]
      %s521 = scalar_lea.vmem [#allocation2], 338
      %v522 = vld [vmem:[%s521] ss:$2 sm:$0xff]
      %531 = vrot.lane.b32.xlu0 %v508, 16
      %v532 = vpop.permute.xlu0 %531
      %533 = vrot.lane.b32.xlu0 %v510, 16
      %v534 = vpop.permute.xlu0 %533
      %535 = vrot.lane.b32.xlu0 %v512, 16
      %v536 = vpop.permute.xlu0 %535
      %537 = vrot.lane.b32.xlu0 %v514, 16
      %v538 = vpop.permute.xlu0 %537
      %539 = vrot.lane.b32.xlu0 %v516, 16
      %v540 = vpop.permute.xlu0 %539
      %541 = vrot.lane.b32.xlu0 %v518, 16
      %v542 = vpop.permute.xlu0 %541
      %543 = vrot.lane.b32.xlu0 %v520, 16
      %v544 = vpop.permute.xlu0 %543
      %545 = vrot.lane.b32.xlu0 %v522, 16
      %v546 = vpop.permute.xlu0 %545
      %vm555 = vcmask 195712
      %556 = vst.msk [vmem:[#allocation3] sm:$0xff] %vm555, %v532
      %557 = vst.msk [vmem:[#allocation3 + $0x8] sm:$0xff] %vm555, %v534
      %558 = vst.msk [vmem:[#allocation3 + $0x10] sm:$0xff] %vm555, %v536
      %559 = vst.msk [vmem:[#allocation3 + $0x18] sm:$0xff] %vm555, %v538
      %560 = vst.msk [vmem:[#allocation3 + $0x20] sm:$0xff] %vm555, %v540
      %561 = vst.msk [vmem:[#allocation3 + $0x28] sm:$0xff] %vm555, %v542
      %562 = vst.msk [vmem:[#allocation3 + $0x30] sm:$0xff] %vm555, %v544
      %563 = vst.msk [vmem:[#allocation3 + $0x38] sm:$0xff] %vm555, %v546
      %s564 = scalar_lea.vmem [#allocation2], 3
      %v565 = vld [vmem:[%s564] ss:$2 sm:$0xff]
      %s566 = scalar_lea.vmem [#allocation2], 51
      %v567 = vld [vmem:[%s566] ss:$2 sm:$0xff]
      %s568 = scalar_lea.vmem [#allocation2], 99
      %v569 = vld [vmem:[%s568] ss:$2 sm:$0xff]
      %s570 = scalar_lea.vmem [#allocation2], 147
      %v571 = vld [vmem:[%s570] ss:$2 sm:$0xff]
      %s572 = scalar_lea.vmem [#allocation2], 195
      %v573 = vld [vmem:[%s572] ss:$2 sm:$0xff]
      %s574 = scalar_lea.vmem [#allocation2], 243
      %v575 = vld [vmem:[%s574] ss:$2 sm:$0xff]
      %s576 = scalar_lea.vmem [#allocation2], 291
      %v577 = vld [vmem:[%s576] ss:$2 sm:$0xff]
      %s578 = scalar_lea.vmem [#allocation2], 339
      %v579 = vld [vmem:[%s578] ss:$2 sm:$0xff]
      %588 = vrot.lane.b32.xlu0 %v565, 24
      %v589 = vpop.permute.xlu0 %588
      %590 = vrot.lane.b32.xlu0 %v567, 24
      %v591 = vpop.permute.xlu0 %590
      %592 = vrot.lane.b32.xlu0 %v569, 24
      %v593 = vpop.permute.xlu0 %592
      %594 = vrot.lane.b32.xlu0 %v571, 24
      %v595 = vpop.permute.xlu0 %594
      %596 = vrot.lane.b32.xlu0 %v573, 24
      %v597 = vpop.permute.xlu0 %596
      %598 = vrot.lane.b32.xlu0 %v575, 24
      %v599 = vpop.permute.xlu0 %598
      %600 = vrot.lane.b32.xlu0 %v577, 24
      %v601 = vpop.permute.xlu0 %600
      %602 = vrot.lane.b32.xlu0 %v579, 24
      %v603 = vpop.permute.xlu0 %602
      %vm612 = vcmask 261312
      %613 = vst.msk [vmem:[#allocation3] sm:$0xff] %vm612, %v589
      %614 = vst.msk [vmem:[#allocation3 + $0x8] sm:$0xff] %vm612, %v591
      %615 = vst.msk [vmem:[#allocation3 + $0x10] sm:$0xff] %vm612, %v593
      %616 = vst.msk [vmem:[#allocation3 + $0x18] sm:$0xff] %vm612, %v595
      %617 = vst.msk [vmem:[#allocation3 + $0x20] sm:$0xff] %vm612, %v597
      %618 = vst.msk [vmem:[#allocation3 + $0x28] sm:$0xff] %vm612, %v599
      %619 = vst.msk [vmem:[#allocation3 + $0x30] sm:$0xff] %vm612, %v601
      %620 = vst.msk [vmem:[#allocation3 + $0x38] sm:$0xff] %vm612, %v603
      %v621 = vld [vmem:[%s394] ss:$2 sm:$0xff]
      %s622 = scalar_lea.vmem %s394, 48 [#allocation2]
      %v623 = vld [vmem:[%s622] ss:$2 sm:$0xff]
      %s624 = scalar_lea.vmem %s394, 96 [#allocation2]
      %v625 = vld [vmem:[%s624] ss:$2 sm:$0xff]
      %s626 = scalar_lea.vmem %s394, 144 [#allocation2]
      %v627 = vld [vmem:[%s626] ss:$2 sm:$0xff]
      %s628 = scalar_lea.vmem %s394, 192 [#allocation2]
      %v629 = vld [vmem:[%s628] ss:$2 sm:$0xff]
      %s630 = scalar_lea.vmem %s394, 240 [#allocation2]
      %v631 = vld [vmem:[%s630] ss:$2 sm:$0xff]
      %s632 = scalar_lea.vmem %s394, 288 [#allocation2]
      %v633 = vld [vmem:[%s632] ss:$2 sm:$0xff]
      %s634 = scalar_lea.vmem %s394, 336 [#allocation2]
      %v635 = vld [vmem:[%s634] ss:$2 sm:$0xff]
      %644 = vrot.lane.b32.xlu0 %v621, 32
      %v645 = vpop.permute.xlu0 %644
      %646 = vrot.lane.b32.xlu0 %v623, 32
      %v647 = vpop.permute.xlu0 %646
      %648 = vrot.lane.b32.xlu0 %v625, 32
      %v649 = vpop.permute.xlu0 %648
      %650 = vrot.lane.b32.xlu0 %v627, 32
      %v651 = vpop.permute.xlu0 %650
      %652 = vrot.lane.b32.xlu0 %v629, 32
      %v653 = vpop.permute.xlu0 %652
      %654 = vrot.lane.b32.xlu0 %v631, 32
      %v655 = vpop.permute.xlu0 %654
      %656 = vrot.lane.b32.xlu0 %v633, 32
      %v657 = vpop.permute.xlu0 %656
      %658 = vrot.lane.b32.xlu0 %v635, 32
      %v659 = vpop.permute.xlu0 %658
      %vm668 = vcmask 326912
      %669 = vst.msk [vmem:[#allocation3] sm:$0xff] %vm668, %v645
      %670 = vst.msk [vmem:[#allocation3 + $0x8] sm:$0xff] %vm668, %v647
      %671 = vst.msk [vmem:[#allocation3 + $0x10] sm:$0xff] %vm668, %v649
      %672 = vst.msk [vmem:[#allocation3 + $0x18] sm:$0xff] %vm668, %v651
      %673 = vst.msk [vmem:[#allocation3 + $0x20] sm:$0xff] %vm668, %v653
      %674 = vst.msk [vmem:[#allocation3 + $0x28] sm:$0xff] %vm668, %v655
      %675 = vst.msk [vmem:[#allocation3 + $0x30] sm:$0xff] %vm668, %v657
      %676 = vst.msk [vmem:[#allocation3 + $0x38] sm:$0xff] %vm668, %v659
      %s677 = scalar_lea.vmem %s394, 1 [#allocation2]
      %v678 = vld [vmem:[%s677] ss:$2 sm:$0xff]
      %s679 = scalar_lea.vmem %s394, 49 [#allocation2]
      %v680 = vld [vmem:[%s679] ss:$2 sm:$0xff]
      %s681 = scalar_lea.vmem %s394, 97 [#allocation2]
      %v682 = vld [vmem:[%s681] ss:$2 sm:$0xff]
      %s683 = scalar_lea.vmem %s394, 145 [#allocation2]
      %v684 = vld [vmem:[%s683] ss:$2 sm:$0xff]
      %s685 = scalar_lea.vmem %s394, 193 [#allocation2]
      %v686 = vld [vmem:[%s685] ss:$2 sm:$0xff]
      %s687 = scalar_lea.vmem %s394, 241 [#allocation2]
      %v688 = vld [vmem:[%s687] ss:$2 sm:$0xff]
      %s689 = scalar_lea.vmem %s394, 289 [#allocation2]
      %v690 = vld [vmem:[%s689] ss:$2 sm:$0xff]
      %s691 = scalar_lea.vmem %s394, 337 [#allocation2]
      %v692 = vld [vmem:[%s691] ss:$2 sm:$0xff]
      %701 = vrot.lane.b32.xlu0 %v678, 40
      %v702 = vpop.permute.xlu0 %701
      %703 = vrot.lane.b32.xlu0 %v680, 40
      %v704 = vpop.permute.xlu0 %703
      %705 = vrot.lane.b32.xlu0 %v682, 40
      %v706 = vpop.permute.xlu0 %705
      %707 = vrot.lane.b32.xlu0 %v684, 40
      %v708 = vpop.permute.xlu0 %707
      %709 = vrot.lane.b32.xlu0 %v686, 40
      %v710 = vpop.permute.xlu0 %709
      %711 = vrot.lane.b32.xlu0 %v688, 40
      %v712 = vpop.permute.xlu0 %711
      %713 = vrot.lane.b32.xlu0 %v690, 40
      %v714 = vpop.permute.xlu0 %713
      %715 = vrot.lane.b32.xlu0 %v692, 40
      %v716 = vpop.permute.xlu0 %715
      %vm725 = vcmask 392512
      %726 = vst.msk [vmem:[#allocation3] sm:$0xff] %vm725, %v702
      %727 = vst.msk [vmem:[#allocation3 + $0x8] sm:$0xff] %vm725, %v704
      %728 = vst.msk [vmem:[#allocation3 + $0x10] sm:$0xff] %vm725, %v706
      %729 = vst.msk [vmem:[#allocation3 + $0x18] sm:$0xff] %vm725, %v708
      %730 = vst.msk [vmem:[#allocation3 + $0x20] sm:$0xff] %vm725, %v710
      %731 = vst.msk [vmem:[#allocation3 + $0x28] sm:$0xff] %vm725, %v712
      %732 = vst.msk [vmem:[#allocation3 + $0x30] sm:$0xff] %vm725, %v714
      %733 = vst.msk [vmem:[#allocation3 + $0x38] sm:$0xff] %vm725, %v716
      %s734 = scalar_lea.vmem %s394, 2 [#allocation2]
      %v735 = vld [vmem:[%s734] ss:$2 sm:$0xff]
      %s736 = scalar_lea.vmem %s394, 50 [#allocation2]
      %v737 = vld [vmem:[%s736] ss:$2 sm:$0xff]
      %s738 = scalar_lea.vmem %s394, 98 [#allocation2]
      %v739 = vld [vmem:[%s738] ss:$2 sm:$0xff]
      %s740 = scalar_lea.vmem %s394, 146 [#allocation2]
      %v741 = vld [vmem:[%s740] ss:$2 sm:$0xff]
      %s742 = scalar_lea.vmem %s394, 194 [#allocation2]
      %v743 = vld [vmem:[%s742] ss:$2 sm:$0xff]
      %s744 = scalar_lea.vmem %s394, 242 [#allocation2]
      %v745 = vld [vmem:[%s744] ss:$2 sm:$0xff]
      %s746 = scalar_lea.vmem %s394, 290 [#allocation2]
      %v747 = vld [vmem:[%s746] ss:$2 sm:$0xff]
      %s748 = scalar_lea.vmem %s394, 338 [#allocation2]
      %v749 = vld [vmem:[%s748] ss:$2 sm:$0xff]
      %758 = vrot.lane.b32.xlu0 %v735, 48
      %v759 = vpop.permute.xlu0 %758
      %760 = vrot.lane.b32.xlu0 %v737, 48
      %v761 = vpop.permute.xlu0 %760
      %762 = vrot.lane.b32.xlu0 %v739, 48
      %v763 = vpop.permute.xlu0 %762
      %764 = vrot.lane.b32.xlu0 %v741, 48
      %v765 = vpop.permute.xlu0 %764
      %766 = vrot.lane.b32.xlu0 %v743, 48
      %v767 = vpop.permute.xlu0 %766
      %768 = vrot.lane.b32.xlu0 %v745, 48
      %v769 = vpop.permute.xlu0 %768
      %770 = vrot.lane.b32.xlu0 %v747, 48
      %v771 = vpop.permute.xlu0 %770
      %772 = vrot.lane.b32.xlu0 %v749, 48
      %v773 = vpop.permute.xlu0 %772
      %vm782 = vcmask 458112
      %783 = vst.msk [vmem:[#allocation3] sm:$0xff] %vm782, %v759
      %784 = vst.msk [vmem:[#allocation3 + $0x8] sm:$0xff] %vm782, %v761
      %785 = vst.msk [vmem:[#allocation3 + $0x10] sm:$0xff] %vm782, %v763
      %786 = vst.msk [vmem:[#allocation3 + $0x18] sm:$0xff] %vm782, %v765
      %787 = vst.msk [vmem:[#allocation3 + $0x20] sm:$0xff] %vm782, %v767
      %788 = vst.msk [vmem:[#allocation3 + $0x28] sm:$0xff] %vm782, %v769
      %789 = vst.msk [vmem:[#allocation3 + $0x30] sm:$0xff] %vm782, %v771
      %790 = vst.msk [vmem:[#allocation3 + $0x38] sm:$0xff] %vm782, %v773
      %s791 = scalar_lea.vmem %s394, 3 [#allocation2]
      %v792 = vld [vmem:[%s791] ss:$2 sm:$0xff]
      %s793 = scalar_lea.vmem %s394, 51 [#allocation2]
      %v794 = vld [vmem:[%s793] ss:$2 sm:$0xff]
      %s795 = scalar_lea.vmem %s394, 99 [#allocation2]
      %v796 = vld [vmem:[%s795] ss:$2 sm:$0xff]
      %s797 = scalar_lea.vmem %s394, 147 [#allocation2]
      %v798 = vld [vmem:[%s797] ss:$2 sm:$0xff]
      %s799 = scalar_lea.vmem %s394, 195 [#allocation2]
      %v800 = vld [vmem:[%s799] ss:$2 sm:$0xff]
      %s801 = scalar_lea.vmem %s394, 243 [#allocation2]
      %v802 = vld [vmem:[%s801] ss:$2 sm:$0xff]
      %s803 = scalar_lea.vmem %s394, 291 [#allocation2]
      %v804 = vld [vmem:[%s803] ss:$2 sm:$0xff]
      %s805 = scalar_lea.vmem %s394, 339 [#allocation2]
      %v806 = vld [vmem:[%s805] ss:$2 sm:$0xff]
      %815 = vrot.lane.b32.xlu0 %v792, 56
      %v816 = vpop.permute.xlu0 %815
      %817 = vrot.lane.b32.xlu0 %v794, 56
      %v818 = vpop.permute.xlu0 %817
      %819 = vrot.lane.b32.xlu0 %v796, 56
      %v820 = vpop.permute.xlu0 %819
      %821 = vrot.lane.b32.xlu0 %v798, 56
      %v822 = vpop.permute.xlu0 %821
      %823 = vrot.lane.b32.xlu0 %v800, 56
      %v824 = vpop.permute.xlu0 %823
      %825 = vrot.lane.b32.xlu0 %v802, 56
      %v826 = vpop.permute.xlu0 %825
      %827 = vrot.lane.b32.xlu0 %v804, 56
      %v828 = vpop.permute.xlu0 %827
      %829 = vrot.lane.b32.xlu0 %v806, 56
      %v830 = vpop.permute.xlu0 %829
      %vm839 = vcmask 523712
      %840 = vst.msk [vmem:[#allocation3] sm:$0xff] %vm839, %v816
      %841 = vst.msk [vmem:[#allocation3 + $0x8] sm:$0xff] %vm839, %v818
      %842 = vst.msk [vmem:[#allocation3 + $0x10] sm:$0xff] %vm839, %v820
      %843 = vst.msk [vmem:[#allocation3 + $0x18] sm:$0xff] %vm839, %v822
      %844 = vst.msk [vmem:[#allocation3 + $0x20] sm:$0xff] %vm839, %v824
      %845 = vst.msk [vmem:[#allocation3 + $0x28] sm:$0xff] %vm839, %v826
      %846 = vst.msk [vmem:[#allocation3 + $0x30] sm:$0xff] %vm839, %v828
      %847 = vst.msk [vmem:[#allocation3 + $0x38] sm:$0xff] %vm839, %v830
      %s848 = scalar_lea.vmem [#allocation2], 48
      %v849 = vld [vmem:[%s848] ss:$2 sm:$0xff]
      %s850 = scalar_lea.vmem %s848, 48 [#allocation2]
      %v851 = vld [vmem:[%s850] ss:$2 sm:$0xff]
      %s852 = scalar_lea.vmem %s848, 96 [#allocation2]
      %v853 = vld [vmem:[%s852] ss:$2 sm:$0xff]
      %s854 = scalar_lea.vmem %s848, 144 [#allocation2]
      %v855 = vld [vmem:[%s854] ss:$2 sm:$0xff]
      %s856 = scalar_lea.vmem %s848, 192 [#allocation2]
      %v857 = vld [vmem:[%s856] ss:$2 sm:$0xff]
      %s858 = scalar_lea.vmem %s848, 240 [#allocation2]
      %v859 = vld [vmem:[%s858] ss:$2 sm:$0xff]
      %s860 = scalar_lea.vmem %s848, 288 [#allocation2]
      %v861 = vld [vmem:[%s860] ss:$2 sm:$0xff]
      %s862 = scalar_lea.vmem %s848, 336 [#allocation2]
      %v863 = vld [vmem:[%s862] ss:$2 sm:$0xff]
      %872 = vrot.lane.b32.xlu0 %v849, 64
      %v873 = vpop.permute.xlu0 %872
      %874 = vrot.lane.b32.xlu0 %v851, 64
      %v875 = vpop.permute.xlu0 %874
      %876 = vrot.lane.b32.xlu0 %v853, 64
      %v877 = vpop.permute.xlu0 %876
      %878 = vrot.lane.b32.xlu0 %v855, 64
      %v879 = vpop.permute.xlu0 %878
      %880 = vrot.lane.b32.xlu0 %v857, 64
      %v881 = vpop.permute.xlu0 %880
      %882 = vrot.lane.b32.xlu0 %v859, 64
      %v883 = vpop.permute.xlu0 %882
      %884 = vrot.lane.b32.xlu0 %v861, 64
      %v885 = vpop.permute.xlu0 %884
      %886 = vrot.lane.b32.xlu0 %v863, 64
      %v887 = vpop.permute.xlu0 %886
      %vm896 = vcmask 589312
      %897 = vst.msk [vmem:[#allocation3] sm:$0xff] %vm896, %v873
      %898 = vst.msk [vmem:[#allocation3 + $0x8] sm:$0xff] %vm896, %v875
      %899 = vst.msk [vmem:[#allocation3 + $0x10] sm:$0xff] %vm896, %v877
      %900 = vst.msk [vmem:[#allocation3 + $0x18] sm:$0xff] %vm896, %v879
      %901 = vst.msk [vmem:[#allocation3 + $0x20] sm:$0xff] %vm896, %v881
      %902 = vst.msk [vmem:[#allocation3 + $0x28] sm:$0xff] %vm896, %v883
      %903 = vst.msk [vmem:[#allocation3 + $0x30] sm:$0xff] %vm896, %v885
      %904 = vst.msk [vmem:[#allocation3 + $0x38] sm:$0xff] %vm896, %v887
      %s905 = scalar_lea.vmem %s848, 1 [#allocation2]
      %v906 = vld [vmem:[%s905] ss:$2 sm:$0xff]
      %s907 = scalar_lea.vmem %s848, 49 [#allocation2]
      %v908 = vld [vmem:[%s907] ss:$2 sm:$0xff]
      %s909 = scalar_lea.vmem %s848, 97 [#allocation2]
      %v910 = vld [vmem:[%s909] ss:$2 sm:$0xff]
      %s911 = scalar_lea.vmem %s848, 145 [#allocation2]
      %v912 = vld [vmem:[%s911] ss:$2 sm:$0xff]
      %s913 = scalar_lea.vmem %s848, 193 [#allocation2]
      %v914 = vld [vmem:[%s913] ss:$2 sm:$0xff]
      %s915 = scalar_lea.vmem %s848, 241 [#allocation2]
      %v916 = vld [vmem:[%s915] ss:$2 sm:$0xff]
      %s917 = scalar_lea.vmem %s848, 289 [#allocation2]
      %v918 = vld [vmem:[%s917] ss:$2 sm:$0xff]
      %s919 = scalar_lea.vmem %s848, 337 [#allocation2]
      %v920 = vld [vmem:[%s919] ss:$2 sm:$0xff]
      %929 = vrot.lane.b32.xlu0 %v906, 72
      %v930 = vpop.permute.xlu0 %929
      %931 = vrot.lane.b32.xlu0 %v908, 72
      %v932 = vpop.permute.xlu0 %931
      %933 = vrot.lane.b32.xlu0 %v910, 72
      %v934 = vpop.permute.xlu0 %933
      %935 = vrot.lane.b32.xlu0 %v912, 72
      %v936 = vpop.permute.xlu0 %935
      %937 = vrot.lane.b32.xlu0 %v914, 72
      %v938 = vpop.permute.xlu0 %937
      %939 = vrot.lane.b32.xlu0 %v916, 72
      %v940 = vpop.permute.xlu0 %939
      %941 = vrot.lane.b32.xlu0 %v918, 72
      %v942 = vpop.permute.xlu0 %941
      %943 = vrot.lane.b32.xlu0 %v920, 72
      %v944 = vpop.permute.xlu0 %943
      %vm953 = vcmask 654912
      %954 = vst.msk [vmem:[#allocation3] sm:$0xff] %vm953, %v930
      %955 = vst.msk [vmem:[#allocation3 + $0x8] sm:$0xff] %vm953, %v932
      %956 = vst.msk [vmem:[#allocation3 + $0x10] sm:$0xff] %vm953, %v934
      %957 = vst.msk [vmem:[#allocation3 + $0x18] sm:$0xff] %vm953, %v936
      %958 = vst.msk [vmem:[#allocation3 + $0x20] sm:$0xff] %vm953, %v938
      %959 = vst.msk [vmem:[#allocation3 + $0x28] sm:$0xff] %vm953, %v940
      %960 = vst.msk [vmem:[#allocation3 + $0x30] sm:$0xff] %vm953, %v942
      %961 = vst.msk [vmem:[#allocation3 + $0x38] sm:$0xff] %vm953, %v944
      %s962 = scalar_lea.vmem %s848, 2 [#allocation2]
      %v963 = vld [vmem:[%s962] ss:$2 sm:$0xff]
      %s964 = scalar_lea.vmem %s848, 50 [#allocation2]
      %v965 = vld [vmem:[%s964] ss:$2 sm:$0xff]
      %s966 = scalar_lea.vmem %s848, 98 [#allocation2]
      %v967 = vld [vmem:[%s966] ss:$2 sm:$0xff]
      %s968 = scalar_lea.vmem %s848, 146 [#allocation2]
      %v969 = vld [vmem:[%s968] ss:$2 sm:$0xff]
      %s970 = scalar_lea.vmem %s848, 194 [#allocation2]
      %v971 = vld [vmem:[%s970] ss:$2 sm:$0xff]
      %s972 = scalar_lea.vmem %s848, 242 [#allocation2]
      %v973 = vld [vmem:[%s972] ss:$2 sm:$0xff]
      %s974 = scalar_lea.vmem %s848, 290 [#allocation2]
      %v975 = vld [vmem:[%s974] ss:$2 sm:$0xff]
      %s976 = scalar_lea.vmem %s848, 338 [#allocation2]
      %v977 = vld [vmem:[%s976] ss:$2 sm:$0xff]
      %986 = vrot.lane.b32.xlu0 %v963, 80
      %v987 = vpop.permute.xlu0 %986
      %988 = vrot.lane.b32.xlu0 %v965, 80
      %v989 = vpop.permute.xlu0 %988
      %990 = vrot.lane.b32.xlu0 %v967, 80
      %v991 = vpop.permute.xlu0 %990
      %992 = vrot.lane.b32.xlu0 %v969, 80
      %v993 = vpop.permute.xlu0 %992
      %994 = vrot.lane.b32.xlu0 %v971, 80
      %v995 = vpop.permute.xlu0 %994
      %996 = vrot.lane.b32.xlu0 %v973, 80
      %v997 = vpop.permute.xlu0 %996
      %998 = vrot.lane.b32.xlu0 %v975, 80
      %v999 = vpop.permute.xlu0 %998
      %1000 = vrot.lane.b32.xlu0 %v977, 80
      %v1001 = vpop.permute.xlu0 %1000
      %vm1010 = vcmask 720512
      %1011 = vst.msk [vmem:[#allocation3] sm:$0xff] %vm1010, %v987
      %1012 = vst.msk [vmem:[#allocation3 + $0x8] sm:$0xff] %vm1010, %v989
      %1013 = vst.msk [vmem:[#allocation3 + $0x10] sm:$0xff] %vm1010, %v991
      %1014 = vst.msk [vmem:[#allocation3 + $0x18] sm:$0xff] %vm1010, %v993
      %1015 = vst.msk [vmem:[#allocation3 + $0x20] sm:$0xff] %vm1010, %v995
      %1016 = vst.msk [vmem:[#allocation3 + $0x28] sm:$0xff] %vm1010, %v997
      %1017 = vst.msk [vmem:[#allocation3 + $0x30] sm:$0xff] %vm1010, %v999
      %1018 = vst.msk [vmem:[#allocation3 + $0x38] sm:$0xff] %vm1010, %v1001
      %s1019 = scalar_lea.vmem %s848, 3 [#allocation2]
      %v1020 = vld [vmem:[%s1019] ss:$2 sm:$0xff]
      %s1021 = scalar_lea.vmem %s848, 51 [#allocation2]
      %v1022 = vld [vmem:[%s1021] ss:$2 sm:$0xff]
      %s1023 = scalar_lea.vmem %s848, 99 [#allocation2]
      %v1024 = vld [vmem:[%s1023] ss:$2 sm:$0xff]
      %s1025 = scalar_lea.vmem %s848, 147 [#allocation2]
      %v1026 = vld [vmem:[%s1025] ss:$2 sm:$0xff]
      %s1027 = scalar_lea.vmem %s848, 195 [#allocation2]
      %v1028 = vld [vmem:[%s1027] ss:$2 sm:$0xff]
      %s1029 = scalar_lea.vmem %s848, 243 [#allocation2]
      %v1030 = vld [vmem:[%s1029] ss:$2 sm:$0xff]
      %s1031 = scalar_lea.vmem %s848, 291 [#allocation2]
      %v1032 = vld [vmem:[%s1031] ss:$2 sm:$0xff]
      %s1033 = scalar_lea.vmem %s848, 339 [#allocation2]
      %v1034 = vld [vmem:[%s1033] ss:$2 sm:$0xff]
      %1043 = vrot.lane.b32.xlu0 %v1020, 88
      %v1044 = vpop.permute.xlu0 %1043
      %1045 = vrot.lane.b32.xlu0 %v1022, 88
      %v1046 = vpop.permute.xlu0 %1045
      %1047 = vrot.lane.b32.xlu0 %v1024, 88
      %v1048 = vpop.permute.xlu0 %1047
      %1049 = vrot.lane.b32.xlu0 %v1026, 88
      %v1050 = vpop.permute.xlu0 %1049
      %1051 = vrot.lane.b32.xlu0 %v1028, 88
      %v1052 = vpop.permute.xlu0 %1051
      %1053 = vrot.lane.b32.xlu0 %v1030, 88
      %v1054 = vpop.permute.xlu0 %1053
      %1055 = vrot.lane.b32.xlu0 %v1032, 88
      %v1056 = vpop.permute.xlu0 %1055
      %1057 = vrot.lane.b32.xlu0 %v1034, 88
      %v1058 = vpop.permute.xlu0 %1057
      %vm1067 = vcmask 786112
      %1068 = vst.msk [vmem:[#allocation3] sm:$0xff] %vm1067, %v1044
      %1069 = vst.msk [vmem:[#allocation3 + $0x8] sm:$0xff] %vm1067, %v1046
      %1070 = vst.msk [vmem:[#allocation3 + $0x10] sm:$0xff] %vm1067, %v1048
      %1071 = vst.msk [vmem:[#allocation3 + $0x18] sm:$0xff] %vm1067, %v1050
      %1072 = vst.msk [vmem:[#allocation3 + $0x20] sm:$0xff] %vm1067, %v1052
      %1073 = vst.msk [vmem:[#allocation3 + $0x28] sm:$0xff] %vm1067, %v1054
      %1074 = vst.msk [vmem:[#allocation3 + $0x30] sm:$0xff] %vm1067, %v1056
      %1075 = vst.msk [vmem:[#allocation3 + $0x38] sm:$0xff] %vm1067, %v1058
      %s1076 = scalar_lea.vmem [#allocation2], 72
      %v1077 = vld [vmem:[%s1076] ss:$2 sm:$0xff]
      %s1078 = scalar_lea.vmem %s1076, 48 [#allocation2]
      %v1079 = vld [vmem:[%s1078] ss:$2 sm:$0xff]
      %s1080 = scalar_lea.vmem %s1076, 96 [#allocation2]
      %v1081 = vld [vmem:[%s1080] ss:$2 sm:$0xff]
      %s1082 = scalar_lea.vmem %s1076, 144 [#allocation2]
      %v1083 = vld [vmem:[%s1082] ss:$2 sm:$0xff]
      %s1084 = scalar_lea.vmem %s1076, 192 [#allocation2]
      %v1085 = vld [vmem:[%s1084] ss:$2 sm:$0xff]
      %s1086 = scalar_lea.vmem %s1076, 240 [#allocation2]
      %v1087 = vld [vmem:[%s1086] ss:$2 sm:$0xff]
      %s1088 = scalar_lea.vmem %s1076, 288 [#allocation2]
      %v1089 = vld [vmem:[%s1088] ss:$2 sm:$0xff]
      %s1090 = scalar_lea.vmem %s1076, 336 [#allocation2]
      %v1091 = vld [vmem:[%s1090] ss:$2 sm:$0xff]
      %1100 = vrot.lane.b32.xlu0 %v1077, 96
      %v1101 = vpop.permute.xlu0 %1100
      %1102 = vrot.lane.b32.xlu0 %v1079, 96
      %v1103 = vpop.permute.xlu0 %1102
      %1104 = vrot.lane.b32.xlu0 %v1081, 96
      %v1105 = vpop.permute.xlu0 %1104
      %1106 = vrot.lane.b32.xlu0 %v1083, 96
      %v1107 = vpop.permute.xlu0 %1106
      %1108 = vrot.lane.b32.xlu0 %v1085, 96
      %v1109 = vpop.permute.xlu0 %1108
      %1110 = vrot.lane.b32.xlu0 %v1087, 96
      %v1111 = vpop.permute.xlu0 %1110
      %1112 = vrot.lane.b32.xlu0 %v1089, 96
      %v1113 = vpop.permute.xlu0 %1112
      %1114 = vrot.lane.b32.xlu0 %v1091, 96
      %v1115 = vpop.permute.xlu0 %1114
      %vm1124 = vcmask 851712
      %1125 = vst.msk [vmem:[#allocation3] sm:$0xff] %vm1124, %v1101
      %1126 = vst.msk [vmem:[#allocation3 + $0x8] sm:$0xff] %vm1124, %v1103
      %1127 = vst.msk [vmem:[#allocation3 + $0x10] sm:$0xff] %vm1124, %v1105
      %1128 = vst.msk [vmem:[#allocation3 + $0x18] sm:$0xff] %vm1124, %v1107
      %1129 = vst.msk [vmem:[#allocation3 + $0x20] sm:$0xff] %vm1124, %v1109
      %1130 = vst.msk [vmem:[#allocation3 + $0x28] sm:$0xff] %vm1124, %v1111
      %1131 = vst.msk [vmem:[#allocation3 + $0x30] sm:$0xff] %vm1124, %v1113
      %1132 = vst.msk [vmem:[#allocation3 + $0x38] sm:$0xff] %vm1124, %v1115
      %s1133 = scalar_lea.vmem %s1076, 1 [#allocation2]
      %v1134 = vld [vmem:[%s1133] ss:$2 sm:$0xff]
      %s1135 = scalar_lea.vmem %s1076, 49 [#allocation2]
      %v1136 = vld [vmem:[%s1135] ss:$2 sm:$0xff]
      %s1137 = scalar_lea.vmem %s1076, 97 [#allocation2]
      %v1138 = vld [vmem:[%s1137] ss:$2 sm:$0xff]
      %s1139 = scalar_lea.vmem %s1076, 145 [#allocation2]
      %v1140 = vld [vmem:[%s1139] ss:$2 sm:$0xff]
      %s1141 = scalar_lea.vmem %s1076, 193 [#allocation2]
      %v1142 = vld [vmem:[%s1141] ss:$2 sm:$0xff]
      %s1143 = scalar_lea.vmem %s1076, 241 [#allocation2]
      %v1144 = vld [vmem:[%s1143] ss:$2 sm:$0xff]
      %s1145 = scalar_lea.vmem %s1076, 289 [#allocation2]
      %v1146 = vld [vmem:[%s1145] ss:$2 sm:$0xff]
      %s1147 = scalar_lea.vmem %s1076, 337 [#allocation2]
      %v1148 = vld [vmem:[%s1147] ss:$2 sm:$0xff]
      %1157 = vrot.lane.b32.xlu0 %v1134, 104
      %v1158 = vpop.permute.xlu0 %1157
      %1159 = vrot.lane.b32.xlu0 %v1136, 104
      %v1160 = vpop.permute.xlu0 %1159
      %1161 = vrot.lane.b32.xlu0 %v1138, 104
      %v1162 = vpop.permute.xlu0 %1161
      %1163 = vrot.lane.b32.xlu0 %v1140, 104
      %v1164 = vpop.permute.xlu0 %1163
      %1165 = vrot.lane.b32.xlu0 %v1142, 104
      %v1166 = vpop.permute.xlu0 %1165
      %1167 = vrot.lane.b32.xlu0 %v1144, 104
      %v1168 = vpop.permute.xlu0 %1167
      %1169 = vrot.lane.b32.xlu0 %v1146, 104
      %v1170 = vpop.permute.xlu0 %1169
      %1171 = vrot.lane.b32.xlu0 %v1148, 104
      %v1172 = vpop.permute.xlu0 %1171
      %vm1181 = vcmask 917312
      %1182 = vst.msk [vmem:[#allocation3] sm:$0xff] %vm1181, %v1158
      %1183 = vst.msk [vmem:[#allocation3 + $0x8] sm:$0xff] %vm1181, %v1160
      %1184 = vst.msk [vmem:[#allocation3 + $0x10] sm:$0xff] %vm1181, %v1162
      %1185 = vst.msk [vmem:[#allocation3 + $0x18] sm:$0xff] %vm1181, %v1164
      %1186 = vst.msk [vmem:[#allocation3 + $0x20] sm:$0xff] %vm1181, %v1166
      %1187 = vst.msk [vmem:[#allocation3 + $0x28] sm:$0xff] %vm1181, %v1168
      %1188 = vst.msk [vmem:[#allocation3 + $0x30] sm:$0xff] %vm1181, %v1170
      %1189 = vst.msk [vmem:[#allocation3 + $0x38] sm:$0xff] %vm1181, %v1172
      %s1190 = scalar_lea.vmem %s1076, 2 [#allocation2]
      %v1191 = vld [vmem:[%s1190] ss:$2 sm:$0xff]
      %s1192 = scalar_lea.vmem %s1076, 50 [#allocation2]
      %v1193 = vld [vmem:[%s1192] ss:$2 sm:$0xff]
      %s1194 = scalar_lea.vmem %s1076, 98 [#allocation2]
      %v1195 = vld [vmem:[%s1194] ss:$2 sm:$0xff]
      %s1196 = scalar_lea.vmem %s1076, 146 [#allocation2]
      %v1197 = vld [vmem:[%s1196] ss:$2 sm:$0xff]
      %s1198 = scalar_lea.vmem %s1076, 194 [#allocation2]
      %v1199 = vld [vmem:[%s1198] ss:$2 sm:$0xff]
      %s1200 = scalar_lea.vmem %s1076, 242 [#allocation2]
      %v1201 = vld [vmem:[%s1200] ss:$2 sm:$0xff]
      %s1202 = scalar_lea.vmem %s1076, 290 [#allocation2]
      %v1203 = vld [vmem:[%s1202] ss:$2 sm:$0xff]
      %s1204 = scalar_lea.vmem %s1076, 338 [#allocation2]
      %v1205 = vld [vmem:[%s1204] ss:$2 sm:$0xff]
      %1214 = vrot.lane.b32.xlu0 %v1191, 112
      %v1215 = vpop.permute.xlu0 %1214
      %1216 = vrot.lane.b32.xlu0 %v1193, 112
      %v1217 = vpop.permute.xlu0 %1216
      %1218 = vrot.lane.b32.xlu0 %v1195, 112
      %v1219 = vpop.permute.xlu0 %1218
      %1220 = vrot.lane.b32.xlu0 %v1197, 112
      %v1221 = vpop.permute.xlu0 %1220
      %1222 = vrot.lane.b32.xlu0 %v1199, 112
      %v1223 = vpop.permute.xlu0 %1222
      %1224 = vrot.lane.b32.xlu0 %v1201, 112
      %v1225 = vpop.permute.xlu0 %1224
      %1226 = vrot.lane.b32.xlu0 %v1203, 112
      %v1227 = vpop.permute.xlu0 %1226
      %1228 = vrot.lane.b32.xlu0 %v1205, 112
      %v1229 = vpop.permute.xlu0 %1228
      %vm1238 = vcmask 982912
      %1239 = vst.msk [vmem:[#allocation3] sm:$0xff] %vm1238, %v1215
      %1240 = vst.msk [vmem:[#allocation3 + $0x8] sm:$0xff] %vm1238, %v1217
      %1241 = vst.msk [vmem:[#allocation3 + $0x10] sm:$0xff] %vm1238, %v1219
      %1242 = vst.msk [vmem:[#allocation3 + $0x18] sm:$0xff] %vm1238, %v1221
      %1243 = vst.msk [vmem:[#allocation3 + $0x20] sm:$0xff] %vm1238, %v1223
      %1244 = vst.msk [vmem:[#allocation3 + $0x28] sm:$0xff] %vm1238, %v1225
      %1245 = vst.msk [vmem:[#allocation3 + $0x30] sm:$0xff] %vm1238, %v1227
      %1246 = vst.msk [vmem:[#allocation3 + $0x38] sm:$0xff] %vm1238, %v1229
      %s1247 = scalar_lea.vmem %s1076, 3 [#allocation2]
      %v1248 = vld [vmem:[%s1247] ss:$2 sm:$0xff]
      %s1249 = scalar_lea.vmem %s1076, 51 [#allocation2]
      %v1250 = vld [vmem:[%s1249] ss:$2 sm:$0xff]
      %s1251 = scalar_lea.vmem %s1076, 99 [#allocation2]
      %v1252 = vld [vmem:[%s1251] ss:$2 sm:$0xff]
      %s1253 = scalar_lea.vmem %s1076, 147 [#allocation2]
      %v1254 = vld [vmem:[%s1253] ss:$2 sm:$0xff]
      %s1255 = scalar_lea.vmem %s1076, 195 [#allocation2]
      %v1256 = vld [vmem:[%s1255] ss:$2 sm:$0xff]
      %s1257 = scalar_lea.vmem %s1076, 243 [#allocation2]
      %v1258 = vld [vmem:[%s1257] ss:$2 sm:$0xff]
      %s1259 = scalar_lea.vmem %s1076, 291 [#allocation2]
      %v1260 = vld [vmem:[%s1259] ss:$2 sm:$0xff]
      %s1261 = scalar_lea.vmem %s1076, 339 [#allocation2]
      %v1262 = vld [vmem:[%s1261] ss:$2 sm:$0xff]
      %1271 = vrot.lane.b32.xlu0 %v1248, 120
      %v1272 = vpop.permute.xlu0 %1271
      %1273 = vrot.lane.b32.xlu0 %v1250, 120
      %v1274 = vpop.permute.xlu0 %1273
      %1275 = vrot.lane.b32.xlu0 %v1252, 120
      %v1276 = vpop.permute.xlu0 %1275
      %1277 = vrot.lane.b32.xlu0 %v1254, 120
      %v1278 = vpop.permute.xlu0 %1277
      %1279 = vrot.lane.b32.xlu0 %v1256, 120
      %v1280 = vpop.permute.xlu0 %1279
      %1281 = vrot.lane.b32.xlu0 %v1258, 120
      %v1282 = vpop.permute.xlu0 %1281
      %1283 = vrot.lane.b32.xlu0 %v1260, 120
      %v1284 = vpop.permute.xlu0 %1283
      %1285 = vrot.lane.b32.xlu0 %v1262, 120
      %v1286 = vpop.permute.xlu0 %1285
      %vm1295 = vcmask 1048512
      %1296 = vst.msk [vmem:[#allocation3] sm:$0xff] %vm1295, %v1272
      %1297 = vst.msk [vmem:[#allocation3 + $0x8] sm:$0xff] %vm1295, %v1274
      %1298 = vst.msk [vmem:[#allocation3 + $0x10] sm:$0xff] %vm1295, %v1276
      %1299 = vst.msk [vmem:[#allocation3 + $0x18] sm:$0xff] %vm1295, %v1278
      %1300 = vst.msk [vmem:[#allocation3 + $0x20] sm:$0xff] %vm1295, %v1280
      %1301 = vst.msk [vmem:[#allocation3 + $0x28] sm:$0xff] %vm1295, %v1282
      %1302 = vst.msk [vmem:[#allocation3 + $0x30] sm:$0xff] %vm1295, %v1284
      %1303 = vst.msk [vmem:[#allocation3 + $0x38] sm:$0xff] %vm1295, %v1286
      %v1304 = vld [vmem:[#allocation3] sm:$0xff]
      %v1305 = vld [vmem:[#allocation3 + $0x8] sm:$0xff]
      %v1306 = vld [vmem:[#allocation3 + $0x10] sm:$0xff]
      %v1307 = vld [vmem:[#allocation3 + $0x18] sm:$0xff]
      %v1308 = vld [vmem:[#allocation3 + $0x20] sm:$0xff]
      %v1309 = vld [vmem:[#allocation3 + $0x28] sm:$0xff]
      %v1310 = vld [vmem:[#allocation3 + $0x30] sm:$0xff]
      %v1311 = vld [vmem:[#allocation3 + $0x38] sm:$0xff]
      %v1312 = vld [vmem:[%s3] sm:$0xff]
      %v1313 = vld [vmem:[%s3 + $0x8] sm:$0xff]
      %v1314 = vld [vmem:[%s3 + $0x10] sm:$0xff]
      %v1315 = vld [vmem:[%s3 + $0x18] sm:$0xff]
      %v1316 = vld [vmem:[%s3 + $0x20] sm:$0xff]
      %v1317 = vld [vmem:[%s3 + $0x28] sm:$0xff]
      %v1318 = vld [vmem:[%s3 + $0x30] sm:$0xff]
      %v1319 = vld [vmem:[%s3 + $0x38] sm:$0xff]
      %v1320 = vld [vmem:[%s3 + $0x40] sm:$0xff]
      %v1321 = vld [vmem:[%s3 + $0x48] sm:$0xff]
      %v1322 = vld [vmem:[%s3 + $0x50] sm:$0xff]
      %v1323 = vld [vmem:[%s3 + $0x58] sm:$0xff]
      %v1324 = vld [vmem:[%s3 + $0x60] sm:$0xff]
      %v1325 = vld [vmem:[%s3 + $0x68] sm:$0xff]
      %v1326 = vld [vmem:[%s3 + $0x70] sm:$0xff]
      %v1327 = vld [vmem:[%s3 + $0x78] sm:$0xff]
      %v1328 = vld [vmem:[%s4] sm:$0x1]
      %v1330 = vlaneseq
      %v1331 = vshrl.u32 %v1330, 7
      %v1332 = vsub.s32 0, %v1331
      %v1333 = vrot.slane %v1328, %v1332
      %1335 = vmatprep.subr.mxu0 0.0
      %1336 = vmatpush1.msra.mxu0 %v1312
      %1337 = vmatprep.subr.mxu0 0.0
      %1338 = vmatpush1.msra.mxu0 %v1313
      %1339 = vmatprep.subr.mxu0 0.0
      %1340 = vmatpush1.msra.mxu0 %v1314
      %1341 = vmatprep.subr.mxu0 0.0
      %1342 = vmatpush1.msra.mxu0 %v1315
      %1343 = vmatprep.subr.mxu0 0.0
      %1344 = vmatpush1.msra.mxu0 %v1316
      %1345 = vmatprep.subr.mxu0 0.0
      %1346 = vmatpush1.msra.mxu0 %v1317
      %1347 = vmatprep.subr.mxu0 0.0
      %1348 = vmatpush1.msra.mxu0 %v1318
      %1349 = vmatprep.subr.mxu0 0.0
      %1350 = vmatpush1.msra.mxu0 %v1319
      %1351 = vmatprep.subr.mxu0 0.0
      %1352 = vmatpush1.msra.mxu0 %v1320
      %1353 = vmatprep.subr.mxu0 0.0
      %1354 = vmatpush1.msra.mxu0 %v1321
      %1355 = vmatprep.subr.mxu0 0.0
      %1356 = vmatpush1.msra.mxu0 %v1322
      %1357 = vmatprep.subr.mxu0 0.0
      %1358 = vmatpush1.msra.mxu0 %v1323
      %1359 = vmatprep.subr.mxu0 0.0
      %1360 = vmatpush1.msra.mxu0 %v1324
      %1361 = vmatprep.subr.mxu0 0.0
      %1362 = vmatpush1.msra.mxu0 %v1325
      %1363 = vmatprep.subr.mxu0 0.0
      %1364 = vmatpush1.msra.mxu0 %v1326
      %1365 = vmatprep.subr.mxu0 0.0
      %1366 = vmatpush1.msra.mxu0 %v1327
      %1367 = vmatprep.subr.mxu0 0.0
      %1368 = vmatpush1.msra.mxu0 0.0
      %1369 = vmatprep.subr.mxu0 0.0
      %1370 = vmatpush1.msra.mxu0 0.0
      %1371 = vmatprep.subr.mxu0 0.0
      %1372 = vmatpush1.msra.mxu0 0.0
      %1373 = vmatprep.subr.mxu0 0.0
      %1374 = vmatpush1.msra.mxu0 0.0
      %1375 = vmatprep.subr.mxu0 0.0
      %1376 = vmatpush1.msra.mxu0 0.0
      %1377 = vmatprep.subr.mxu0 0.0
      %1378 = vmatpush1.msra.mxu0 0.0
      %1379 = vmatprep.subr.mxu0 0.0
      %1380 = vmatpush1.msra.mxu0 0.0
      %1381 = vmatprep.subr.mxu0 0.0
      %1382 = vmatpush1.msra.mxu0 0.0
      %1383 = vmatprep.subr.mxu0 0.0
      %1384 = vmatpush1.msra.mxu0 0.0
      %1385 = vmatprep.subr.mxu0 0.0
      %1386 = vmatpush1.msra.mxu0 0.0
      %1387 = vmatprep.subr.mxu0 0.0
      %1388 = vmatpush1.msra.mxu0 0.0
      %1389 = vmatprep.subr.mxu0 0.0
      %1390 = vmatpush1.msra.mxu0 0.0
      %1391 = vmatprep.subr.mxu0 0.0
      %1392 = vmatpush1.msra.mxu0 0.0
      %1393 = vmatprep.subr.mxu0 0.0
      %1394 = vmatpush1.msra.mxu0 0.0
      %1395 = vmatprep.subr.mxu0 0.0
      %1396 = vmatpush1.msra.mxu0 0.0
      %1397 = vmatprep.subr.mxu0 0.0
      %1398 = vmatpush1.msra.mxu0 0.0
      %1399 = vmatprep.mubr.f32.mxu0 0.0
      %1400 = vmatmul.mubr.f32.gmra.mrb[0].mxu0 %v1304
      %v1401 = vpop.f32.mrb[0].mxu0
      %v1402 = vadd.f32 %v1333, %v1401
      %v1403 = vpop.f32.mrb[0].mxu0
      %1404 = vmatprep.mubr.f32.mxu0 0.0
      %1405 = vmatmul.mubr.f32.gmra.mrb[0].mxu0 %v1305
      %v1406 = vpop.f32.mrb[0].mxu0
      %v1407 = vadd.f32 %v1333, %v1406
      %v1408 = vpop.f32.mrb[0].mxu0
      %1409 = vmatprep.mubr.f32.mxu0 0.0
      %1410 = vmatmul.mubr.f32.gmra.mrb[0].mxu0 %v1306
      %v1411 = vpop.f32.mrb[0].mxu0
      %v1412 = vadd.f32 %v1333, %v1411
      %v1413 = vpop.f32.mrb[0].mxu0
      %1414 = vmatprep.mubr.f32.mxu0 0.0
      %1415 = vmatmul.mubr.f32.gmra.mrb[0].mxu0 %v1307
      %v1416 = vpop.f32.mrb[0].mxu0
      %v1417 = vadd.f32 %v1333, %v1416
      %v1418 = vpop.f32.mrb[0].mxu0
      %1419 = vmatprep.mubr.f32.mxu0 0.0
      %1420 = vmatmul.mubr.f32.gmra.mrb[0].mxu0 %v1308
      %v1421 = vpop.f32.mrb[0].mxu0
      %v1422 = vadd.f32 %v1333, %v1421
      %v1423 = vpop.f32.mrb[0].mxu0
      %1424 = vmatprep.mubr.f32.mxu0 0.0
      %1425 = vmatmul.mubr.f32.gmra.mrb[0].mxu0 %v1309
      %v1426 = vpop.f32.mrb[0].mxu0
      %v1427 = vadd.f32 %v1333, %v1426
      %v1428 = vpop.f32.mrb[0].mxu0
      %1429 = vmatprep.mubr.f32.mxu0 0.0
      %1430 = vmatmul.mubr.f32.gmra.mrb[0].mxu0 %v1310
      %v1431 = vpop.f32.mrb[0].mxu0
      %v1432 = vadd.f32 %v1333, %v1431
      %v1433 = vpop.f32.mrb[0].mxu0
      %1434 = vmatprep.mubr.f32.mxu0 0.0
      %1435 = vmatmul.mubr.f32.gmra.mrb[0].mxu0 %v1311
      %v1436 = vpop.f32.mrb[0].mxu0
      %v1437 = vadd.f32 %v1333, %v1436
      %v1438 = vpop.f32.mrb[0].mxu0
      %1439 = vdwg.mxu0
      %1440 = vst [vmem:[%s226] sm:$0xff] %v1402
      %1441 = vst [vmem:[%s226 + $0x8] sm:$0xff] %v1407
      %1442 = vst [vmem:[%s226 + $0x10] sm:$0xff] %v1412
      %1443 = vst [vmem:[%s226 + $0x18] sm:$0xff] %v1417
      %1444 = vst [vmem:[%s226 + $0x20] sm:$0xff] %v1422
      %1445 = vst [vmem:[%s226 + $0x28] sm:$0xff] %v1427
      %1446 = vst [vmem:[%s226 + $0x30] sm:$0xff] %v1432
      %1447 = vst [vmem:[%s226 + $0x38] sm:$0xff] %v1437
      %s1448 = smul.u32 8, %s16
      %p1449 = scmp.lt.s32.totalorder %s1448, 15
      %s1450 = scalar_select %p1449, %s1448, 15
      %s1451 = smul.addr %s1450, 8
      %s1452 = scalar_lea.vmem %s5, %s1451
      // Predicated region
      $region41: #{block_forward.3} parent=39 // pred_check
        %p1453 = pneg %p144
      $region42: #{block_forward.3} parent=39 // pred_check_branch
        %1455 = sbr.rel (%p1453) target = $region44
      $region43: #{block_forward.3} parent=39 // pred_region
        %s1456 = smul.u32 8, %s16
      $region44: #{block_forward.3} parent=39 // pred_fallthru
        _
    $region40: #{block_forward.3} parent=5 // pred_fallthru
      _
    %p1457 = scmp.le.s32.totalorder 2, %s11
    // Predicated region
    $region45: #{block_forward.3} parent=5 // pred_check
      %p1458 = pneg %p1457
    $region46: #{block_forward.3} parent=5 // pred_check_branch
      %1460 = sbr.rel (%p1458) target = $region48
    $region47: #{block_forward.3} parent=5 // pred_region
      %s1461 = ssub.s32 %s11, 2
      // Predicated region
      $region49: #{block_forward.3} parent=47 // pred_check
        %p1462 = pneg %p150
      $region50: #{block_forward.3} parent=47 // pred_check_branch
        %1464 = sbr.rel (%p1462) target = $region52
      $region51: #{block_forward.3} parent=47 // pred_region
        %s1465 = smul.u32 8, %s17
        %p1466 = scmp.lt.s32.totalorder %s1465, 15
        %s1467 = scalar_select %p1466, %s1465, 15
        %s1468 = smul.addr %s1467, 8
        %s1469 = scalar_lea.vmem %s5, %s1468
      $region52: #{block_forward.3} parent=47 // pred_fallthru
        _
    $region48: #{block_forward.3} parent=5 // pred_fallthru
      _
  $region6: #{block_forward.3} parent=0 // loop_footer
    %s15 = sadd.s32 1, %s11
  $region7: #{block_forward.3} parent=0 // loop_footer_branch
    %10 = sbr.rel target = $region3
  $region8: #{block_forward.3} parent=0 // loop_exit
    _

// kernel: block_forward.2
$region0: #{block_forward.2}
  #allocation0 [shape = 'u32[]', space=smem, size = 0x4, offset = 0x4, fixed_abs, tag = 'smem constant byte address 0x4 - core index']
  #allocation1 [shape = 'u32[144,128]{1,0:T(1,128)}', space=vmem, size = 0x12000, scoped, tag = 'internal scratch']
  #allocation2 [shape = 'f32[256,36]{1,0:T(8,128)}', space=vmem, size = 0x20000, scoped, tag = 'scratch operand']
  %s0 = inlined_call_operand.vmem [shape: f32[2,18,18,4], index: 0, kind: input, shape index: {}]
  %s1 = inlined_call_operand.vmem [shape: f32[36,128], index: 1, kind: input, shape index: {}]
  %s2 = inlined_call_operand.vmem [shape: f32[1,128], index: 2, kind: input, shape index: {}]
  %s3 = inlined_call_operand.vmem [shape: f32[512,128], index: 3, kind: output, shape index: {0}]
  %s4 = inlined_call_operand.vmem [shape: f32[1,128], index: 4, kind: output, shape index: {1}]
  %s5 = inlined_call_operand.vmem [shape: f32[1,128], index: 5, kind: output, shape index: {2}]
  %6 = xla_tuple %s3, %s4, %s5
  %s7 = sld [smem:[#allocation0]]
  $region65: #{block_forward.2} parent=0
    _
  %s9 = ssub.s32 1, %s7
  %s10 = scalar_select 0, %s9, %s7
  loop: start=0, step=1, limit=4
  $region2: #{block_forward.2} parent=0 // loop_pre_header
    _
  $region3: #{block_forward.2} parent=0 // loop_header
    %s12 = sphi 0, %s16
    %p13 = scmp.ge.s32.totalorder %s12, 4
    %s22 = sphi 0, %s24
    %s25 = sphi 0, %s22
    %s26 = sphi 0, %s25
    %s42 = sphi 0, %s26
    %s46 = sphi 0, %s46
    %s48 = sphi 0, %s46
    %s49 = sphi 0, %s48
    %s63 = sphi 0, %s49
    %s67 = sphi 0, %s67
    %s69 = sphi 0, %s67
    %s70 = sphi 0, %s69
    %s84 = sphi 0, %s70
    %s90 = sphi 0, %s92
    %s93 = sphi 0, %s90
    %s94 = sphi 0, %s93
    %s110 = sphi 0, %s94
    %s114 = sphi 0, %s114
    %s116 = sphi 0, %s114
    %s117 = sphi 0, %s116
    %s131 = sphi 0, %s117
    %s135 = sphi 0, %s135
    %s137 = sphi 0, %s135
    %s138 = sphi 0, %s137
    %s152 = sphi 0, %s138
  $region4: #{block_forward.2} parent=0 // loop_header_branch
    %15 = sbr.rel (%p13) target = $region8
  $region5: #{block_forward.2} parent=0 // loop_body
    %s17 = ssub.s32 %s12, 1
    %s18 = ssub.s32 %s12, 2
    %s19 = sadd.s32 %s12, 1
    %s20 = ssub.s32 %s12, %s19
    %p21 = scmp.eq.s32.totalorder %s20, 0
    %s23 = sadd.s32 %s22, 1
    %s24 = scalar_select %p21, %s22, %s23
    %p27 = pneg %p21
    %p28 = scmp.eq.s32.totalorder %s12, 1
    %p29 = por %p27, %p28
    %p30 = scmp.ne.s32.totalorder %s22, %s25
    %p31 = scmp.eq.s32.totalorder %s12, 0
    %p32 = por %p30, %p31
    %p33 = scmp.ne.s32.totalorder %s22, %s25
    %p34 = scmp.eq.s32.totalorder %s17, 1
    %p35 = por %p33, %p34
    %p36 = scmp.ne.s32.totalorder %s25, %s26
    %p37 = scmp.eq.s32.totalorder %s17, 0
    %p38 = por %p36, %p37
    %p39 = scmp.ne.s32.totalorder %s25, %s26
    %p40 = scmp.eq.s32.totalorder %s18, 1
    %p41 = por %p39, %p40
    %p43 = scmp.ne.s32.totalorder %s26, %s42
    %p44 = scmp.eq.s32.totalorder %s18, 0
    %p45 = por %p43, %p44
    %s47 = sadd.s32 %s46, 1
    %p50 = scmp.eq.s32.totalorder %s12, 1
    %p51 = scmp.ne.s32.totalorder %s46, %s48
    %p52 = scmp.eq.s32.totalorder %s12, 0
    %p53 = por %p51, %p52
    %p54 = scmp.ne.s32.totalorder %s46, %s48
    %p55 = scmp.eq.s32.totalorder %s17, 1
    %p56 = por %p54, %p55
    %p57 = scmp.ne.s32.totalorder %s48, %s49
    %p58 = scmp.eq.s32.totalorder %s17, 0
    %p59 = por %p57, %p58
    %p60 = scmp.ne.s32.totalorder %s48, %s49
    %p61 = scmp.eq.s32.totalorder %s18, 1
    %p62 = por %p60, %p61
    %p64 = scmp.ne.s32.totalorder %s49, %s63
    %p65 = scmp.eq.s32.totalorder %s18, 0
    %p66 = por %p64, %p65
    %s68 = sadd.s32 %s67, 1
    %p71 = scmp.eq.s32.totalorder %s12, 1
    %p72 = scmp.ne.s32.totalorder %s67, %s69
    %p73 = scmp.eq.s32.totalorder %s12, 0
    %p74 = por %p72, %p73
    %p75 = scmp.ne.s32.totalorder %s67, %s69
    %p76 = scmp.eq.s32.totalorder %s17, 1
    %p77 = por %p75, %p76
    %p78 = scmp.ne.s32.totalorder %s69, %s70
    %p79 = scmp.eq.s32.totalorder %s17, 0
    %p80 = por %p78, %p79
    %p81 = scmp.ne.s32.totalorder %s69, %s70
    %p82 = scmp.eq.s32.totalorder %s18, 1
    %p83 = por %p81, %p82
    %p85 = scmp.ne.s32.totalorder %s70, %s84
    %p86 = scmp.eq.s32.totalorder %s18, 0
    %p87 = por %p85, %p86
    %s88 = ssub.s32 %s12, %s19
    %p89 = scmp.eq.s32.totalorder %s88, 0
    %s91 = sadd.s32 %s90, 1
    %s92 = scalar_select %p89, %s90, %s91
    %p95 = pneg %p89
    %p96 = scmp.eq.s32.totalorder %s12, 1
    %p97 = por %p95, %p96
    %p98 = scmp.ne.s32.totalorder %s90, %s93
    %p99 = scmp.eq.s32.totalorder %s12, 0
    %p100 = por %p98, %p99
    %p101 = scmp.ne.s32.totalorder %s90, %s93
    %p102 = scmp.eq.s32.totalorder %s17, 1
    %p103 = por %p101, %p102
    %p104 = scmp.ne.s32.totalorder %s93, %s94
    %p105 = scmp.eq.s32.totalorder %s17, 0
    %p106 = por %p104, %p105
    %p107 = scmp.ne.s32.totalorder %s93, %s94
    %p108 = scmp.eq.s32.totalorder %s18, 1
    %p109 = por %p107, %p108
    %p111 = scmp.ne.s32.totalorder %s94, %s110
    %p112 = scmp.eq.s32.totalorder %s18, 0
    %p113 = por %p111, %p112
    %s115 = sadd.s32 %s114, 1
    %p118 = scmp.eq.s32.totalorder %s12, 1
    %p119 = scmp.ne.s32.totalorder %s114, %s116
    %p120 = scmp.eq.s32.totalorder %s12, 0
    %p121 = por %p119, %p120
    %p122 = scmp.ne.s32.totalorder %s114, %s116
    %p123 = scmp.eq.s32.totalorder %s17, 1
    %p124 = por %p122, %p123
    %p125 = scmp.ne.s32.totalorder %s116, %s117
    %p126 = scmp.eq.s32.totalorder %s17, 0
    %p127 = por %p125, %p126
    %p128 = scmp.ne.s32.totalorder %s116, %s117
    %p129 = scmp.eq.s32.totalorder %s18, 1
    %p130 = por %p128, %p129
    %p132 = scmp.ne.s32.totalorder %s117, %s131
    %p133 = scmp.eq.s32.totalorder %s18, 0
    %p134 = por %p132, %p133
    %s136 = sadd.s32 %s135, 1
    %p139 = scmp.eq.s32.totalorder %s12, 1
    %p140 = scmp.ne.s32.totalorder %s135, %s137
    %p141 = scmp.eq.s32.totalorder %s12, 0
    %p142 = por %p140, %p141
    %p143 = scmp.ne.s32.totalorder %s135, %s137
    %p144 = scmp.eq.s32.totalorder %s17, 1
    %p145 = por %p143, %p144
    %p146 = scmp.ne.s32.totalorder %s137, %s138
    %p147 = scmp.eq.s32.totalorder %s17, 0
    %p148 = por %p146, %p147
    %p149 = scmp.ne.s32.totalorder %s137, %s138
    %p150 = scmp.eq.s32.totalorder %s18, 1
    %p151 = por %p149, %p150
    %p153 = scmp.ne.s32.totalorder %s138, %s152
    %p154 = scmp.eq.s32.totalorder %s18, 0
    %p155 = por %p153, %p154
    %p156 = scmp.le.s32.totalorder 1, %s12
    %p157 = scmp.lt.s32.totalorder %s12, 3
    %p158 = pnand %p156, %p157
    %p159 = pneg %p158
    // Predicated region
    $region9: #{block_forward.2} parent=5 // pred_check
      _
    $region10: #{block_forward.2} parent=5 // pred_check_branch
      %161 = sbr.rel (%p158) target = $region12
    $region11: #{block_forward.2} parent=5 // pred_region
      %s162 = ssub.s32 %s12, 1
      // Predicated region
      $region13: #{block_forward.2} parent=11 // pred_check
        %p163 = pneg %p59
      $region14: #{block_forward.2} parent=11 // pred_check_branch
        %165 = sbr.rel (%p163) target = $region16
      $region15: #{block_forward.2} parent=11 // pred_region
        _
      $region16: #{block_forward.2} parent=11 // pred_fallthru
        _
      // Predicated region
      $region17: #{block_forward.2} parent=11 // pred_check
        %p166 = pneg %p80
      $region18: #{block_forward.2} parent=11 // pred_check_branch
        %168 = sbr.rel (%p166) target = $region20
      $region19: #{block_forward.2} parent=11 // pred_region
        _
      $region20: #{block_forward.2} parent=11 // pred_fallthru
        _
    $region12: #{block_forward.2} parent=5 // pred_fallthru
      _
    %p169 = scmp.lt.s32.totalorder %s12, 2
    // Predicated region
    $region21: #{block_forward.2} parent=5 // pred_check
      %p170 = pneg %p169
    $region22: #{block_forward.2} parent=5 // pred_check_branch
      %172 = sbr.rel (%p170) target = $region24
    $region23: #{block_forward.2} parent=5 // pred_region
      // Predicated region
      $region25: #{block_forward.2} parent=23 // pred_check
        %p173 = pneg %p32
      $region26: #{block_forward.2} parent=23 // pred_check_branch
        %175 = sbr.rel (%p173) target = $region28
      $region27: #{block_forward.2} parent=23 // pred_region
        %p176 = scmp.lt.s32.totalorder %s12, 1
        %s177 = scalar_select %p176, %s12, 1
        %s178 = smul.addr %s177, 54
        %s179 = smul.addr %s178, 8
        %s180 = scalar_lea.vmem %s0, %s179
      $region28: #{block_forward.2} parent=23 // pred_fallthru
        _
    $region24: #{block_forward.2} parent=5 // pred_fallthru
      _
    %p181 = scmp.le.s32.totalorder 1, %s12
    %p182 = scmp.lt.s32.totalorder %s12, 3
    %p183 = pnand %p181, %p182
    %p184 = pneg %p183
    // Predicated region
    $region29: #{block_forward.2} parent=5 // pred_check
      _
    $region30: #{block_forward.2} parent=5 // pred_check_branch
      %186 = sbr.rel (%p183) target = $region32
    $region31: #{block_forward.2} parent=5 // pred_region
      %s187 = ssub.s32 %s12, 1
      %p188 = scmp.lt.s32.totalorder %s17, 1
      %s189 = scalar_select %p188, %s17, 1
      %s190 = smul.addr %s189, 54
      %s191 = smul.addr %s190, 8
      %s192 = scalar_lea.vmem %s0, %s191
      %p193 = pneg %p38
      %p194 = pneg %p35
      %p195 = pneg %p59
      %p196 = pneg %p56
      %p197 = pneg %p80
      %p198 = pneg %p77
      %p199 = pneg %p106
      %p200 = pneg %p103
      %s201 = smul.u32 32, %s17
      %p202 = scmp.lt.s32.totalorder %s201, 63
      %s203 = scalar_select %p202, %s201, 63
      %s204 = smul.addr %s203, 8
      %s205 = scalar_lea.vmem %s3, %s204
      %p206 = pneg %p127
      %p207 = pneg %p124
      %p208 = pneg %p148
      %p209 = pneg %p145
      %p210 = scmp.lt.s32.totalorder %s17, 1
      %s211 = scalar_select %p210, %s17, 1
      %s212 = smul.addr %s211, 54
      %s213 = smul.addr %s212, 8
      %s214 = scalar_lea.vmem %s0, %s213
      %s215 = smul.u32 32, %s17
      %p216 = scmp.lt.s32.totalorder %s215, 63
      %s217 = scalar_select %p216, %s215, 63
      %s218 = smul.addr %s217, 8
      %s219 = scalar_lea.vmem %s3, %s218
      %s220 = smul.u32 32, %s17
      %v221 = vld [vmem:[%s214] sm:$0xff]
      %v222 = vld [vmem:[%s214 + $0x8] sm:$0xff]
      %v223 = vld [vmem:[%s214 + $0x18] sm:$0xff]
      %v224 = vld [vmem:[%s214 + $0x20] sm:$0xff]
      %v225 = vld [vmem:[%s214 + $0x30] sm:$0xff]
      %v226 = vld [vmem:[%s214 + $0x38] sm:$0xff]
      %v227 = vld [vmem:[%s214 + $0x48] sm:$0xff]
      %v228 = vld [vmem:[%s214 + $0x50] sm:$0xff]
      %v229 = vld [vmem:[%s214 + $0x60] sm:$0xff]
      %v230 = vld [vmem:[%s214 + $0x68] sm:$0xff]
      %v231 = vld [vmem:[%s214 + $0x78] sm:$0xff]
      %v232 = vld [vmem:[%s214 + $0x80] sm:$0xff]
      %v233 = vld [vmem:[%s214 + $0x90] sm:$0xff]
      %v234 = vld [vmem:[%s214 + $0x98] sm:$0xff]
      %v235 = vld [vmem:[%s214 + $0xa8] sm:$0xff]
      %v236 = vld [vmem:[%s214 + $0xb0] sm:$0xff]
      %v237 = vld [vmem:[%s214 + $0xc0] sm:$0xff]
      %v238 = vld [vmem:[%s214 + $0xc8] sm:$0xff]
      %v239 = vld [vmem:[%s214 + $0xd8] sm:$0xff]
      %v240 = vld [vmem:[%s214 + $0xe0] sm:$0xff]
      %v241 = vld [vmem:[%s214 + $0xf0] sm:$0xff]
      %v242 = vld [vmem:[%s214 + $0xf8] sm:$0xff]
      %v243 = vld [vmem:[%s214 + $0x108] sm:$0xff]
      %v244 = vld [vmem:[%s214 + $0x110] sm:$0xff]
      %v245 = vld [vmem:[%s214 + $0x120] sm:$0xff]
      %v246 = vld [vmem:[%s214 + $0x128] sm:$0xff]
      %v247 = vld [vmem:[%s214 + $0x138] sm:$0xff]
      %v248 = vld [vmem:[%s214 + $0x140] sm:$0xff]
      %v249 = vld [vmem:[%s214 + $0x150] sm:$0xff]
      %v250 = vld [vmem:[%s214 + $0x158] sm:$0xff]
      %v251 = vld [vmem:[%s214 + $0x168] sm:$0xff]
      %v252 = vld [vmem:[%s214 + $0x170] sm:$0xff]
      %vm253 = vcmask 31744
      %254 = vst.msk [vmem:[#allocation2] sm:$0xff] %vm253, %v221
      %255 = vst.msk [vmem:[#allocation2 + $0x8] sm:$0xff] %vm253, %v222
      %256 = vst.msk [vmem:[#allocation2 + $0x10] sm:$0xff] %vm253, %v223
      %257 = vst.msk [vmem:[#allocation2 + $0x18] sm:$0xff] %vm253, %v224
      %258 = vst.msk [vmem:[#allocation2 + $0x20] sm:$0xff] %vm253, %v225
      %259 = vst.msk [vmem:[#allocation2 + $0x28] sm:$0xff] %vm253, %v226
      %260 = vst.msk [vmem:[#allocation2 + $0x30] sm:$0xff] %vm253, %v227
      %261 = vst.msk [vmem:[#allocation2 + $0x38] sm:$0xff] %vm253, %v228
      %262 = vst.msk [vmem:[#allocation2 + $0x40] sm:$0xff] %vm253, %v229
      %263 = vst.msk [vmem:[#allocation2 + $0x48] sm:$0xff] %vm253, %v230
      %264 = vst.msk [vmem:[#allocation2 + $0x50] sm:$0xff] %vm253, %v231
      %265 = vst.msk [vmem:[#allocation2 + $0x58] sm:$0xff] %vm253, %v232
      %266 = vst.msk [vmem:[#allocation2 + $0x60] sm:$0xff] %vm253, %v233
      %267 = vst.msk [vmem:[#allocation2 + $0x68] sm:$0xff] %vm253, %v234
      %268 = vst.msk [vmem:[#allocation2 + $0x70] sm:$0xff] %vm253, %v235
      %269 = vst.msk [vmem:[#allocation2 + $0x78] sm:$0xff] %vm253, %v236
      %270 = vst.msk [vmem:[#allocation2 + $0x80] sm:$0xff] %vm253, %v237
      %271 = vst.msk [vmem:[#allocation2 + $0x88] sm:$0xff] %vm253, %v238
      %272 = vst.msk [vmem:[#allocation2 + $0x90] sm:$0xff] %vm253, %v239
      %273 = vst.msk [vmem:[#allocation2 + $0x98] sm:$0xff] %vm253, %v240
      %274 = vst.msk [vmem:[#allocation2 + $0xa0] sm:$0xff] %vm253, %v241
      %275 = vst.msk [vmem:[#allocation2 + $0xa8] sm:$0xff] %vm253, %v242
      %276 = vst.msk [vmem:[#allocation2 + $0xb0] sm:$0xff] %vm253, %v243
      %277 = vst.msk [vmem:[#allocation2 + $0xb8] sm:$0xff] %vm253, %v244
      %278 = vst.msk [vmem:[#allocation2 + $0xc0] sm:$0xff] %vm253, %v245
      %279 = vst.msk [vmem:[#allocation2 + $0xc8] sm:$0xff] %vm253, %v246
      %280 = vst.msk [vmem:[#allocation2 + $0xd0] sm:$0xff] %vm253, %v247
      %281 = vst.msk [vmem:[#allocation2 + $0xd8] sm:$0xff] %vm253, %v248
      %282 = vst.msk [vmem:[#allocation2 + $0xe0] sm:$0xff] %vm253, %v249
      %283 = vst.msk [vmem:[#allocation2 + $0xe8] sm:$0xff] %vm253, %v250
      %284 = vst.msk [vmem:[#allocation2 + $0xf0] sm:$0xff] %vm253, %v251
      %285 = vst.msk [vmem:[#allocation2 + $0xf8] sm:$0xff] %vm253, %v252
      %v286 = vld [vmem:[%s214 + $0x1] sm:$0xff]
      %v287 = vld [vmem:[%s214 + $0x9] sm:$0xff]
      %v288 = vld [vmem:[%s214 + $0x19] sm:$0xff]
      %v289 = vld [vmem:[%s214 + $0x21] sm:$0xff]
      %v290 = vld [vmem:[%s214 + $0x31] sm:$0xff]
      %v291 = vld [vmem:[%s214 + $0x39] sm:$0xff]
      %v292 = vld [vmem:[%s214 + $0x49] sm:$0xff]
      %v293 = vld [vmem:[%s214 + $0x51] sm:$0xff]
      %v294 = vld [vmem:[%s214 + $0x61] sm:$0xff]
      %v295 = vld [vmem:[%s214 + $0x69] sm:$0xff]
      %v296 = vld [vmem:[%s214 + $0x79] sm:$0xff]
      %v297 = vld [vmem:[%s214 + $0x81] sm:$0xff]
      %v298 = vld [vmem:[%s214 + $0x91] sm:$0xff]
      %v299 = vld [vmem:[%s214 + $0x99] sm:$0xff]
      %v300 = vld [vmem:[%s214 + $0xa9] sm:$0xff]
      %v301 = vld [vmem:[%s214 + $0xb1] sm:$0xff]
      %v302 = vld [vmem:[%s214 + $0xc1] sm:$0xff]
      %v303 = vld [vmem:[%s214 + $0xc9] sm:$0xff]
      %v304 = vld [vmem:[%s214 + $0xd9] sm:$0xff]
      %v305 = vld [vmem:[%s214 + $0xe1] sm:$0xff]
      %v306 = vld [vmem:[%s214 + $0xf1] sm:$0xff]
      %v307 = vld [vmem:[%s214 + $0xf9] sm:$0xff]
      %v308 = vld [vmem:[%s214 + $0x109] sm:$0xff]
      %v309 = vld [vmem:[%s214 + $0x111] sm:$0xff]
      %v310 = vld [vmem:[%s214 + $0x121] sm:$0xff]
      %v311 = vld [vmem:[%s214 + $0x129] sm:$0xff]
      %v312 = vld [vmem:[%s214 + $0x139] sm:$0xff]
      %v313 = vld [vmem:[%s214 + $0x141] sm:$0xff]
      %v314 = vld [vmem:[%s214 + $0x151] sm:$0xff]
      %v315 = vld [vmem:[%s214 + $0x159] sm:$0xff]
      %v316 = vld [vmem:[%s214 + $0x169] sm:$0xff]
      %v317 = vld [vmem:[%s214 + $0x171] sm:$0xff]
      %350 = vrot.lane.b32.xlu0 %v286, 4
      %v351 = vpop.permute.xlu0 %350
      %352 = vrot.lane.b32.xlu0 %v287, 4
      %v353 = vpop.permute.xlu0 %352
      %354 = vrot.lane.b32.xlu0 %v288, 4
      %v355 = vpop.permute.xlu0 %354
      %356 = vrot.lane.b32.xlu0 %v289, 4
      %v357 = vpop.permute.xlu0 %356
      %358 = vrot.lane.b32.xlu0 %v290, 4
      %v359 = vpop.permute.xlu0 %358
      %360 = vrot.lane.b32.xlu0 %v291, 4
      %v361 = vpop.permute.xlu0 %360
      %362 = vrot.lane.b32.xlu0 %v292, 4
      %v363 = vpop.permute.xlu0 %362
      %364 = vrot.lane.b32.xlu0 %v293, 4
      %v365 = vpop.permute.xlu0 %364
      %366 = vrot.lane.b32.xlu0 %v294, 4
      %v367 = vpop.permute.xlu0 %366
      %368 = vrot.lane.b32.xlu0 %v295, 4
      %v369 = vpop.permute.xlu0 %368
      %370 = vrot.lane.b32.xlu0 %v296, 4
      %v371 = vpop.permute.xlu0 %370
      %372 = vrot.lane.b32.xlu0 %v297, 4
      %v373 = vpop.permute.xlu0 %372
      %374 = vrot.lane.b32.xlu0 %v298, 4
      %v375 = vpop.permute.xlu0 %374
      %376 = vrot.lane.b32.xlu0 %v299, 4
      %v377 = vpop.permute.xlu0 %376
      %378 = vrot.lane.b32.xlu0 %v300, 4
      %v379 = vpop.permute.xlu0 %378
      %380 = vrot.lane.b32.xlu0 %v301, 4
      %v381 = vpop.permute.xlu0 %380
      %382 = vrot.lane.b32.xlu0 %v302, 4
      %v383 = vpop.permute.xlu0 %382
      %384 = vrot.lane.b32.xlu0 %v303, 4
      %v385 = vpop.permute.xlu0 %384
      %386 = vrot.lane.b32.xlu0 %v304, 4
      %v387 = vpop.permute.xlu0 %386
      %388 = vrot.lane.b32.xlu0 %v305, 4
      %v389 = vpop.permute.xlu0 %388
      %390 = vrot.lane.b32.xlu0 %v306, 4
      %v391 = vpop.permute.xlu0 %390
      %392 = vrot.lane.b32.xlu0 %v307, 4
      %v393 = vpop.permute.xlu0 %392
      %394 = vrot.lane.b32.xlu0 %v308, 4
      %v395 = vpop.permute.xlu0 %394
      %396 = vrot.lane.b32.xlu0 %v309, 4
      %v397 = vpop.permute.xlu0 %396
      %398 = vrot.lane.b32.xlu0 %v310, 4
      %v399 = vpop.permute.xlu0 %398
      %400 = vrot.lane.b32.xlu0 %v311, 4
      %v401 = vpop.permute.xlu0 %400
      %402 = vrot.lane.b32.xlu0 %v312, 4
      %v403 = vpop.permute.xlu0 %402
      %404 = vrot.lane.b32.xlu0 %v313, 4
      %v405 = vpop.permute.xlu0 %404
      %406 = vrot.lane.b32.xlu0 %v314, 4
      %v407 = vpop.permute.xlu0 %406
      %408 = vrot.lane.b32.xlu0 %v315, 4
      %v409 = vpop.permute.xlu0 %408
      %410 = vrot.lane.b32.xlu0 %v316, 4
      %v411 = vpop.permute.xlu0 %410
      %412 = vrot.lane.b32.xlu0 %v317, 4
      %v413 = vpop.permute.xlu0 %412
      %vm446 = vcmask 64544
      %447 = vst.msk [vmem:[#allocation2] sm:$0xff] %vm446, %v351
      %448 = vst.msk [vmem:[#allocation2 + $0x8] sm:$0xff] %vm446, %v353
      %449 = vst.msk [vmem:[#allocation2 + $0x10] sm:$0xff] %vm446, %v355
      %450 = vst.msk [vmem:[#allocation2 + $0x18] sm:$0xff] %vm446, %v357
      %451 = vst.msk [vmem:[#allocation2 + $0x20] sm:$0xff] %vm446, %v359
      %452 = vst.msk [vmem:[#allocation2 + $0x28] sm:$0xff] %vm446, %v361
      %453 = vst.msk [vmem:[#allocation2 + $0x30] sm:$0xff] %vm446, %v363
      %454 = vst.msk [vmem:[#allocation2 + $0x38] sm:$0xff] %vm446, %v365
      %455 = vst.msk [vmem:[#allocation2 + $0x40] sm:$0xff] %vm446, %v367
      %456 = vst.msk [vmem:[#allocation2 + $0x48] sm:$0xff] %vm446, %v369
      %457 = vst.msk [vmem:[#allocation2 + $0x50] sm:$0xff] %vm446, %v371
      %458 = vst.msk [vmem:[#allocation2 + $0x58] sm:$0xff] %vm446, %v373
      %459 = vst.msk [vmem:[#allocation2 + $0x60] sm:$0xff] %vm446, %v375
      %460 = vst.msk [vmem:[#allocation2 + $0x68] sm:$0xff] %vm446, %v377
      %461 = vst.msk [vmem:[#allocation2 + $0x70] sm:$0xff] %vm446, %v379
      %462 = vst.msk [vmem:[#allocation2 + $0x78] sm:$0xff] %vm446, %v381
      %463 = vst.msk [vmem:[#allocation2 + $0x80] sm:$0xff] %vm446, %v383
      %464 = vst.msk [vmem:[#allocation2 + $0x88] sm:$0xff] %vm446, %v385
      %465 = vst.msk [vmem:[#allocation2 + $0x90] sm:$0xff] %vm446, %v387
      %466 = vst.msk [vmem:[#allocation2 + $0x98] sm:$0xff] %vm446, %v389
      %467 = vst.msk [vmem:[#allocation2 + $0xa0] sm:$0xff] %vm446, %v391
      %468 = vst.msk [vmem:[#allocation2 + $0xa8] sm:$0xff] %vm446, %v393
      %469 = vst.msk [vmem:[#allocation2 + $0xb0] sm:$0xff] %vm446, %v395
      %470 = vst.msk [vmem:[#allocation2 + $0xb8] sm:$0xff] %vm446, %v397
      %471 = vst.msk [vmem:[#allocation2 + $0xc0] sm:$0xff] %vm446, %v399
      %472 = vst.msk [vmem:[#allocation2 + $0xc8] sm:$0xff] %vm446, %v401
      %473 = vst.msk [vmem:[#allocation2 + $0xd0] sm:$0xff] %vm446, %v403
      %474 = vst.msk [vmem:[#allocation2 + $0xd8] sm:$0xff] %vm446, %v405
      %475 = vst.msk [vmem:[#allocation2 + $0xe0] sm:$0xff] %vm446, %v407
      %476 = vst.msk [vmem:[#allocation2 + $0xe8] sm:$0xff] %vm446, %v409
      %477 = vst.msk [vmem:[#allocation2 + $0xf0] sm:$0xff] %vm446, %v411
      %478 = vst.msk [vmem:[#allocation2 + $0xf8] sm:$0xff] %vm446, %v413
      %v479 = vld [vmem:[%s214 + $0x2] sm:$0xff]
      %v480 = vld [vmem:[%s214 + $0xa] sm:$0xff]
      %v481 = vld [vmem:[%s214 + $0x1a] sm:$0xff]
      %v482 = vld [vmem:[%s214 + $0x22] sm:$0xff]
      %v483 = vld [vmem:[%s214 + $0x32] sm:$0xff]
      %v484 = vld [vmem:[%s214 + $0x3a] sm:$0xff]
      %v485 = vld [vmem:[%s214 + $0x4a] sm:$0xff]
      %v486 = vld [vmem:[%s214 + $0x52] sm:$0xff]
      %v487 = vld [vmem:[%s214 + $0x62] sm:$0xff]
      %v488 = vld [vmem:[%s214 + $0x6a] sm:$0xff]
      %v489 = vld [vmem:[%s214 + $0x7a] sm:$0xff]
      %v490 = vld [vmem:[%s214 + $0x82] sm:$0xff]
      %v491 = vld [vmem:[%s214 + $0x92] sm:$0xff]
      %v492 = vld [vmem:[%s214 + $0x9a] sm:$0xff]
      %v493 = vld [vmem:[%s214 + $0xaa] sm:$0xff]
      %v494 = vld [vmem:[%s214 + $0xb2] sm:$0xff]
      %v495 = vld [vmem:[%s214 + $0xc2] sm:$0xff]
      %v496 = vld [vmem:[%s214 + $0xca] sm:$0xff]
      %v497 = vld [vmem:[%s214 + $0xda] sm:$0xff]
      %v498 = vld [vmem:[%s214 + $0xe2] sm:$0xff]
      %v499 = vld [vmem:[%s214 + $0xf2] sm:$0xff]
      %v500 = vld [vmem:[%s214 + $0xfa] sm:$0xff]
      %v501 = vld [vmem:[%s214 + $0x10a] sm:$0xff]
      %v502 = vld [vmem:[%s214 + $0x112] sm:$0xff]
      %v503 = vld [vmem:[%s214 + $0x122] sm:$0xff]
      %v504 = vld [vmem:[%s214 + $0x12a] sm:$0xff]
      %v505 = vld [vmem:[%s214 + $0x13a] sm:$0xff]
      %v506 = vld [vmem:[%s214 + $0x142] sm:$0xff]
      %v507 = vld [vmem:[%s214 + $0x152] sm:$0xff]
      %v508 = vld [vmem:[%s214 + $0x15a] sm:$0xff]
      %v509 = vld [vmem:[%s214 + $0x16a] sm:$0xff]
      %v510 = vld [vmem:[%s214 + $0x172] sm:$0xff]
      %543 = vrot.lane.b32.xlu0 %v479, 8
      %v544 = vpop.permute.xlu0 %543
      %545 = vrot.lane.b32.xlu0 %v480, 8
      %v546 = vpop.permute.xlu0 %545
      %547 = vrot.lane.b32.xlu0 %v481, 8
      %v548 = vpop.permute.xlu0 %547
      %549 = vrot.lane.b32.xlu0 %v482, 8
      %v550 = vpop.permute.xlu0 %549
      %551 = vrot.lane.b32.xlu0 %v483, 8
      %v552 = vpop.permute.xlu0 %551
      %553 = vrot.lane.b32.xlu0 %v484, 8
      %v554 = vpop.permute.xlu0 %553
      %555 = vrot.lane.b32.xlu0 %v485, 8
      %v556 = vpop.permute.xlu0 %555
      %557 = vrot.lane.b32.xlu0 %v486, 8
      %v558 = vpop.permute.xlu0 %557
      %559 = vrot.lane.b32.xlu0 %v487, 8
      %v560 = vpop.permute.xlu0 %559
      %561 = vrot.lane.b32.xlu0 %v488, 8
      %v562 = vpop.permute.xlu0 %561
      %563 = vrot.lane.b32.xlu0 %v489, 8
      %v564 = vpop.permute.xlu0 %563
      %565 = vrot.lane.b32.xlu0 %v490, 8
      %v566 = vpop.permute.xlu0 %565
      %567 = vrot.lane.b32.xlu0 %v491, 8
      %v568 = vpop.permute.xlu0 %567
      %569 = vrot.lane.b32.xlu0 %v492, 8
      %v570 = vpop.permute.xlu0 %569
      %571 = vrot.lane.b32.xlu0 %v493, 8
      %v572 = vpop.permute.xlu0 %571
      %573 = vrot.lane.b32.xlu0 %v494, 8
      %v574 = vpop.permute.xlu0 %573
      %575 = vrot.lane.b32.xlu0 %v495, 8
      %v576 = vpop.permute.xlu0 %575
      %577 = vrot.lane.b32.xlu0 %v496, 8
      %v578 = vpop.permute.xlu0 %577
      %579 = vrot.lane.b32.xlu0 %v497, 8
      %v580 = vpop.permute.xlu0 %579
      %581 = vrot.lane.b32.xlu0 %v498, 8
      %v582 = vpop.permute.xlu0 %581
      %583 = vrot.lane.b32.xlu0 %v499, 8
      %v584 = vpop.permute.xlu0 %583
      %585 = vrot.lane.b32.xlu0 %v500, 8
      %v586 = vpop.permute.xlu0 %585
      %587 = vrot.lane.b32.xlu0 %v501, 8
      %v588 = vpop.permute.xlu0 %587
      %589 = vrot.lane.b32.xlu0 %v502, 8
      %v590 = vpop.permute.xlu0 %589
      %591 = vrot.lane.b32.xlu0 %v503, 8
      %v592 = vpop.permute.xlu0 %591
      %593 = vrot.lane.b32.xlu0 %v504, 8
      %v594 = vpop.permute.xlu0 %593
      %595 = vrot.lane.b32.xlu0 %v505, 8
      %v596 = vpop.permute.xlu0 %595
      %597 = vrot.lane.b32.xlu0 %v506, 8
      %v598 = vpop.permute.xlu0 %597
      %599 = vrot.lane.b32.xlu0 %v507, 8
      %v600 = vpop.permute.xlu0 %599
      %601 = vrot.lane.b32.xlu0 %v508, 8
      %v602 = vpop.permute.xlu0 %601
      %603 = vrot.lane.b32.xlu0 %v509, 8
      %v604 = vpop.permute.xlu0 %603
      %605 = vrot.lane.b32.xlu0 %v510, 8
      %v606 = vpop.permute.xlu0 %605
      %vm639 = vcmask 97344
      %640 = vst.msk [vmem:[#allocation2] sm:$0xff] %vm639, %v544
      %641 = vst.msk [vmem:[#allocation2 + $0x8] sm:$0xff] %vm639, %v546
      %642 = vst.msk [vmem:[#allocation2 + $0x10] sm:$0xff] %vm639, %v548
      %643 = vst.msk [vmem:[#allocation2 + $0x18] sm:$0xff] %vm639, %v550
      %644 = vst.msk [vmem:[#allocation2 + $0x20] sm:$0xff] %vm639, %v552
      %645 = vst.msk [vmem:[#allocation2 + $0x28] sm:$0xff] %vm639, %v554
      %646 = vst.msk [vmem:[#allocation2 + $0x30] sm:$0xff] %vm639, %v556
      %647 = vst.msk [vmem:[#allocation2 + $0x38] sm:$0xff] %vm639, %v558
      %648 = vst.msk [vmem:[#allocation2 + $0x40] sm:$0xff] %vm639, %v560
      %649 = vst.msk [vmem:[#allocation2 + $0x48] sm:$0xff] %vm639, %v562
      %650 = vst.msk [vmem:[#allocation2 + $0x50] sm:$0xff] %vm639, %v564
      %651 = vst.msk [vmem:[#allocation2 + $0x58] sm:$0xff] %vm639, %v566
      %652 = vst.msk [vmem:[#allocation2 + $0x60] sm:$0xff] %vm639, %v568
      %653 = vst.msk [vmem:[#allocation2 + $0x68] sm:$0xff] %vm639, %v570
      %654 = vst.msk [vmem:[#allocation2 + $0x70] sm:$0xff] %vm639, %v572
      %655 = vst.msk [vmem:[#allocation2 + $0x78] sm:$0xff] %vm639, %v574
      %656 = vst.msk [vmem:[#allocation2 + $0x80] sm:$0xff] %vm639, %v576
      %657 = vst.msk [vmem:[#allocation2 + $0x88] sm:$0xff] %vm639, %v578
      %658 = vst.msk [vmem:[#allocation2 + $0x90] sm:$0xff] %vm639, %v580
      %659 = vst.msk [vmem:[#allocation2 + $0x98] sm:$0xff] %vm639, %v582
      %660 = vst.msk [vmem:[#allocation2 + $0xa0] sm:$0xff] %vm639, %v584
      %661 = vst.msk [vmem:[#allocation2 + $0xa8] sm:$0xff] %vm639, %v586
      %662 = vst.msk [vmem:[#allocation2 + $0xb0] sm:$0xff] %vm639, %v588
      %663 = vst.msk [vmem:[#allocation2 + $0xb8] sm:$0xff] %vm639, %v590
      %664 = vst.msk [vmem:[#allocation2 + $0xc0] sm:$0xff] %vm639, %v592
      %665 = vst.msk [vmem:[#allocation2 + $0xc8] sm:$0xff] %vm639, %v594
      %666 = vst.msk [vmem:[#allocation2 + $0xd0] sm:$0xff] %vm639, %v596
      %667 = vst.msk [vmem:[#allocation2 + $0xd8] sm:$0xff] %vm639, %v598
      %668 = vst.msk [vmem:[#allocation2 + $0xe0] sm:$0xff] %vm639, %v600
      %669 = vst.msk [vmem:[#allocation2 + $0xe8] sm:$0xff] %vm639, %v602
      %670 = vst.msk [vmem:[#allocation2 + $0xf0] sm:$0xff] %vm639, %v604
      %671 = vst.msk [vmem:[#allocation2 + $0xf8] sm:$0xff] %vm639, %v606
      %s672 = scalar_lea.vmem %s214, 24
      %v673 = vld [vmem:[%s672] sm:$0xff]
      %v674 = vld [vmem:[%s672 + $0x8] sm:$0xff]
      %v675 = vld [vmem:[%s672 + $0x18] sm:$0xff]
      %v676 = vld [vmem:[%s672 + $0x20] sm:$0xff]
      %v677 = vld [vmem:[%s672 + $0x30] sm:$0xff]
      %v678 = vld [vmem:[%s672 + $0x38] sm:$0xff]
      %v679 = vld [vmem:[%s672 + $0x48] sm:$0xff]
      %v680 = vld [vmem:[%s672 + $0x50] sm:$0xff]
      %v681 = vld [vmem:[%s672 + $0x60] sm:$0xff]
      %v682 = vld [vmem:[%s672 + $0x68] sm:$0xff]
      %v683 = vld [vmem:[%s672 + $0x78] sm:$0xff]
      %v684 = vld [vmem:[%s672 + $0x80] sm:$0xff]
      %v685 = vld [vmem:[%s672 + $0x90] sm:$0xff]
      %v686 = vld [vmem:[%s672 + $0x98] sm:$0xff]
      %v687 = vld [vmem:[%s672 + $0xa8] sm:$0xff]
      %v688 = vld [vmem:[%s672 + $0xb0] sm:$0xff]
      %v689 = vld [vmem:[%s672 + $0xc0] sm:$0xff]
      %v690 = vld [vmem:[%s672 + $0xc8] sm:$0xff]
      %v691 = vld [vmem:[%s672 + $0xd8] sm:$0xff]
      %v692 = vld [vmem:[%s672 + $0xe0] sm:$0xff]
      %v693 = vld [vmem:[%s672 + $0xf0] sm:$0xff]
      %v694 = vld [vmem:[%s672 + $0xf8] sm:$0xff]
      %v695 = vld [vmem:[%s672 + $0x108] sm:$0xff]
      %v696 = vld [vmem:[%s672 + $0x110] sm:$0xff]
      %v697 = vld [vmem:[%s672 + $0x120] sm:$0xff]
      %v698 = vld [vmem:[%s672 + $0x128] sm:$0xff]
      %v699 = vld [vmem:[%s672 + $0x138] sm:$0xff]
      %v700 = vld [vmem:[%s672 + $0x140] sm:$0xff]
      %v701 = vld [vmem:[%s672 + $0x150] sm:$0xff]
      %v702 = vld [vmem:[%s672 + $0x158] sm:$0xff]
      %v703 = vld [vmem:[%s672 + $0x168] sm:$0xff]
      %v704 = vld [vmem:[%s672 + $0x170] sm:$0xff]
      %737 = vrot.lane.b32.xlu0 %v673, 12
      %v738 = vpop.permute.xlu0 %737
      %739 = vrot.lane.b32.xlu0 %v674, 12
      %v740 = vpop.permute.xlu0 %739
      %741 = vrot.lane.b32.xlu0 %v675, 12
      %v742 = vpop.permute.xlu0 %741
      %743 = vrot.lane.b32.xlu0 %v676, 12
      %v744 = vpop.permute.xlu0 %743
      %745 = vrot.lane.b32.xlu0 %v677, 12
      %v746 = vpop.permute.xlu0 %745
      %747 = vrot.lane.b32.xlu0 %v678, 12
      %v748 = vpop.permute.xlu0 %747
      %749 = vrot.lane.b32.xlu0 %v679, 12
      %v750 = vpop.permute.xlu0 %749
      %751 = vrot.lane.b32.xlu0 %v680, 12
      %v752 = vpop.permute.xlu0 %751
      %753 = vrot.lane.b32.xlu0 %v681, 12
      %v754 = vpop.permute.xlu0 %753
      %755 = vrot.lane.b32.xlu0 %v682, 12
      %v756 = vpop.permute.xlu0 %755
      %757 = vrot.lane.b32.xlu0 %v683, 12
      %v758 = vpop.permute.xlu0 %757
      %759 = vrot.lane.b32.xlu0 %v684, 12
      %v760 = vpop.permute.xlu0 %759
      %761 = vrot.lane.b32.xlu0 %v685, 12
      %v762 = vpop.permute.xlu0 %761
      %763 = vrot.lane.b32.xlu0 %v686, 12
      %v764 = vpop.permute.xlu0 %763
      %765 = vrot.lane.b32.xlu0 %v687, 12
      %v766 = vpop.permute.xlu0 %765
      %767 = vrot.lane.b32.xlu0 %v688, 12
      %v768 = vpop.permute.xlu0 %767
      %769 = vrot.lane.b32.xlu0 %v689, 12
      %v770 = vpop.permute.xlu0 %769
      %771 = vrot.lane.b32.xlu0 %v690, 12
      %v772 = vpop.permute.xlu0 %771
      %773 = vrot.lane.b32.xlu0 %v691, 12
      %v774 = vpop.permute.xlu0 %773
      %775 = vrot.lane.b32.xlu0 %v692, 12
      %v776 = vpop.permute.xlu0 %775
      %777 = vrot.lane.b32.xlu0 %v693, 12
      %v778 = vpop.permute.xlu0 %777
      %779 = vrot.lane.b32.xlu0 %v694, 12
      %v780 = vpop.permute.xlu0 %779
      %781 = vrot.lane.b32.xlu0 %v695, 12
      %v782 = vpop.permute.xlu0 %781
      %783 = vrot.lane.b32.xlu0 %v696, 12
      %v784 = vpop.permute.xlu0 %783
      %785 = vrot.lane.b32.xlu0 %v697, 12
      %v786 = vpop.permute.xlu0 %785
      %787 = vrot.lane.b32.xlu0 %v698, 12
      %v788 = vpop.permute.xlu0 %787
      %789 = vrot.lane.b32.xlu0 %v699, 12
      %v790 = vpop.permute.xlu0 %789
      %791 = vrot.lane.b32.xlu0 %v700, 12
      %v792 = vpop.permute.xlu0 %791
      %793 = vrot.lane.b32.xlu0 %v701, 12
      %v794 = vpop.permute.xlu0 %793
      %795 = vrot.lane.b32.xlu0 %v702, 12
      %v796 = vpop.permute.xlu0 %795
      %797 = vrot.lane.b32.xlu0 %v703, 12
      %v798 = vpop.permute.xlu0 %797
      %799 = vrot.lane.b32.xlu0 %v704, 12
      %v800 = vpop.permute.xlu0 %799
      %vm833 = vcmask 130144
      %834 = vst.msk [vmem:[#allocation2] sm:$0xff] %vm833, %v738
      %835 = vst.msk [vmem:[#allocation2 + $0x8] sm:$0xff] %vm833, %v740
      %836 = vst.msk [vmem:[#allocation2 + $0x10] sm:$0xff] %vm833, %v742
      %837 = vst.msk [vmem:[#allocation2 + $0x18] sm:$0xff] %vm833, %v744
      %838 = vst.msk [vmem:[#allocation2 + $0x20] sm:$0xff] %vm833, %v746
      %839 = vst.msk [vmem:[#allocation2 + $0x28] sm:$0xff] %vm833, %v748
      %840 = vst.msk [vmem:[#allocation2 + $0x30] sm:$0xff] %vm833, %v750
      %841 = vst.msk [vmem:[#allocation2 + $0x38] sm:$0xff] %vm833, %v752
      %842 = vst.msk [vmem:[#allocation2 + $0x40] sm:$0xff] %vm833, %v754
      %843 = vst.msk [vmem:[#allocation2 + $0x48] sm:$0xff] %vm833, %v756
      %844 = vst.msk [vmem:[#allocation2 + $0x50] sm:$0xff] %vm833, %v758
      %845 = vst.msk [vmem:[#allocation2 + $0x58] sm:$0xff] %vm833, %v760
      %846 = vst.msk [vmem:[#allocation2 + $0x60] sm:$0xff] %vm833, %v762
      %847 = vst.msk [vmem:[#allocation2 + $0x68] sm:$0xff] %vm833, %v764
      %848 = vst.msk [vmem:[#allocation2 + $0x70] sm:$0xff] %vm833, %v766
      %849 = vst.msk [vmem:[#allocation2 + $0x78] sm:$0xff] %vm833, %v768
      %850 = vst.msk [vmem:[#allocation2 + $0x80] sm:$0xff] %vm833, %v770
      %851 = vst.msk [vmem:[#allocation2 + $0x88] sm:$0xff] %vm833, %v772
      %852 = vst.msk [vmem:[#allocation2 + $0x90] sm:$0xff] %vm833, %v774
      %853 = vst.msk [vmem:[#allocation2 + $0x98] sm:$0xff] %vm833, %v776
      %854 = vst.msk [vmem:[#allocation2 + $0xa0] sm:$0xff] %vm833, %v778
      %855 = vst.msk [vmem:[#allocation2 + $0xa8] sm:$0xff] %vm833, %v780
      %856 = vst.msk [vmem:[#allocation2 + $0xb0] sm:$0xff] %vm833, %v782
      %857 = vst.msk [vmem:[#allocation2 + $0xb8] sm:$0xff] %vm833, %v784
      %858 = vst.msk [vmem:[#allocation2 + $0xc0] sm:$0xff] %vm833, %v786
      %859 = vst.msk [vmem:[#allocation2 + $0xc8] sm:$0xff] %vm833, %v788
      %860 = vst.msk [vmem:[#allocation2 + $0xd0] sm:$0xff] %vm833, %v790
      %861 = vst.msk [vmem:[#allocation2 + $0xd8] sm:$0xff] %vm833, %v792
      %862 = vst.msk [vmem:[#allocation2 + $0xe0] sm:$0xff] %vm833, %v794
      %863 = vst.msk [vmem:[#allocation2 + $0xe8] sm:$0xff] %vm833, %v796
      %864 = vst.msk [vmem:[#allocation2 + $0xf0] sm:$0xff] %vm833, %v798
      %865 = vst.msk [vmem:[#allocation2 + $0xf8] sm:$0xff] %vm833, %v800
      %v866 = vld [vmem:[%s672 + $0x1] sm:$0xff]
      %v867 = vld [vmem:[%s672 + $0x9] sm:$0xff]
      %v868 = vld [vmem:[%s672 + $0x19] sm:$0xff]
      %v869 = vld [vmem:[%s672 + $0x21] sm:$0xff]
      %v870 = vld [vmem:[%s672 + $0x31] sm:$0xff]
      %v871 = vld [vmem:[%s672 + $0x39] sm:$0xff]
      %v872 = vld [vmem:[%s672 + $0x49] sm:$0xff]
      %v873 = vld [vmem:[%s672 + $0x51] sm:$0xff]
      %v874 = vld [vmem:[%s672 + $0x61] sm:$0xff]
      %v875 = vld [vmem:[%s672 + $0x69] sm:$0xff]
      %v876 = vld [vmem:[%s672 + $0x79] sm:$0xff]
      %v877 = vld [vmem:[%s672 + $0x81] sm:$0xff]
      %v878 = vld [vmem:[%s672 + $0x91] sm:$0xff]
      %v879 = vld [vmem:[%s672 + $0x99] sm:$0xff]
      %v880 = vld [vmem:[%s672 + $0xa9] sm:$0xff]
      %v881 = vld [vmem:[%s672 + $0xb1] sm:$0xff]
      %v882 = vld [vmem:[%s672 + $0xc1] sm:$0xff]
      %v883 = vld [vmem:[%s672 + $0xc9] sm:$0xff]
      %v884 = vld [vmem:[%s672 + $0xd9] sm:$0xff]
      %v885 = vld [vmem:[%s672 + $0xe1] sm:$0xff]
      %v886 = vld [vmem:[%s672 + $0xf1] sm:$0xff]
      %v887 = vld [vmem:[%s672 + $0xf9] sm:$0xff]
      %v888 = vld [vmem:[%s672 + $0x109] sm:$0xff]
      %v889 = vld [vmem:[%s672 + $0x111] sm:$0xff]
      %v890 = vld [vmem:[%s672 + $0x121] sm:$0xff]
      %v891 = vld [vmem:[%s672 + $0x129] sm:$0xff]
      %v892 = vld [vmem:[%s672 + $0x139] sm:$0xff]
      %v893 = vld [vmem:[%s672 + $0x141] sm:$0xff]
      %v894 = vld [vmem:[%s672 + $0x151] sm:$0xff]
      %v895 = vld [vmem:[%s672 + $0x159] sm:$0xff]
      %v896 = vld [vmem:[%s672 + $0x169] sm:$0xff]
      %v897 = vld [vmem:[%s672 + $0x171] sm:$0xff]
      %930 = vrot.lane.b32.xlu0 %v866, 16
      %v931 = vpop.permute.xlu0 %930
      %932 = vrot.lane.b32.xlu0 %v867, 16
      %v933 = vpop.permute.xlu0 %932
      %934 = vrot.lane.b32.xlu0 %v868, 16
      %v935 = vpop.permute.xlu0 %934
      %936 = vrot.lane.b32.xlu0 %v869, 16
      %v937 = vpop.permute.xlu0 %936
      %938 = vrot.lane.b32.xlu0 %v870, 16
      %v939 = vpop.permute.xlu0 %938
      %940 = vrot.lane.b32.xlu0 %v871, 16
      %v941 = vpop.permute.xlu0 %940
      %942 = vrot.lane.b32.xlu0 %v872, 16
      %v943 = vpop.permute.xlu0 %942
      %944 = vrot.lane.b32.xlu0 %v873, 16
      %v945 = vpop.permute.xlu0 %944
      %946 = vrot.lane.b32.xlu0 %v874, 16
      %v947 = vpop.permute.xlu0 %946
      %948 = vrot.lane.b32.xlu0 %v875, 16
      %v949 = vpop.permute.xlu0 %948
      %950 = vrot.lane.b32.xlu0 %v876, 16
      %v951 = vpop.permute.xlu0 %950
      %952 = vrot.lane.b32.xlu0 %v877, 16
      %v953 = vpop.permute.xlu0 %952
      %954 = vrot.lane.b32.xlu0 %v878, 16
      %v955 = vpop.permute.xlu0 %954
      %956 = vrot.lane.b32.xlu0 %v879, 16
      %v957 = vpop.permute.xlu0 %956
      %958 = vrot.lane.b32.xlu0 %v880, 16
      %v959 = vpop.permute.xlu0 %958
      %960 = vrot.lane.b32.xlu0 %v881, 16
      %v961 = vpop.permute.xlu0 %960
      %962 = vrot.lane.b32.xlu0 %v882, 16
      %v963 = vpop.permute.xlu0 %962
      %964 = vrot.lane.b32.xlu0 %v883, 16
      %v965 = vpop.permute.xlu0 %964
      %966 = vrot.lane.b32.xlu0 %v884, 16
      %v967 = vpop.permute.xlu0 %966
      %968 = vrot.lane.b32.xlu0 %v885, 16
      %v969 = vpop.permute.xlu0 %968
      %970 = vrot.lane.b32.xlu0 %v886, 16
      %v971 = vpop.permute.xlu0 %970
      %972 = vrot.lane.b32.xlu0 %v887, 16
      %v973 = vpop.permute.xlu0 %972
      %974 = vrot.lane.b32.xlu0 %v888, 16
      %v975 = vpop.permute.xlu0 %974
      %976 = vrot.lane.b32.xlu0 %v889, 16
      %v977 = vpop.permute.xlu0 %976
      %978 = vrot.lane.b32.xlu0 %v890, 16
      %v979 = vpop.permute.xlu0 %978
      %980 = vrot.lane.b32.xlu0 %v891, 16
      %v981 = vpop.permute.xlu0 %980
      %982 = vrot.lane.b32.xlu0 %v892, 16
      %v983 = vpop.permute.xlu0 %982
      %984 = vrot.lane.b32.xlu0 %v893, 16
      %v985 = vpop.permute.xlu0 %984
      %986 = vrot.lane.b32.xlu0 %v894, 16
      %v987 = vpop.permute.xlu0 %986
      %988 = vrot.lane.b32.xlu0 %v895, 16
      %v989 = vpop.permute.xlu0 %988
      %990 = vrot.lane.b32.xlu0 %v896, 16
      %v991 = vpop.permute.xlu0 %990
      %992 = vrot.lane.b32.xlu0 %v897, 16
      %v993 = vpop.permute.xlu0 %992
      %vm1026 = vcmask 162944
      %1027 = vst.msk [vmem:[#allocation2] sm:$0xff] %vm1026, %v931
      %1028 = vst.msk [vmem:[#allocation2 + $0x8] sm:$0xff] %vm1026, %v933
      %1029 = vst.msk [vmem:[#allocation2 + $0x10] sm:$0xff] %vm1026, %v935
      %1030 = vst.msk [vmem:[#allocation2 + $0x18] sm:$0xff] %vm1026, %v937
      %1031 = vst.msk [vmem:[#allocation2 + $0x20] sm:$0xff] %vm1026, %v939
      %1032 = vst.msk [vmem:[#allocation2 + $0x28] sm:$0xff] %vm1026, %v941
      %1033 = vst.msk [vmem:[#allocation2 + $0x30] sm:$0xff] %vm1026, %v943
      %1034 = vst.msk [vmem:[#allocation2 + $0x38] sm:$0xff] %vm1026, %v945
      %1035 = vst.msk [vmem:[#allocation2 + $0x40] sm:$0xff] %vm1026, %v947
      %1036 = vst.msk [vmem:[#allocation2 + $0x48] sm:$0xff] %vm1026, %v949
      %1037 = vst.msk [vmem:[#allocation2 + $0x50] sm:$0xff] %vm1026, %v951
      %1038 = vst.msk [vmem:[#allocation2 + $0x58] sm:$0xff] %vm1026, %v953
      %1039 = vst.msk [vmem:[#allocation2 + $0x60] sm:$0xff] %vm1026, %v955
      %1040 = vst.msk [vmem:[#allocation2 + $0x68] sm:$0xff] %vm1026, %v957
      %1041 = vst.msk [vmem:[#allocation2 + $0x70] sm:$0xff] %vm1026, %v959
      %1042 = vst.msk [vmem:[#allocation2 + $0x78] sm:$0xff] %vm1026, %v961
      %1043 = vst.msk [vmem:[#allocation2 + $0x80] sm:$0xff] %vm1026, %v963
      %1044 = vst.msk [vmem:[#allocation2 + $0x88] sm:$0xff] %vm1026, %v965
      %1045 = vst.msk [vmem:[#allocation2 + $0x90] sm:$0xff] %vm1026, %v967
      %1046 = vst.msk [vmem:[#allocation2 + $0x98] sm:$0xff] %vm1026, %v969
      %1047 = vst.msk [vmem:[#allocation2 + $0xa0] sm:$0xff] %vm1026, %v971
      %1048 = vst.msk [vmem:[#allocation2 + $0xa8] sm:$0xff] %vm1026, %v973
      %1049 = vst.msk [vmem:[#allocation2 + $0xb0] sm:$0xff] %vm1026, %v975
      %1050 = vst.msk [vmem:[#allocation2 + $0xb8] sm:$0xff] %vm1026, %v977
      %1051 = vst.msk [vmem:[#allocation2 + $0xc0] sm:$0xff] %vm1026, %v979
      %1052 = vst.msk [vmem:[#allocation2 + $0xc8] sm:$0xff] %vm1026, %v981
      %1053 = vst.msk [vmem:[#allocation2 + $0xd0] sm:$0xff] %vm1026, %v983
      %1054 = vst.msk [vmem:[#allocation2 + $0xd8] sm:$0xff] %vm1026, %v985
      %1055 = vst.msk [vmem:[#allocation2 + $0xe0] sm:$0xff] %vm1026, %v987
      %1056 = vst.msk [vmem:[#allocation2 + $0xe8] sm:$0xff] %vm1026, %v989
      %1057 = vst.msk [vmem:[#allocation2 + $0xf0] sm:$0xff] %vm1026, %v991
      %1058 = vst.msk [vmem:[#allocation2 + $0xf8] sm:$0xff] %vm1026, %v993
      %v1059 = vld [vmem:[%s672 + $0x2] sm:$0xff]
      %v1060 = vld [vmem:[%s672 + $0xa] sm:$0xff]
      %v1061 = vld [vmem:[%s672 + $0x1a] sm:$0xff]
      %v1062 = vld [vmem:[%s672 + $0x22] sm:$0xff]
      %v1063 = vld [vmem:[%s672 + $0x32] sm:$0xff]
      %v1064 = vld [vmem:[%s672 + $0x3a] sm:$0xff]
      %v1065 = vld [vmem:[%s672 + $0x4a] sm:$0xff]
      %v1066 = vld [vmem:[%s672 + $0x52] sm:$0xff]
      %v1067 = vld [vmem:[%s672 + $0x62] sm:$0xff]
      %v1068 = vld [vmem:[%s672 + $0x6a] sm:$0xff]
      %v1069 = vld [vmem:[%s672 + $0x7a] sm:$0xff]
      %v1070 = vld [vmem:[%s672 + $0x82] sm:$0xff]
      %v1071 = vld [vmem:[%s672 + $0x92] sm:$0xff]
      %v1072 = vld [vmem:[%s672 + $0x9a] sm:$0xff]
      %v1073 = vld [vmem:[%s672 + $0xaa] sm:$0xff]
      %v1074 = vld [vmem:[%s672 + $0xb2] sm:$0xff]
      %v1075 = vld [vmem:[%s672 + $0xc2] sm:$0xff]
      %v1076 = vld [vmem:[%s672 + $0xca] sm:$0xff]
      %v1077 = vld [vmem:[%s672 + $0xda] sm:$0xff]
      %v1078 = vld [vmem:[%s672 + $0xe2] sm:$0xff]
      %v1079 = vld [vmem:[%s672 + $0xf2] sm:$0xff]
      %v1080 = vld [vmem:[%s672 + $0xfa] sm:$0xff]
      %v1081 = vld [vmem:[%s672 + $0x10a] sm:$0xff]
      %v1082 = vld [vmem:[%s672 + $0x112] sm:$0xff]
      %v1083 = vld [vmem:[%s672 + $0x122] sm:$0xff]
      %v1084 = vld [vmem:[%s672 + $0x12a] sm:$0xff]
      %v1085 = vld [vmem:[%s672 + $0x13a] sm:$0xff]
      %v1086 = vld [vmem:[%s672 + $0x142] sm:$0xff]
      %v1087 = vld [vmem:[%s672 + $0x152] sm:$0xff]
      %v1088 = vld [vmem:[%s672 + $0x15a] sm:$0xff]
      %v1089 = vld [vmem:[%s672 + $0x16a] sm:$0xff]
      %v1090 = vld [vmem:[%s672 + $0x172] sm:$0xff]
      %1123 = vrot.lane.b32.xlu0 %v1059, 20
      %v1124 = vpop.permute.xlu0 %1123
      %1125 = vrot.lane.b32.xlu0 %v1060, 20
      %v1126 = vpop.permute.xlu0 %1125
      %1127 = vrot.lane.b32.xlu0 %v1061, 20
      %v1128 = vpop.permute.xlu0 %1127
      %1129 = vrot.lane.b32.xlu0 %v1062, 20
      %v1130 = vpop.permute.xlu0 %1129
      %1131 = vrot.lane.b32.xlu0 %v1063, 20
      %v1132 = vpop.permute.xlu0 %1131
      %1133 = vrot.lane.b32.xlu0 %v1064, 20
      %v1134 = vpop.permute.xlu0 %1133
      %1135 = vrot.lane.b32.xlu0 %v1065, 20
      %v1136 = vpop.permute.xlu0 %1135
      %1137 = vrot.lane.b32.xlu0 %v1066, 20
      %v1138 = vpop.permute.xlu0 %1137
      %1139 = vrot.lane.b32.xlu0 %v1067, 20
      %v1140 = vpop.permute.xlu0 %1139
      %1141 = vrot.lane.b32.xlu0 %v1068, 20
      %v1142 = vpop.permute.xlu0 %1141
      %1143 = vrot.lane.b32.xlu0 %v1069, 20
      %v1144 = vpop.permute.xlu0 %1143
      %1145 = vrot.lane.b32.xlu0 %v1070, 20
      %v1146 = vpop.permute.xlu0 %1145
      %1147 = vrot.lane.b32.xlu0 %v1071, 20
      %v1148 = vpop.permute.xlu0 %1147
      %1149 = vrot.lane.b32.xlu0 %v1072, 20
      %v1150 = vpop.permute.xlu0 %1149
      %1151 = vrot.lane.b32.xlu0 %v1073, 20
      %v1152 = vpop.permute.xlu0 %1151
      %1153 = vrot.lane.b32.xlu0 %v1074, 20
      %v1154 = vpop.permute.xlu0 %1153
      %1155 = vrot.lane.b32.xlu0 %v1075, 20
      %v1156 = vpop.permute.xlu0 %1155
      %1157 = vrot.lane.b32.xlu0 %v1076, 20
      %v1158 = vpop.permute.xlu0 %1157
      %1159 = vrot.lane.b32.xlu0 %v1077, 20
      %v1160 = vpop.permute.xlu0 %1159
      %1161 = vrot.lane.b32.xlu0 %v1078, 20
      %v1162 = vpop.permute.xlu0 %1161
      %1163 = vrot.lane.b32.xlu0 %v1079, 20
      %v1164 = vpop.permute.xlu0 %1163
      %1165 = vrot.lane.b32.xlu0 %v1080, 20
      %v1166 = vpop.permute.xlu0 %1165
      %1167 = vrot.lane.b32.xlu0 %v1081, 20
      %v1168 = vpop.permute.xlu0 %1167
      %1169 = vrot.lane.b32.xlu0 %v1082, 20
      %v1170 = vpop.permute.xlu0 %1169
      %1171 = vrot.lane.b32.xlu0 %v1083, 20
      %v1172 = vpop.permute.xlu0 %1171
      %1173 = vrot.lane.b32.xlu0 %v1084, 20
      %v1174 = vpop.permute.xlu0 %1173
      %1175 = vrot.lane.b32.xlu0 %v1085, 20
      %v1176 = vpop.permute.xlu0 %1175
      %1177 = vrot.lane.b32.xlu0 %v1086, 20
      %v1178 = vpop.permute.xlu0 %1177
      %1179 = vrot.lane.b32.xlu0 %v1087, 20
      %v1180 = vpop.permute.xlu0 %1179
      %1181 = vrot.lane.b32.xlu0 %v1088, 20
      %v1182 = vpop.permute.xlu0 %1181
      %1183 = vrot.lane.b32.xlu0 %v1089, 20
      %v1184 = vpop.permute.xlu0 %1183
      %1185 = vrot.lane.b32.xlu0 %v1090, 20
      %v1186 = vpop.permute.xlu0 %1185
      %vm1219 = vcmask 195744
      %1220 = vst.msk [vmem:[#allocation2] sm:$0xff] %vm1219, %v1124
      %1221 = vst.msk [vmem:[#allocation2 + $0x8] sm:$0xff] %vm1219, %v1126
      %1222 = vst.msk [vmem:[#allocation2 + $0x10] sm:$0xff] %vm1219, %v1128
      %1223 = vst.msk [vmem:[#allocation2 + $0x18] sm:$0xff] %vm1219, %v1130
      %1224 = vst.msk [vmem:[#allocation2 + $0x20] sm:$0xff] %vm1219, %v1132
      %1225 = vst.msk [vmem:[#allocation2 + $0x28] sm:$0xff] %vm1219, %v1134
      %1226 = vst.msk [vmem:[#allocation2 + $0x30] sm:$0xff] %vm1219, %v1136
      %1227 = vst.msk [vmem:[#allocation2 + $0x38] sm:$0xff] %vm1219, %v1138
      %1228 = vst.msk [vmem:[#allocation2 + $0x40] sm:$0xff] %vm1219, %v1140
      %1229 = vst.msk [vmem:[#allocation2 + $0x48] sm:$0xff] %vm1219, %v1142
      %1230 = vst.msk [vmem:[#allocation2 + $0x50] sm:$0xff] %vm1219, %v1144
      %1231 = vst.msk [vmem:[#allocation2 + $0x58] sm:$0xff] %vm1219, %v1146
      %1232 = vst.msk [vmem:[#allocation2 + $0x60] sm:$0xff] %vm1219, %v1148
      %1233 = vst.msk [vmem:[#allocation2 + $0x68] sm:$0xff] %vm1219, %v1150
      %1234 = vst.msk [vmem:[#allocation2 + $0x70] sm:$0xff] %vm1219, %v1152
      %1235 = vst.msk [vmem:[#allocation2 + $0x78] sm:$0xff] %vm1219, %v1154
      %1236 = vst.msk [vmem:[#allocation2 + $0x80] sm:$0xff] %vm1219, %v1156
      %1237 = vst.msk [vmem:[#allocation2 + $0x88] sm:$0xff] %vm1219, %v1158
      %1238 = vst.msk [vmem:[#allocation2 + $0x90] sm:$0xff] %vm1219, %v1160
      %1239 = vst.msk [vmem:[#allocation2 + $0x98] sm:$0xff] %vm1219, %v1162
      %1240 = vst.msk [vmem:[#allocation2 + $0xa0] sm:$0xff] %vm1219, %v1164
      %1241 = vst.msk [vmem:[#allocation2 + $0xa8] sm:$0xff] %vm1219, %v1166
      %1242 = vst.msk [vmem:[#allocation2 + $0xb0] sm:$0xff] %vm1219, %v1168
      %1243 = vst.msk [vmem:[#allocation2 + $0xb8] sm:$0xff] %vm1219, %v1170
      %1244 = vst.msk [vmem:[#allocation2 + $0xc0] sm:$0xff] %vm1219, %v1172
      %1245 = vst.msk [vmem:[#allocation2 + $0xc8] sm:$0xff] %vm1219, %v1174
      %1246 = vst.msk [vmem:[#allocation2 + $0xd0] sm:$0xff] %vm1219, %v1176
      %1247 = vst.msk [vmem:[#allocation2 + $0xd8] sm:$0xff] %vm1219, %v1178
      %1248 = vst.msk [vmem:[#allocation2 + $0xe0] sm:$0xff] %vm1219, %v1180
      %1249 = vst.msk [vmem:[#allocation2 + $0xe8] sm:$0xff] %vm1219, %v1182
      %1250 = vst.msk [vmem:[#allocation2 + $0xf0] sm:$0xff] %vm1219, %v1184
      %1251 = vst.msk [vmem:[#allocation2 + $0xf8] sm:$0xff] %vm1219, %v1186
      %s1252 = scalar_lea.vmem %s214, 48
      %v1253 = vld [vmem:[%s1252] sm:$0xff]
      %v1254 = vld [vmem:[%s1252 + $0x8] sm:$0xff]
      %v1255 = vld [vmem:[%s1252 + $0x18] sm:$0xff]
      %v1256 = vld [vmem:[%s1252 + $0x20] sm:$0xff]
      %v1257 = vld [vmem:[%s1252 + $0x30] sm:$0xff]
      %v1258 = vld [vmem:[%s1252 + $0x38] sm:$0xff]
      %v1259 = vld [vmem:[%s1252 + $0x48] sm:$0xff]
      %v1260 = vld [vmem:[%s1252 + $0x50] sm:$0xff]
      %v1261 = vld [vmem:[%s1252 + $0x60] sm:$0xff]
      %v1262 = vld [vmem:[%s1252 + $0x68] sm:$0xff]
      %v1263 = vld [vmem:[%s1252 + $0x78] sm:$0xff]
      %v1264 = vld [vmem:[%s1252 + $0x80] sm:$0xff]
      %v1265 = vld [vmem:[%s1252 + $0x90] sm:$0xff]
      %v1266 = vld [vmem:[%s1252 + $0x98] sm:$0xff]
      %v1267 = vld [vmem:[%s1252 + $0xa8] sm:$0xff]
      %v1268 = vld [vmem:[%s1252 + $0xb0] sm:$0xff]
      %v1269 = vld [vmem:[%s1252 + $0xc0] sm:$0xff]
      %v1270 = vld [vmem:[%s1252 + $0xc8] sm:$0xff]
      %v1271 = vld [vmem:[%s1252 + $0xd8] sm:$0xff]
      %v1272 = vld [vmem:[%s1252 + $0xe0] sm:$0xff]
      %v1273 = vld [vmem:[%s1252 + $0xf0] sm:$0xff]
      %v1274 = vld [vmem:[%s1252 + $0xf8] sm:$0xff]
      %v1275 = vld [vmem:[%s1252 + $0x108] sm:$0xff]
      %v1276 = vld [vmem:[%s1252 + $0x110] sm:$0xff]
      %v1277 = vld [vmem:[%s1252 + $0x120] sm:$0xff]
      %v1278 = vld [vmem:[%s1252 + $0x128] sm:$0xff]
      %v1279 = vld [vmem:[%s1252 + $0x138] sm:$0xff]
      %v1280 = vld [vmem:[%s1252 + $0x140] sm:$0xff]
      %v1281 = vld [vmem:[%s1252 + $0x150] sm:$0xff]
      %v1282 = vld [vmem:[%s1252 + $0x158] sm:$0xff]
      %v1283 = vld [vmem:[%s1252 + $0x168] sm:$0xff]
      %v1284 = vld [vmem:[%s1252 + $0x170] sm:$0xff]
      %1317 = vrot.lane.b32.xlu0 %v1253, 24
      %v1318 = vpop.permute.xlu0 %1317
      %1319 = vrot.lane.b32.xlu0 %v1254, 24
      %v1320 = vpop.permute.xlu0 %1319
      %1321 = vrot.lane.b32.xlu0 %v1255, 24
      %v1322 = vpop.permute.xlu0 %1321
      %1323 = vrot.lane.b32.xlu0 %v1256, 24
      %v1324 = vpop.permute.xlu0 %1323
      %1325 = vrot.lane.b32.xlu0 %v1257, 24
      %v1326 = vpop.permute.xlu0 %1325
      %1327 = vrot.lane.b32.xlu0 %v1258, 24
      %v1328 = vpop.permute.xlu0 %1327
      %1329 = vrot.lane.b32.xlu0 %v1259, 24
      %v1330 = vpop.permute.xlu0 %1329
      %1331 = vrot.lane.b32.xlu0 %v1260, 24
      %v1332 = vpop.permute.xlu0 %1331
      %1333 = vrot.lane.b32.xlu0 %v1261, 24
      %v1334 = vpop.permute.xlu0 %1333
      %1335 = vrot.lane.b32.xlu0 %v1262, 24
      %v1336 = vpop.permute.xlu0 %1335
      %1337 = vrot.lane.b32.xlu0 %v1263, 24
      %v1338 = vpop.permute.xlu0 %1337
      %1339 = vrot.lane.b32.xlu0 %v1264, 24
      %v1340 = vpop.permute.xlu0 %1339
      %1341 = vrot.lane.b32.xlu0 %v1265, 24
      %v1342 = vpop.permute.xlu0 %1341
      %1343 = vrot.lane.b32.xlu0 %v1266, 24
      %v1344 = vpop.permute.xlu0 %1343
      %1345 = vrot.lane.b32.xlu0 %v1267, 24
      %v1346 = vpop.permute.xlu0 %1345
      %1347 = vrot.lane.b32.xlu0 %v1268, 24
      %v1348 = vpop.permute.xlu0 %1347
      %1349 = vrot.lane.b32.xlu0 %v1269, 24
      %v1350 = vpop.permute.xlu0 %1349
      %1351 = vrot.lane.b32.xlu0 %v1270, 24
      %v1352 = vpop.permute.xlu0 %1351
      %1353 = vrot.lane.b32.xlu0 %v1271, 24
      %v1354 = vpop.permute.xlu0 %1353
      %1355 = vrot.lane.b32.xlu0 %v1272, 24
      %v1356 = vpop.permute.xlu0 %1355
      %1357 = vrot.lane.b32.xlu0 %v1273, 24
      %v1358 = vpop.permute.xlu0 %1357
      %1359 = vrot.lane.b32.xlu0 %v1274, 24
      %v1360 = vpop.permute.xlu0 %1359
      %1361 = vrot.lane.b32.xlu0 %v1275, 24
      %v1362 = vpop.permute.xlu0 %1361
      %1363 = vrot.lane.b32.xlu0 %v1276, 24
      %v1364 = vpop.permute.xlu0 %1363
      %1365 = vrot.lane.b32.xlu0 %v1277, 24
      %v1366 = vpop.permute.xlu0 %1365
      %1367 = vrot.lane.b32.xlu0 %v1278, 24
      %v1368 = vpop.permute.xlu0 %1367
      %1369 = vrot.lane.b32.xlu0 %v1279, 24
      %v1370 = vpop.permute.xlu0 %1369
      %1371 = vrot.lane.b32.xlu0 %v1280, 24
      %v1372 = vpop.permute.xlu0 %1371
      %1373 = vrot.lane.b32.xlu0 %v1281, 24
      %v1374 = vpop.permute.xlu0 %1373
      %1375 = vrot.lane.b32.xlu0 %v1282, 24
      %v1376 = vpop.permute.xlu0 %1375
      %1377 = vrot.lane.b32.xlu0 %v1283, 24
      %v1378 = vpop.permute.xlu0 %1377
      %1379 = vrot.lane.b32.xlu0 %v1284, 24
      %v1380 = vpop.permute.xlu0 %1379
      %vm1413 = vcmask 228544
      %1414 = vst.msk [vmem:[#allocation2] sm:$0xff] %vm1413, %v1318
      %1415 = vst.msk [vmem:[#allocation2 + $0x8] sm:$0xff] %vm1413, %v1320
      %1416 = vst.msk [vmem:[#allocation2 + $0x10] sm:$0xff] %vm1413, %v1322
      %1417 = vst.msk [vmem:[#allocation2 + $0x18] sm:$0xff] %vm1413, %v1324
      %1418 = vst.msk [vmem:[#allocation2 + $0x20] sm:$0xff] %vm1413, %v1326
      %1419 = vst.msk [vmem:[#allocation2 + $0x28] sm:$0xff] %vm1413, %v1328
      %1420 = vst.msk [vmem:[#allocation2 + $0x30] sm:$0xff] %vm1413, %v1330
      %1421 = vst.msk [vmem:[#allocation2 + $0x38] sm:$0xff] %vm1413, %v1332
      %1422 = vst.msk [vmem:[#allocation2 + $0x40] sm:$0xff] %vm1413, %v1334
      %1423 = vst.msk [vmem:[#allocation2 + $0x48] sm:$0xff] %vm1413, %v1336
      %1424 = vst.msk [vmem:[#allocation2 + $0x50] sm:$0xff] %vm1413, %v1338
      %1425 = vst.msk [vmem:[#allocation2 + $0x58] sm:$0xff] %vm1413, %v1340
      %1426 = vst.msk [vmem:[#allocation2 + $0x60] sm:$0xff] %vm1413, %v1342
      %1427 = vst.msk [vmem:[#allocation2 + $0x68] sm:$0xff] %vm1413, %v1344
      %1428 = vst.msk [vmem:[#allocation2 + $0x70] sm:$0xff] %vm1413, %v1346
      %1429 = vst.msk [vmem:[#allocation2 + $0x78] sm:$0xff] %vm1413, %v1348
      %1430 = vst.msk [vmem:[#allocation2 + $0x80] sm:$0xff] %vm1413, %v1350
      %1431 = vst.msk [vmem:[#allocation2 + $0x88] sm:$0xff] %vm1413, %v1352
      %1432 = vst.msk [vmem:[#allocation2 + $0x90] sm:$0xff] %vm1413, %v1354
      %1433 = vst.msk [vmem:[#allocation2 + $0x98] sm:$0xff] %vm1413, %v1356
      %1434 = vst.msk [vmem:[#allocation2 + $0xa0] sm:$0xff] %vm1413, %v1358
      %1435 = vst.msk [vmem:[#allocation2 + $0xa8] sm:$0xff] %vm1413, %v1360
      %1436 = vst.msk [vmem:[#allocation2 + $0xb0] sm:$0xff] %vm1413, %v1362
      %1437 = vst.msk [vmem:[#allocation2 + $0xb8] sm:$0xff] %vm1413, %v1364
      %1438 = vst.msk [vmem:[#allocation2 + $0xc0] sm:$0xff] %vm1413, %v1366
      %1439 = vst.msk [vmem:[#allocation2 + $0xc8] sm:$0xff] %vm1413, %v1368
      %1440 = vst.msk [vmem:[#allocation2 + $0xd0] sm:$0xff] %vm1413, %v1370
      %1441 = vst.msk [vmem:[#allocation2 + $0xd8] sm:$0xff] %vm1413, %v1372
      %1442 = vst.msk [vmem:[#allocation2 + $0xe0] sm:$0xff] %vm1413, %v1374
      %1443 = vst.msk [vmem:[#allocation2 + $0xe8] sm:$0xff] %vm1413, %v1376
      %1444 = vst.msk [vmem:[#allocation2 + $0xf0] sm:$0xff] %vm1413, %v1378
      %1445 = vst.msk [vmem:[#allocation2 + $0xf8] sm:$0xff] %vm1413, %v1380
      %v1446 = vld [vmem:[%s1252 + $0x1] sm:$0xff]
      %v1447 = vld [vmem:[%s1252 + $0x9] sm:$0xff]
      %v1448 = vld [vmem:[%s1252 + $0x19] sm:$0xff]
      %v1449 = vld [vmem:[%s1252 + $0x21] sm:$0xff]
      %v1450 = vld [vmem:[%s1252 + $0x31] sm:$0xff]
      %v1451 = vld [vmem:[%s1252 + $0x39] sm:$0xff]
      %v1452 = vld [vmem:[%s1252 + $0x49] sm:$0xff]
      %v1453 = vld [vmem:[%s1252 + $0x51] sm:$0xff]
      %v1454 = vld [vmem:[%s1252 + $0x61] sm:$0xff]
      %v1455 = vld [vmem:[%s1252 + $0x69] sm:$0xff]
      %v1456 = vld [vmem:[%s1252 + $0x79] sm:$0xff]
      %v1457 = vld [vmem:[%s1252 + $0x81] sm:$0xff]
      %v1458 = vld [vmem:[%s1252 + $0x91] sm:$0xff]
      %v1459 = vld [vmem:[%s1252 + $0x99] sm:$0xff]
      %v1460 = vld [vmem:[%s1252 + $0xa9] sm:$0xff]
      %v1461 = vld [vmem:[%s1252 + $0xb1] sm:$0xff]
      %v1462 = vld [vmem:[%s1252 + $0xc1] sm:$0xff]
      %v1463 = vld [vmem:[%s1252 + $0xc9] sm:$0xff]
      %v1464 = vld [vmem:[%s1252 + $0xd9] sm:$0xff]
      %v1465 = vld [vmem:[%s1252 + $0xe1] sm:$0xff]
      %v1466 = vld [vmem:[%s1252 + $0xf1] sm:$0xff]
      %v1467 = vld [vmem:[%s1252 + $0xf9] sm:$0xff]
      %v1468 = vld [vmem:[%s1252 + $0x109] sm:$0xff]
      %v1469 = vld [vmem:[%s1252 + $0x111] sm:$0xff]
      %v1470 = vld [vmem:[%s1252 + $0x121] sm:$0xff]
      %v1471 = vld [vmem:[%s1252 + $0x129] sm:$0xff]
      %v1472 = vld [vmem:[%s1252 + $0x139] sm:$0xff]
      %v1473 = vld [vmem:[%s1252 + $0x141] sm:$0xff]
      %v1474 = vld [vmem:[%s1252 + $0x151] sm:$0xff]
      %v1475 = vld [vmem:[%s1252 + $0x159] sm:$0xff]
      %v1476 = vld [vmem:[%s1252 + $0x169] sm:$0xff]
      %v1477 = vld [vmem:[%s1252 + $0x171] sm:$0xff]
      %1510 = vrot.lane.b32.xlu0 %v1446, 28
      %v1511 = vpop.permute.xlu0 %1510
      %1512 = vrot.lane.b32.xlu0 %v1447, 28
      %v1513 = vpop.permute.xlu0 %1512
      %1514 = vrot.lane.b32.xlu0 %v1448, 28
      %v1515 = vpop.permute.xlu0 %1514
      %1516 = vrot.lane.b32.xlu0 %v1449, 28
      %v1517 = vpop.permute.xlu0 %1516
      %1518 = vrot.lane.b32.xlu0 %v1450, 28
      %v1519 = vpop.permute.xlu0 %1518
      %1520 = vrot.lane.b32.xlu0 %v1451, 28
      %v1521 = vpop.permute.xlu0 %1520
      %1522 = vrot.lane.b32.xlu0 %v1452, 28
      %v1523 = vpop.permute.xlu0 %1522
      %1524 = vrot.lane.b32.xlu0 %v1453, 28
      %v1525 = vpop.permute.xlu0 %1524
      %1526 = vrot.lane.b32.xlu0 %v1454, 28
      %v1527 = vpop.permute.xlu0 %1526
      %1528 = vrot.lane.b32.xlu0 %v1455, 28
      %v1529 = vpop.permute.xlu0 %1528
      %1530 = vrot.lane.b32.xlu0 %v1456, 28
      %v1531 = vpop.permute.xlu0 %1530
      %1532 = vrot.lane.b32.xlu0 %v1457, 28
      %v1533 = vpop.permute.xlu0 %1532
      %1534 = vrot.lane.b32.xlu0 %v1458, 28
      %v1535 = vpop.permute.xlu0 %1534
      %1536 = vrot.lane.b32.xlu0 %v1459, 28
      %v1537 = vpop.permute.xlu0 %1536
      %1538 = vrot.lane.b32.xlu0 %v1460, 28
      %v1539 = vpop.permute.xlu0 %1538
      %1540 = vrot.lane.b32.xlu0 %v1461, 28
      %v1541 = vpop.permute.xlu0 %1540
      %1542 = vrot.lane.b32.xlu0 %v1462, 28
      %v1543 = vpop.permute.xlu0 %1542
      %1544 = vrot.lane.b32.xlu0 %v1463, 28
      %v1545 = vpop.permute.xlu0 %1544
      %1546 = vrot.lane.b32.xlu0 %v1464, 28
      %v1547 = vpop.permute.xlu0 %1546
      %1548 = vrot.lane.b32.xlu0 %v1465, 28
      %v1549 = vpop.permute.xlu0 %1548
      %1550 = vrot.lane.b32.xlu0 %v1466, 28
      %v1551 = vpop.permute.xlu0 %1550
      %1552 = vrot.lane.b32.xlu0 %v1467, 28
      %v1553 = vpop.permute.xlu0 %1552
      %1554 = vrot.lane.b32.xlu0 %v1468, 28
      %v1555 = vpop.permute.xlu0 %1554
      %1556 = vrot.lane.b32.xlu0 %v1469, 28
      %v1557 = vpop.permute.xlu0 %1556
      %1558 = vrot.lane.b32.xlu0 %v1470, 28
      %v1559 = vpop.permute.xlu0 %1558
      %1560 = vrot.lane.b32.xlu0 %v1471, 28
      %v1561 = vpop.permute.xlu0 %1560
      %1562 = vrot.lane.b32.xlu0 %v1472, 28
      %v1563 = vpop.permute.xlu0 %1562
      %1564 = vrot.lane.b32.xlu0 %v1473, 28
      %v1565 = vpop.permute.xlu0 %1564
      %1566 = vrot.lane.b32.xlu0 %v1474, 28
      %v1567 = vpop.permute.xlu0 %1566
      %1568 = vrot.lane.b32.xlu0 %v1475, 28
      %v1569 = vpop.permute.xlu0 %1568
      %1570 = vrot.lane.b32.xlu0 %v1476, 28
      %v1571 = vpop.permute.xlu0 %1570
      %1572 = vrot.lane.b32.xlu0 %v1477, 28
      %v1573 = vpop.permute.xlu0 %1572
      %vm1606 = vcmask 261344
      %1607 = vst.msk [vmem:[#allocation2] sm:$0xff] %vm1606, %v1511
      %1608 = vst.msk [vmem:[#allocation2 + $0x8] sm:$0xff] %vm1606, %v1513
      %1609 = vst.msk [vmem:[#allocation2 + $0x10] sm:$0xff] %vm1606, %v1515
      %1610 = vst.msk [vmem:[#allocation2 + $0x18] sm:$0xff] %vm1606, %v1517
      %1611 = vst.msk [vmem:[#allocation2 + $0x20] sm:$0xff] %vm1606, %v1519
      %1612 = vst.msk [vmem:[#allocation2 + $0x28] sm:$0xff] %vm1606, %v1521
      %1613 = vst.msk [vmem:[#allocation2 + $0x30] sm:$0xff] %vm1606, %v1523
      %1614 = vst.msk [vmem:[#allocation2 + $0x38] sm:$0xff] %vm1606, %v1525
      %1615 = vst.msk [vmem:[#allocation2 + $0x40] sm:$0xff] %vm1606, %v1527
      %1616 = vst.msk [vmem:[#allocation2 + $0x48] sm:$0xff] %vm1606, %v1529
      %1617 = vst.msk [vmem:[#allocation2 + $0x50] sm:$0xff] %vm1606, %v1531
      %1618 = vst.msk [vmem:[#allocation2 + $0x58] sm:$0xff] %vm1606, %v1533
      %1619 = vst.msk [vmem:[#allocation2 + $0x60] sm:$0xff] %vm1606, %v1535
      %1620 = vst.msk [vmem:[#allocation2 + $0x68] sm:$0xff] %vm1606, %v1537
      %1621 = vst.msk [vmem:[#allocation2 + $0x70] sm:$0xff] %vm1606, %v1539
      %1622 = vst.msk [vmem:[#allocation2 + $0x78] sm:$0xff] %vm1606, %v1541
      %1623 = vst.msk [vmem:[#allocation2 + $0x80] sm:$0xff] %vm1606, %v1543
      %1624 = vst.msk [vmem:[#allocation2 + $0x88] sm:$0xff] %vm1606, %v1545
      %1625 = vst.msk [vmem:[#allocation2 + $0x90] sm:$0xff] %vm1606, %v1547
      %1626 = vst.msk [vmem:[#allocation2 + $0x98] sm:$0xff] %vm1606, %v1549
      %1627 = vst.msk [vmem:[#allocation2 + $0xa0] sm:$0xff] %vm1606, %v1551
      %1628 = vst.msk [vmem:[#allocation2 + $0xa8] sm:$0xff] %vm1606, %v1553
      %1629 = vst.msk [vmem:[#allocation2 + $0xb0] sm:$0xff] %vm1606, %v1555
      %1630 = vst.msk [vmem:[#allocation2 + $0xb8] sm:$0xff] %vm1606, %v1557
      %1631 = vst.msk [vmem:[#allocation2 + $0xc0] sm:$0xff] %vm1606, %v1559
      %1632 = vst.msk [vmem:[#allocation2 + $0xc8] sm:$0xff] %vm1606, %v1561
      %1633 = vst.msk [vmem:[#allocation2 + $0xd0] sm:$0xff] %vm1606, %v1563
      %1634 = vst.msk [vmem:[#allocation2 + $0xd8] sm:$0xff] %vm1606, %v1565
      %1635 = vst.msk [vmem:[#allocation2 + $0xe0] sm:$0xff] %vm1606, %v1567
      %1636 = vst.msk [vmem:[#allocation2 + $0xe8] sm:$0xff] %vm1606, %v1569
      %1637 = vst.msk [vmem:[#allocation2 + $0xf0] sm:$0xff] %vm1606, %v1571
      %1638 = vst.msk [vmem:[#allocation2 + $0xf8] sm:$0xff] %vm1606, %v1573
      %v1639 = vld [vmem:[%s1252 + $0x2] sm:$0xff]
      %v1640 = vld [vmem:[%s1252 + $0xa] sm:$0xff]
      %v1641 = vld [vmem:[%s1252 + $0x1a] sm:$0xff]
      %v1642 = vld [vmem:[%s1252 + $0x22] sm:$0xff]
      %v1643 = vld [vmem:[%s1252 + $0x32] sm:$0xff]
      %v1644 = vld [vmem:[%s1252 + $0x3a] sm:$0xff]
      %v1645 = vld [vmem:[%s1252 + $0x4a] sm:$0xff]
      %v1646 = vld [vmem:[%s1252 + $0x52] sm:$0xff]
      %v1647 = vld [vmem:[%s1252 + $0x62] sm:$0xff]
      %v1648 = vld [vmem:[%s1252 + $0x6a] sm:$0xff]
      %v1649 = vld [vmem:[%s1252 + $0x7a] sm:$0xff]
      %v1650 = vld [vmem:[%s1252 + $0x82] sm:$0xff]
      %v1651 = vld [vmem:[%s1252 + $0x92] sm:$0xff]
      %v1652 = vld [vmem:[%s1252 + $0x9a] sm:$0xff]
      %v1653 = vld [vmem:[%s1252 + $0xaa] sm:$0xff]
      %v1654 = vld [vmem:[%s1252 + $0xb2] sm:$0xff]
      %v1655 = vld [vmem:[%s1252 + $0xc2] sm:$0xff]
      %v1656 = vld [vmem:[%s1252 + $0xca] sm:$0xff]
      %v1657 = vld [vmem:[%s1252 + $0xda] sm:$0xff]
      %v1658 = vld [vmem:[%s1252 + $0xe2] sm:$0xff]
      %v1659 = vld [vmem:[%s1252 + $0xf2] sm:$0xff]
      %v1660 = vld [vmem:[%s1252 + $0xfa] sm:$0xff]
      %v1661 = vld [vmem:[%s1252 + $0x10a] sm:$0xff]
      %v1662 = vld [vmem:[%s1252 + $0x112] sm:$0xff]
      %v1663 = vld [vmem:[%s1252 + $0x122] sm:$0xff]
      %v1664 = vld [vmem:[%s1252 + $0x12a] sm:$0xff]
      %v1665 = vld [vmem:[%s1252 + $0x13a] sm:$0xff]
      %v1666 = vld [vmem:[%s1252 + $0x142] sm:$0xff]
      %v1667 = vld [vmem:[%s1252 + $0x152] sm:$0xff]
      %v1668 = vld [vmem:[%s1252 + $0x15a] sm:$0xff]
      %v1669 = vld [vmem:[%s1252 + $0x16a] sm:$0xff]
      %v1670 = vld [vmem:[%s1252 + $0x172] sm:$0xff]
      %1703 = vrot.lane.b32.xlu0 %v1639, 32
      %v1704 = vpop.permute.xlu0 %1703
      %1705 = vrot.lane.b32.xlu0 %v1640, 32
      %v1706 = vpop.permute.xlu0 %1705
      %1707 = vrot.lane.b32.xlu0 %v1641, 32
      %v1708 = vpop.permute.xlu0 %1707
      %1709 = vrot.lane.b32.xlu0 %v1642, 32
      %v1710 = vpop.permute.xlu0 %1709
      %1711 = vrot.lane.b32.xlu0 %v1643, 32
      %v1712 = vpop.permute.xlu0 %1711
      %1713 = vrot.lane.b32.xlu0 %v1644, 32
      %v1714 = vpop.permute.xlu0 %1713
      %1715 = vrot.lane.b32.xlu0 %v1645, 32
      %v1716 = vpop.permute.xlu0 %1715
      %1717 = vrot.lane.b32.xlu0 %v1646, 32
      %v1718 = vpop.permute.xlu0 %1717
      %1719 = vrot.lane.b32.xlu0 %v1647, 32
      %v1720 = vpop.permute.xlu0 %1719
      %1721 = vrot.lane.b32.xlu0 %v1648, 32
      %v1722 = vpop.permute.xlu0 %1721
      %1723 = vrot.lane.b32.xlu0 %v1649, 32
      %v1724 = vpop.permute.xlu0 %1723
      %1725 = vrot.lane.b32.xlu0 %v1650, 32
      %v1726 = vpop.permute.xlu0 %1725
      %1727 = vrot.lane.b32.xlu0 %v1651, 32
      %v1728 = vpop.permute.xlu0 %1727
      %1729 = vrot.lane.b32.xlu0 %v1652, 32
      %v1730 = vpop.permute.xlu0 %1729
      %1731 = vrot.lane.b32.xlu0 %v1653, 32
      %v1732 = vpop.permute.xlu0 %1731
      %1733 = vrot.lane.b32.xlu0 %v1654, 32
      %v1734 = vpop.permute.xlu0 %1733
      %1735 = vrot.lane.b32.xlu0 %v1655, 32
      %v1736 = vpop.permute.xlu0 %1735
      %1737 = vrot.lane.b32.xlu0 %v1656, 32
      %v1738 = vpop.permute.xlu0 %1737
      %1739 = vrot.lane.b32.xlu0 %v1657, 32
      %v1740 = vpop.permute.xlu0 %1739
      %1741 = vrot.lane.b32.xlu0 %v1658, 32
      %v1742 = vpop.permute.xlu0 %1741
      %1743 = vrot.lane.b32.xlu0 %v1659, 32
      %v1744 = vpop.permute.xlu0 %1743
      %1745 = vrot.lane.b32.xlu0 %v1660, 32
      %v1746 = vpop.permute.xlu0 %1745
      %1747 = vrot.lane.b32.xlu0 %v1661, 32
      %v1748 = vpop.permute.xlu0 %1747
      %1749 = vrot.lane.b32.xlu0 %v1662, 32
      %v1750 = vpop.permute.xlu0 %1749
      %1751 = vrot.lane.b32.xlu0 %v1663, 32
      %v1752 = vpop.permute.xlu0 %1751
      %1753 = vrot.lane.b32.xlu0 %v1664, 32
      %v1754 = vpop.permute.xlu0 %1753
      %1755 = vrot.lane.b32.xlu0 %v1665, 32
      %v1756 = vpop.permute.xlu0 %1755
      %1757 = vrot.lane.b32.xlu0 %v1666, 32
      %v1758 = vpop.permute.xlu0 %1757
      %1759 = vrot.lane.b32.xlu0 %v1667, 32
      %v1760 = vpop.permute.xlu0 %1759
      %1761 = vrot.lane.b32.xlu0 %v1668, 32
      %v1762 = vpop.permute.xlu0 %1761
      %1763 = vrot.lane.b32.xlu0 %v1669, 32
      %v1764 = vpop.permute.xlu0 %1763
      %1765 = vrot.lane.b32.xlu0 %v1670, 32
      %v1766 = vpop.permute.xlu0 %1765
      %vm1799 = vcmask 294144
      %1800 = vst.msk [vmem:[#allocation2] sm:$0xff] %vm1799, %v1704
      %1801 = vst.msk [vmem:[#allocation2 + $0x8] sm:$0xff] %vm1799, %v1706
      %1802 = vst.msk [vmem:[#allocation2 + $0x10] sm:$0xff] %vm1799, %v1708
      %1803 = vst.msk [vmem:[#allocation2 + $0x18] sm:$0xff] %vm1799, %v1710
      %1804 = vst.msk [vmem:[#allocation2 + $0x20] sm:$0xff] %vm1799, %v1712
      %1805 = vst.msk [vmem:[#allocation2 + $0x28] sm:$0xff] %vm1799, %v1714
      %1806 = vst.msk [vmem:[#allocation2 + $0x30] sm:$0xff] %vm1799, %v1716
      %1807 = vst.msk [vmem:[#allocation2 + $0x38] sm:$0xff] %vm1799, %v1718
      %1808 = vst.msk [vmem:[#allocation2 + $0x40] sm:$0xff] %vm1799, %v1720
      %1809 = vst.msk [vmem:[#allocation2 + $0x48] sm:$0xff] %vm1799, %v1722
      %1810 = vst.msk [vmem:[#allocation2 + $0x50] sm:$0xff] %vm1799, %v1724
      %1811 = vst.msk [vmem:[#allocation2 + $0x58] sm:$0xff] %vm1799, %v1726
      %1812 = vst.msk [vmem:[#allocation2 + $0x60] sm:$0xff] %vm1799, %v1728
      %1813 = vst.msk [vmem:[#allocation2 + $0x68] sm:$0xff] %vm1799, %v1730
      %1814 = vst.msk [vmem:[#allocation2 + $0x70] sm:$0xff] %vm1799, %v1732
      %1815 = vst.msk [vmem:[#allocation2 + $0x78] sm:$0xff] %vm1799, %v1734
      %1816 = vst.msk [vmem:[#allocation2 + $0x80] sm:$0xff] %vm1799, %v1736
      %1817 = vst.msk [vmem:[#allocation2 + $0x88] sm:$0xff] %vm1799, %v1738
      %1818 = vst.msk [vmem:[#allocation2 + $0x90] sm:$0xff] %vm1799, %v1740
      %1819 = vst.msk [vmem:[#allocation2 + $0x98] sm:$0xff] %vm1799, %v1742
      %1820 = vst.msk [vmem:[#allocation2 + $0xa0] sm:$0xff] %vm1799, %v1744
      %1821 = vst.msk [vmem:[#allocation2 + $0xa8] sm:$0xff] %vm1799, %v1746
      %1822 = vst.msk [vmem:[#allocation2 + $0xb0] sm:$0xff] %vm1799, %v1748
      %1823 = vst.msk [vmem:[#allocation2 + $0xb8] sm:$0xff] %vm1799, %v1750
      %1824 = vst.msk [vmem:[#allocation2 + $0xc0] sm:$0xff] %vm1799, %v1752
      %1825 = vst.msk [vmem:[#allocation2 + $0xc8] sm:$0xff] %vm1799, %v1754
      %1826 = vst.msk [vmem:[#allocation2 + $0xd0] sm:$0xff] %vm1799, %v1756
      %1827 = vst.msk [vmem:[#allocation2 + $0xd8] sm:$0xff] %vm1799, %v1758
      %1828 = vst.msk [vmem:[#allocation2 + $0xe0] sm:$0xff] %vm1799, %v1760
      %1829 = vst.msk [vmem:[#allocation2 + $0xe8] sm:$0xff] %vm1799, %v1762
      %1830 = vst.msk [vmem:[#allocation2 + $0xf0] sm:$0xff] %vm1799, %v1764
      %1831 = vst.msk [vmem:[#allocation2 + $0xf8] sm:$0xff] %vm1799, %v1766
      %v1832 = vld [vmem:[#allocation2] sm:$0xff]
      %v1833 = vld [vmem:[#allocation2 + $0x8] sm:$0xff]
      %v1834 = vld [vmem:[#allocation2 + $0x10] sm:$0xff]
      %v1835 = vld [vmem:[#allocation2 + $0x18] sm:$0xff]
      %v1836 = vld [vmem:[#allocation2 + $0x20] sm:$0xff]
      %v1837 = vld [vmem:[#allocation2 + $0x28] sm:$0xff]
      %v1838 = vld [vmem:[#allocation2 + $0x30] sm:$0xff]
      %v1839 = vld [vmem:[#allocation2 + $0x38] sm:$0xff]
      %v1840 = vld [vmem:[#allocation2 + $0x40] sm:$0xff]
      %v1841 = vld [vmem:[#allocation2 + $0x48] sm:$0xff]
      %v1842 = vld [vmem:[#allocation2 + $0x50] sm:$0xff]
      %v1843 = vld [vmem:[#allocation2 + $0x58] sm:$0xff]
      %v1844 = vld [vmem:[#allocation2 + $0x60] sm:$0xff]
      %v1845 = vld [vmem:[#allocation2 + $0x68] sm:$0xff]
      %v1846 = vld [vmem:[#allocation2 + $0x70] sm:$0xff]
      %v1847 = vld [vmem:[#allocation2 + $0x78] sm:$0xff]
      %v1848 = vld [vmem:[#allocation2 + $0x80] sm:$0xff]
      %v1849 = vld [vmem:[#allocation2 + $0x88] sm:$0xff]
      %v1850 = vld [vmem:[#allocation2 + $0x90] sm:$0xff]
      %v1851 = vld [vmem:[#allocation2 + $0x98] sm:$0xff]
      %v1852 = vld [vmem:[#allocation2 + $0xa0] sm:$0xff]
      %v1853 = vld [vmem:[#allocation2 + $0xa8] sm:$0xff]
      %v1854 = vld [vmem:[#allocation2 + $0xb0] sm:$0xff]
      %v1855 = vld [vmem:[#allocation2 + $0xb8] sm:$0xff]
      %v1856 = vld [vmem:[#allocation2 + $0xc0] sm:$0xff]
      %v1857 = vld [vmem:[#allocation2 + $0xc8] sm:$0xff]
      %v1858 = vld [vmem:[#allocation2 + $0xd0] sm:$0xff]
      %v1859 = vld [vmem:[#allocation2 + $0xd8] sm:$0xff]
      %v1860 = vld [vmem:[#allocation2 + $0xe0] sm:$0xff]
      %v1861 = vld [vmem:[#allocation2 + $0xe8] sm:$0xff]
      %v1862 = vld [vmem:[#allocation2 + $0xf0] sm:$0xff]
      %v1863 = vld [vmem:[#allocation2 + $0xf8] sm:$0xff]
      %v1864 = vld [vmem:[%s1] sm:$0xff]
      %v1865 = vld [vmem:[%s1 + $0x8] sm:$0xff]
      %v1866 = vld [vmem:[%s1 + $0x10] sm:$0xff]
      %v1867 = vld [vmem:[%s1 + $0x18] sm:$0xff]
      %v1868 = vld [vmem:[%s1 + $0x20] sm:$0xf]
      %v1869 = vld [vmem:[%s2] sm:$0x1]
      %v1871 = vlaneseq
      %v1872 = vshrl.u32 %v1871, 7
      %v1873 = vsub.s32 0, %v1872
      %v1874 = vrot.slane %v1869, %v1873
      %vm1876 = vcmask 293888
      %v1878 = vsel %vm1876, %v1832, 0
      %v1881 = vsel %vm1876, %v1833, 0
      %v1884 = vsel %vm1876, %v1834, 0
      %v1887 = vsel %vm1876, %v1835, 0
      %v1890 = vsel %vm1876, %v1836, 0
      %v1893 = vsel %vm1876, %v1837, 0
      %v1896 = vsel %vm1876, %v1838, 0
      %v1899 = vsel %vm1876, %v1839, 0
      %v1902 = vsel %vm1876, %v1840, 0
      %v1905 = vsel %vm1876, %v1841, 0
      %v1908 = vsel %vm1876, %v1842, 0
      %v1911 = vsel %vm1876, %v1843, 0
      %v1914 = vsel %vm1876, %v1844, 0
      %v1917 = vsel %vm1876, %v1845, 0
      %v1920 = vsel %vm1876, %v1846, 0
      %v1923 = vsel %vm1876, %v1847, 0
      %v1926 = vsel %vm1876, %v1848, 0
      %v1929 = vsel %vm1876, %v1849, 0
      %v1932 = vsel %vm1876, %v1850, 0
      %v1935 = vsel %vm1876, %v1851, 0
      %v1938 = vsel %vm1876, %v1852, 0
      %v1941 = vsel %vm1876, %v1853, 0
      %v1944 = vsel %vm1876, %v1854, 0
      %v1947 = vsel %vm1876, %v1855, 0
      %v1950 = vsel %vm1876, %v1856, 0
      %v1953 = vsel %vm1876, %v1857, 0
      %v1956 = vsel %vm1876, %v1858, 0
      %v1959 = vsel %vm1876, %v1859, 0
      %v1962 = vsel %vm1876, %v1860, 0
      %v1965 = vsel %vm1876, %v1861, 0
      %v1968 = vsel %vm1876, %v1862, 0
      %v1971 = vsel %vm1876, %v1863, 0
      %vm1973 = vcmask 1043456
      %v1975 = vsel %vm1973, %v1868, 0
      %1977 = vmatprep.subr.mxu0 0.0
      %1978 = vmatpush1.msra.mxu0 %v1864
      %1979 = vmatprep.subr.mxu0 0.0
      %1980 = vmatpush1.msra.mxu0 %v1865
      %1981 = vmatprep.subr.mxu0 0.0
      %1982 = vmatpush1.msra.mxu0 %v1866
      %1983 = vmatprep.subr.mxu0 0.0
      %1984 = vmatpush1.msra.mxu0 %v1867
      %1985 = vmatprep.subr.mxu0 0.0
      %1986 = vmatpush1.msra.mxu0 %v1975
      %1987 = vmatprep.subr.mxu0 0.0
      %1988 = vmatpush1.msra.mxu0 0.0
      %1989 = vmatprep.subr.mxu0 0.0
      %1990 = vmatpush1.msra.mxu0 0.0
      %1991 = vmatprep.subr.mxu0 0.0
      %1992 = vmatpush1.msra.mxu0 0.0
      %1993 = vmatprep.subr.mxu0 0.0
      %1994 = vmatpush1.msra.mxu0 0.0
      %1995 = vmatprep.subr.mxu0 0.0
      %1996 = vmatpush1.msra.mxu0 0.0
      %1997 = vmatprep.subr.mxu0 0.0
      %1998 = vmatpush1.msra.mxu0 0.0
      %1999 = vmatprep.subr.mxu0 0.0
      %2000 = vmatpush1.msra.mxu0 0.0
      %2001 = vmatprep.subr.mxu0 0.0
      %2002 = vmatpush1.msra.mxu0 0.0
      %2003 = vmatprep.subr.mxu0 0.0
      %2004 = vmatpush1.msra.mxu0 0.0
      %2005 = vmatprep.subr.mxu0 0.0
      %2006 = vmatpush1.msra.mxu0 0.0
      %2007 = vmatprep.subr.mxu0 0.0
      %2008 = vmatpush1.msra.mxu0 0.0
      %2009 = vmatprep.subr.mxu0 0.0
      %2010 = vmatpush1.msra.mxu0 0.0
      %2011 = vmatprep.subr.mxu0 0.0
      %2012 = vmatpush1.msra.mxu0 0.0
      %2013 = vmatprep.subr.mxu0 0.0
      %2014 = vmatpush1.msra.mxu0 0.0
      %2015 = vmatprep.subr.mxu0 0.0
      %2016 = vmatpush1.msra.mxu0 0.0
      %2017 = vmatprep.subr.mxu0 0.0
      %2018 = vmatpush1.msra.mxu0 0.0
      %2019 = vmatprep.subr.mxu0 0.0
      %2020 = vmatpush1.msra.mxu0 0.0
      %2021 = vmatprep.subr.mxu0 0.0
      %2022 = vmatpush1.msra.mxu0 0.0
      %2023 = vmatprep.subr.mxu0 0.0
      %2024 = vmatpush1.msra.mxu0 0.0
      %2025 = vmatprep.subr.mxu0 0.0
      %2026 = vmatpush1.msra.mxu0 0.0
      %2027 = vmatprep.subr.mxu0 0.0
      %2028 = vmatpush1.msra.mxu0 0.0
      %2029 = vmatprep.subr.mxu0 0.0
      %2030 = vmatpush1.msra.mxu0 0.0
      %2031 = vmatprep.subr.mxu0 0.0
      %2032 = vmatpush1.msra.mxu0 0.0
      %2033 = vmatprep.subr.mxu0 0.0
      %2034 = vmatpush1.msra.mxu0 0.0
      %2035 = vmatprep.subr.mxu0 0.0
      %2036 = vmatpush1.msra.mxu0 0.0
      %2037 = vmatprep.subr.mxu0 0.0
      %2038 = vmatpush1.msra.mxu0 0.0
      %2039 = vmatprep.subr.mxu0 0.0
      %2040 = vmatpush1.msra.mxu0 0.0
      %2041 = vmatprep.mubr.f32.mxu0 0.0
      %2042 = vmatmul.mubr.f32.gmra.mrb[0].mxu0 %v1878
      %v2043 = vpop.f32.mrb[0].mxu0
      %v2044 = vadd.f32 %v1874, %v2043
      %v2045 = vpop.f32.mrb[0].mxu0
      %2046 = vmatprep.mubr.f32.mxu0 0.0
      %2047 = vmatmul.mubr.f32.gmra.mrb[0].mxu0 %v1881
      %v2048 = vpop.f32.mrb[0].mxu0
      %v2049 = vadd.f32 %v1874, %v2048
      %v2050 = vpop.f32.mrb[0].mxu0
      %2051 = vmatprep.mubr.f32.mxu0 0.0
      %2052 = vmatmul.mubr.f32.gmra.mrb[0].mxu0 %v1884
      %v2053 = vpop.f32.mrb[0].mxu0
      %v2054 = vadd.f32 %v1874, %v2053
      %v2055 = vpop.f32.mrb[0].mxu0
      %2056 = vmatprep.mubr.f32.mxu0 0.0
      %2057 = vmatmul.mubr.f32.gmra.mrb[0].mxu0 %v1887
      %v2058 = vpop.f32.mrb[0].mxu0
      %v2059 = vadd.f32 %v1874, %v2058
      %v2060 = vpop.f32.mrb[0].mxu0
      %2061 = vmatprep.mubr.f32.mxu0 0.0
      %2062 = vmatmul.mubr.f32.gmra.mrb[0].mxu0 %v1890
      %v2063 = vpop.f32.mrb[0].mxu0
      %v2064 = vadd.f32 %v1874, %v2063
      %v2065 = vpop.f32.mrb[0].mxu0
      %2066 = vmatprep.mubr.f32.mxu0 0.0
      %2067 = vmatmul.mubr.f32.gmra.mrb[0].mxu0 %v1893
      %v2068 = vpop.f32.mrb[0].mxu0
      %v2069 = vadd.f32 %v1874, %v2068
      %v2070 = vpop.f32.mrb[0].mxu0
      %2071 = vmatprep.mubr.f32.mxu0 0.0
      %2072 = vmatmul.mubr.f32.gmra.mrb[0].mxu0 %v1896
      %v2073 = vpop.f32.mrb[0].mxu0
      %v2074 = vadd.f32 %v1874, %v2073
      %v2075 = vpop.f32.mrb[0].mxu0
      %2076 = vmatprep.mubr.f32.mxu0 0.0
      %2077 = vmatmul.mubr.f32.gmra.mrb[0].mxu0 %v1899
      %v2078 = vpop.f32.mrb[0].mxu0
      %v2079 = vadd.f32 %v1874, %v2078
      %v2080 = vpop.f32.mrb[0].mxu0
      %2081 = vmatprep.mubr.f32.mxu0 0.0
      %2082 = vmatmul.mubr.f32.gmra.mrb[0].mxu0 %v1902
      %v2083 = vpop.f32.mrb[0].mxu0
      %v2084 = vadd.f32 %v1874, %v2083
      %v2085 = vpop.f32.mrb[0].mxu0
      %2086 = vmatprep.mubr.f32.mxu0 0.0
      %2087 = vmatmul.mubr.f32.gmra.mrb[0].mxu0 %v1905
      %v2088 = vpop.f32.mrb[0].mxu0
      %v2089 = vadd.f32 %v1874, %v2088
      %v2090 = vpop.f32.mrb[0].mxu0
      %2091 = vmatprep.mubr.f32.mxu0 0.0
      %2092 = vmatmul.mubr.f32.gmra.mrb[0].mxu0 %v1908
      %v2093 = vpop.f32.mrb[0].mxu0
      %v2094 = vadd.f32 %v1874, %v2093
      %v2095 = vpop.f32.mrb[0].mxu0
      %2096 = vmatprep.mubr.f32.mxu0 0.0
      %2097 = vmatmul.mubr.f32.gmra.mrb[0].mxu0 %v1911
      %v2098 = vpop.f32.mrb[0].mxu0
      %v2099 = vadd.f32 %v1874, %v2098
      %v2100 = vpop.f32.mrb[0].mxu0
      %2101 = vmatprep.mubr.f32.mxu0 0.0
      %2102 = vmatmul.mubr.f32.gmra.mrb[0].mxu0 %v1914
      %v2103 = vpop.f32.mrb[0].mxu0
      %v2104 = vadd.f32 %v1874, %v2103
      %v2105 = vpop.f32.mrb[0].mxu0
      %2106 = vmatprep.mubr.f32.mxu0 0.0
      %2107 = vmatmul.mubr.f32.gmra.mrb[0].mxu0 %v1917
      %v2108 = vpop.f32.mrb[0].mxu0
      %v2109 = vadd.f32 %v1874, %v2108
      %v2110 = vpop.f32.mrb[0].mxu0
      %2111 = vmatprep.mubr.f32.mxu0 0.0
      %2112 = vmatmul.mubr.f32.gmra.mrb[0].mxu0 %v1920
      %v2113 = vpop.f32.mrb[0].mxu0
      %v2114 = vadd.f32 %v1874, %v2113
      %v2115 = vpop.f32.mrb[0].mxu0
      %2116 = vmatprep.mubr.f32.mxu0 0.0
      %2117 = vmatmul.mubr.f32.gmra.mrb[0].mxu0 %v1923
      %v2118 = vpop.f32.mrb[0].mxu0
      %v2119 = vadd.f32 %v1874, %v2118
      %v2120 = vpop.f32.mrb[0].mxu0
      %2121 = vmatprep.mubr.f32.mxu0 0.0
      %2122 = vmatmul.mubr.f32.gmra.mrb[0].mxu0 %v1926
      %v2123 = vpop.f32.mrb[0].mxu0
      %v2124 = vadd.f32 %v1874, %v2123
      %v2125 = vpop.f32.mrb[0].mxu0
      %2126 = vmatprep.mubr.f32.mxu0 0.0
      %2127 = vmatmul.mubr.f32.gmra.mrb[0].mxu0 %v1929
      %v2128 = vpop.f32.mrb[0].mxu0
      %v2129 = vadd.f32 %v1874, %v2128
      %v2130 = vpop.f32.mrb[0].mxu0
      %2131 = vmatprep.mubr.f32.mxu0 0.0
      %2132 = vmatmul.mubr.f32.gmra.mrb[0].mxu0 %v1932
      %v2133 = vpop.f32.mrb[0].mxu0
      %v2134 = vadd.f32 %v1874, %v2133
      %v2135 = vpop.f32.mrb[0].mxu0
      %2136 = vmatprep.mubr.f32.mxu0 0.0
      %2137 = vmatmul.mubr.f32.gmra.mrb[0].mxu0 %v1935
      %v2138 = vpop.f32.mrb[0].mxu0
      %v2139 = vadd.f32 %v1874, %v2138
      %v2140 = vpop.f32.mrb[0].mxu0
      %2141 = vmatprep.mubr.f32.mxu0 0.0
      %2142 = vmatmul.mubr.f32.gmra.mrb[0].mxu0 %v1938
      %v2143 = vpop.f32.mrb[0].mxu0
      %v2144 = vadd.f32 %v1874, %v2143
      %v2145 = vpop.f32.mrb[0].mxu0
      %2146 = vmatprep.mubr.f32.mxu0 0.0
      %2147 = vmatmul.mubr.f32.gmra.mrb[0].mxu0 %v1941
      %v2148 = vpop.f32.mrb[0].mxu0
      %v2149 = vadd.f32 %v1874, %v2148
      %v2150 = vpop.f32.mrb[0].mxu0
      %2151 = vmatprep.mubr.f32.mxu0 0.0
      %2152 = vmatmul.mubr.f32.gmra.mrb[0].mxu0 %v1944
      %v2153 = vpop.f32.mrb[0].mxu0
      %v2154 = vadd.f32 %v1874, %v2153
      %v2155 = vpop.f32.mrb[0].mxu0
      %2156 = vmatprep.mubr.f32.mxu0 0.0
      %2157 = vmatmul.mubr.f32.gmra.mrb[0].mxu0 %v1947
      %v2158 = vpop.f32.mrb[0].mxu0
      %v2159 = vadd.f32 %v1874, %v2158
      %v2160 = vpop.f32.mrb[0].mxu0
      %2161 = vmatprep.mubr.f32.mxu0 0.0
      %2162 = vmatmul.mubr.f32.gmra.mrb[0].mxu0 %v1950
      %v2163 = vpop.f32.mrb[0].mxu0
      %v2164 = vadd.f32 %v1874, %v2163
      %v2165 = vpop.f32.mrb[0].mxu0
      %2166 = vmatprep.mubr.f32.mxu0 0.0
      %2167 = vmatmul.mubr.f32.gmra.mrb[0].mxu0 %v1953
      %v2168 = vpop.f32.mrb[0].mxu0
      %v2169 = vadd.f32 %v1874, %v2168
      %v2170 = vpop.f32.mrb[0].mxu0
      %2171 = vmatprep.mubr.f32.mxu0 0.0
      %2172 = vmatmul.mubr.f32.gmra.mrb[0].mxu0 %v1956
      %v2173 = vpop.f32.mrb[0].mxu0
      %v2174 = vadd.f32 %v1874, %v2173
      %v2175 = vpop.f32.mrb[0].mxu0
      %2176 = vmatprep.mubr.f32.mxu0 0.0
      %2177 = vmatmul.mubr.f32.gmra.mrb[0].mxu0 %v1959
      %v2178 = vpop.f32.mrb[0].mxu0
      %v2179 = vadd.f32 %v1874, %v2178
      %v2180 = vpop.f32.mrb[0].mxu0
      %2181 = vmatprep.mubr.f32.mxu0 0.0
      %2182 = vmatmul.mubr.f32.gmra.mrb[0].mxu0 %v1962
      %v2183 = vpop.f32.mrb[0].mxu0
      %v2184 = vadd.f32 %v1874, %v2183
      %v2185 = vpop.f32.mrb[0].mxu0
      %2186 = vmatprep.mubr.f32.mxu0 0.0
      %2187 = vmatmul.mubr.f32.gmra.mrb[0].mxu0 %v1965
      %v2188 = vpop.f32.mrb[0].mxu0
      %v2189 = vadd.f32 %v1874, %v2188
      %v2190 = vpop.f32.mrb[0].mxu0
      %2191 = vmatprep.mubr.f32.mxu0 0.0
      %2192 = vmatmul.mubr.f32.gmra.mrb[0].mxu0 %v1968
      %v2193 = vpop.f32.mrb[0].mxu0
      %v2194 = vadd.f32 %v1874, %v2193
      %v2195 = vpop.f32.mrb[0].mxu0
      %2196 = vmatprep.mubr.f32.mxu0 0.0
      %2197 = vmatmul.mubr.f32.gmra.mrb[0].mxu0 %v1971
      %v2198 = vpop.f32.mrb[0].mxu0
      %v2199 = vadd.f32 %v1874, %v2198
      %v2200 = vpop.f32.mrb[0].mxu0
      %2201 = vdwg.mxu0
      %v2202 = vmax.f32 %v2044, 0.0
      %v2203 = vmax.f32 %v2049, 0.0
      %v2204 = vmax.f32 %v2054, 0.0
      %v2205 = vmax.f32 %v2059, 0.0
      %v2206 = vmax.f32 %v2064, 0.0
      %v2207 = vmax.f32 %v2069, 0.0
      %v2208 = vmax.f32 %v2074, 0.0
      %v2209 = vmax.f32 %v2079, 0.0
      %v2210 = vmax.f32 %v2084, 0.0
      %v2211 = vmax.f32 %v2089, 0.0
      %v2212 = vmax.f32 %v2094, 0.0
      %v2213 = vmax.f32 %v2099, 0.0
      %v2214 = vmax.f32 %v2104, 0.0
      %v2215 = vmax.f32 %v2109, 0.0
      %v2216 = vmax.f32 %v2114, 0.0
      %v2217 = vmax.f32 %v2119, 0.0
      %v2218 = vmax.f32 %v2124, 0.0
      %v2219 = vmax.f32 %v2129, 0.0
      %v2220 = vmax.f32 %v2134, 0.0
      %v2221 = vmax.f32 %v2139, 0.0
      %v2222 = vmax.f32 %v2144, 0.0
      %v2223 = vmax.f32 %v2149, 0.0
      %v2224 = vmax.f32 %v2154, 0.0
      %v2225 = vmax.f32 %v2159, 0.0
      %v2226 = vmax.f32 %v2164, 0.0
      %v2227 = vmax.f32 %v2169, 0.0
      %v2228 = vmax.f32 %v2174, 0.0
      %v2229 = vmax.f32 %v2179, 0.0
      %v2230 = vmax.f32 %v2184, 0.0
      %v2231 = vmax.f32 %v2189, 0.0
      %v2232 = vmax.f32 %v2194, 0.0
      %v2233 = vmax.f32 %v2199, 0.0
      %2234 = vst [vmem:[%s219] sm:$0xff] %v2202
      %2235 = vst [vmem:[%s219 + $0x8] sm:$0xff] %v2203
      %2236 = vst [vmem:[%s219 + $0x10] sm:$0xff] %v2204
      %2237 = vst [vmem:[%s219 + $0x18] sm:$0xff] %v2205
      %2238 = vst [vmem:[%s219 + $0x20] sm:$0xff] %v2206
      %2239 = vst [vmem:[%s219 + $0x28] sm:$0xff] %v2207
      %2240 = vst [vmem:[%s219 + $0x30] sm:$0xff] %v2208
      %2241 = vst [vmem:[%s219 + $0x38] sm:$0xff] %v2209
      %2242 = vst [vmem:[%s219 + $0x40] sm:$0xff] %v2210
      %2243 = vst [vmem:[%s219 + $0x48] sm:$0xff] %v2211
      %2244 = vst [vmem:[%s219 + $0x50] sm:$0xff] %v2212
      %2245 = vst [vmem:[%s219 + $0x58] sm:$0xff] %v2213
      %2246 = vst [vmem:[%s219 + $0x60] sm:$0xff] %v2214
      %2247 = vst [vmem:[%s219 + $0x68] sm:$0xff] %v2215
      %2248 = vst [vmem:[%s219 + $0x70] sm:$0xff] %v2216
      %2249 = vst [vmem:[%s219 + $0x78] sm:$0xff] %v2217
      %2250 = vst [vmem:[%s219 + $0x80] sm:$0xff] %v2218
      %2251 = vst [vmem:[%s219 + $0x88] sm:$0xff] %v2219
      %2252 = vst [vmem:[%s219 + $0x90] sm:$0xff] %v2220
      %2253 = vst [vmem:[%s219 + $0x98] sm:$0xff] %v2221
      %2254 = vst [vmem:[%s219 + $0xa0] sm:$0xff] %v2222
      %2255 = vst [vmem:[%s219 + $0xa8] sm:$0xff] %v2223
      %2256 = vst [vmem:[%s219 + $0xb0] sm:$0xff] %v2224
      %2257 = vst [vmem:[%s219 + $0xb8] sm:$0xff] %v2225
      %2258 = vst [vmem:[%s219 + $0xc0] sm:$0xff] %v2226
      %2259 = vst [vmem:[%s219 + $0xc8] sm:$0xff] %v2227
      %2260 = vst [vmem:[%s219 + $0xd0] sm:$0xff] %v2228
      %2261 = vst [vmem:[%s219 + $0xd8] sm:$0xff] %v2229
      %2262 = vst [vmem:[%s219 + $0xe0] sm:$0xff] %v2230
      %2263 = vst [vmem:[%s219 + $0xe8] sm:$0xff] %v2231
      %2264 = vst [vmem:[%s219 + $0xf0] sm:$0xff] %v2232
      %2265 = vst [vmem:[%s219 + $0xf8] sm:$0xff] %v2233
      %p2266 = scmp.eq.s32.totalorder %s17, 0
      // Predicated region
      $region33: #{block_forward.2} parent=31 // pred_check
        %p2267 = pneg %p2266
      $region34: #{block_forward.2} parent=31 // pred_check_branch
        %2269 = sbr.rel (%p2267) target = $region36
      $region35: #{block_forward.2} parent=31 // pred_region
        %2270 = vst [vmem:[%s4] sm:$0x1] 0.0
        %2271 = vst [vmem:[%s5] sm:$0x1] 0.0
      $region36: #{block_forward.2} parent=31 // pred_fallthru
        _
      %v2272 = vld [vmem:[%s4] sm:$0x1]
      %v2273 = vadd.f32 %v2202, %v2203
      %v2274 = vadd.f32 %v2273, %v2204
      %v2275 = vadd.f32 %v2274, %v2205
      %v2276 = vadd.f32 %v2275, %v2206
      %v2277 = vadd.f32 %v2276, %v2207
      %v2278 = vadd.f32 %v2277, %v2208
      %v2279 = vadd.f32 %v2278, %v2209
      %v2280 = vadd.f32 %v2279, %v2210
      %v2281 = vadd.f32 %v2280, %v2211
      %v2282 = vadd.f32 %v2281, %v2212
      %v2283 = vadd.f32 %v2282, %v2213
      %v2284 = vadd.f32 %v2283, %v2214
      %v2285 = vadd.f32 %v2284, %v2215
      %v2286 = vadd.f32 %v2285, %v2216
      %v2287 = vadd.f32 %v2286, %v2217
      %v2288 = vadd.f32 %v2287, %v2218
      %v2289 = vadd.f32 %v2288, %v2219
      %v2290 = vadd.f32 %v2289, %v2220
      %v2291 = vadd.f32 %v2290, %v2221
      %v2292 = vadd.f32 %v2291, %v2222
      %v2293 = vadd.f32 %v2292, %v2223
      %v2294 = vadd.f32 %v2293, %v2224
      %v2295 = vadd.f32 %v2294, %v2225
      %v2296 = vadd.f32 %v2295, %v2226
      %v2297 = vadd.f32 %v2296, %v2227
      %v2298 = vadd.f32 %v2297, %v2228
      %v2299 = vadd.f32 %v2298, %v2229
      %v2300 = vadd.f32 %v2299, %v2230
      %v2301 = vadd.f32 %v2300, %v2231
      %v2302 = vadd.f32 %v2301, %v2232
      %v2303 = vadd.f32 %v2302, %v2233
      %v2304 = vrot.slane %v2303, 4
      %v2305 = vadd.f32 %v2303, %v2304
      %v2306 = vrot.slane %v2305, 2
      %v2307 = vadd.f32 %v2305, %v2306
      %v2308 = vrot.slane %v2307, 1
      %v2309 = vadd.f32 %v2307, %v2308
      %v2310 = vadd.f32 %v2272, %v2309
      %2311 = vst [vmem:[%s4] sm:$0x1] %v2310
      %v2312 = vld [vmem:[%s5] sm:$0x1]
      %v2313 = vmul.f32 %v2202, %v2202
      %v2314 = vmul.f32 %v2203, %v2203
      %v2315 = vmul.f32 %v2204, %v2204
      %v2316 = vmul.f32 %v2205, %v2205
      %v2317 = vmul.f32 %v2206, %v2206
      %v2318 = vmul.f32 %v2207, %v2207
      %v2319 = vmul.f32 %v2208, %v2208
      %v2320 = vmul.f32 %v2209, %v2209
      %v2321 = vmul.f32 %v2210, %v2210
      %v2322 = vmul.f32 %v2211, %v2211
      %v2323 = vmul.f32 %v2212, %v2212
      %v2324 = vmul.f32 %v2213, %v2213
      %v2325 = vmul.f32 %v2214, %v2214
      %v2326 = vmul.f32 %v2215, %v2215
      %v2327 = vmul.f32 %v2216, %v2216
      %v2328 = vmul.f32 %v2217, %v2217
      %v2329 = vmul.f32 %v2218, %v2218
      %v2330 = vmul.f32 %v2219, %v2219
      %v2331 = vmul.f32 %v2220, %v2220
      %v2332 = vmul.f32 %v2221, %v2221
      %v2333 = vmul.f32 %v2222, %v2222
      %v2334 = vmul.f32 %v2223, %v2223
      %v2335 = vmul.f32 %v2224, %v2224
      %v2336 = vmul.f32 %v2225, %v2225
      %v2337 = vmul.f32 %v2226, %v2226
      %v2338 = vmul.f32 %v2227, %v2227
      %v2339 = vmul.f32 %v2228, %v2228
      %v2340 = vmul.f32 %v2229, %v2229
      %v2341 = vmul.f32 %v2230, %v2230
      %v2342 = vmul.f32 %v2231, %v2231
      %v2343 = vmul.f32 %v2232, %v2232
      %v2344 = vmul.f32 %v2233, %v2233
      %v2345 = vadd.f32 %v2313, %v2314
      %v2346 = vadd.f32 %v2345, %v2315
      %v2347 = vadd.f32 %v2346, %v2316
      %v2348 = vadd.f32 %v2347, %v2317
      %v2349 = vadd.f32 %v2348, %v2318
      %v2350 = vadd.f32 %v2349, %v2319
      %v2351 = vadd.f32 %v2350, %v2320
      %v2352 = vadd.f32 %v2351, %v2321
      %v2353 = vadd.f32 %v2352, %v2322
      %v2354 = vadd.f32 %v2353, %v2323
      %v2355 = vadd.f32 %v2354, %v2324
      %v2356 = vadd.f32 %v2355, %v2325
      %v2357 = vadd.f32 %v2356, %v2326
      %v2358 = vadd.f32 %v2357, %v2327
      %v2359 = vadd.f32 %v2358, %v2328
      %v2360 = vadd.f32 %v2359, %v2329
      %v2361 = vadd.f32 %v2360, %v2330
      %v2362 = vadd.f32 %v2361, %v2331
      %v2363 = vadd.f32 %v2362, %v2332
      %v2364 = vadd.f32 %v2363, %v2333
      %v2365 = vadd.f32 %v2364, %v2334
      %v2366 = vadd.f32 %v2365, %v2335
      %v2367 = vadd.f32 %v2366, %v2336
      %v2368 = vadd.f32 %v2367, %v2337
      %v2369 = vadd.f32 %v2368, %v2338
      %v2370 = vadd.f32 %v2369, %v2339
      %v2371 = vadd.f32 %v2370, %v2340
      %v2372 = vadd.f32 %v2371, %v2341
      %v2373 = vadd.f32 %v2372, %v2342
      %v2374 = vadd.f32 %v2373, %v2343
      %v2375 = vadd.f32 %v2374, %v2344
      %v2376 = vrot.slane %v2375, 4
      %v2377 = vadd.f32 %v2375, %v2376
      %v2378 = vrot.slane %v2377, 2
      %v2379 = vadd.f32 %v2377, %v2378
      %v2380 = vrot.slane %v2379, 1
      %v2381 = vadd.f32 %v2379, %v2380
      %v2382 = vadd.f32 %v2312, %v2381
      %2383 = vst [vmem:[%s5] sm:$0x1] %v2382
      %s2384 = smul.u32 32, %s17
      %p2385 = scmp.lt.s32.totalorder %s2384, 63
      %s2386 = scalar_select %p2385, %s2384, 63
      %s2387 = smul.addr %s2386, 8
      %s2388 = scalar_lea.vmem %s3, %s2387
      // Predicated region
      $region37: #{block_forward.2} parent=31 // pred_check
        %p2389 = pneg %p103
      $region38: #{block_forward.2} parent=31 // pred_check_branch
        %2391 = sbr.rel (%p2389) target = $region40
      $region39: #{block_forward.2} parent=31 // pred_region
        %s2392 = smul.u32 32, %s17
      $region40: #{block_forward.2} parent=31 // pred_fallthru
        _
      // Predicated region
      $region41: #{block_forward.2} parent=31 // pred_check
        %p2393 = pneg %p124
      $region42: #{block_forward.2} parent=31 // pred_check_branch
        %2395 = sbr.rel (%p2393) target = $region44
      $region43: #{block_forward.2} parent=31 // pred_region
        _
      $region44: #{block_forward.2} parent=31 // pred_fallthru
        _
      // Predicated region
      $region45: #{block_forward.2} parent=31 // pred_check
        %p2396 = pneg %p145
      $region46: #{block_forward.2} parent=31 // pred_check_branch
        %2398 = sbr.rel (%p2396) target = $region48
      $region47: #{block_forward.2} parent=31 // pred_region
        _
      $region48: #{block_forward.2} parent=31 // pred_fallthru
        _
      // Predicated region
      $region49: #{block_forward.2} parent=31 // pred_check
        %p2399 = pneg %p124
      $region50: #{block_forward.2} parent=31 // pred_check_branch
        %2401 = sbr.rel (%p2399) target = $region52
      $region51: #{block_forward.2} parent=31 // pred_region
        _
      $region52: #{block_forward.2} parent=31 // pred_fallthru
        _
      // Predicated region
      $region53: #{block_forward.2} parent=31 // pred_check
        %p2402 = pneg %p145
      $region54: #{block_forward.2} parent=31 // pred_check_branch
        %2404 = sbr.rel (%p2402) target = $region56
      $region55: #{block_forward.2} parent=31 // pred_region
        _
      $region56: #{block_forward.2} parent=31 // pred_fallthru
        _
    $region32: #{block_forward.2} parent=5 // pred_fallthru
      _
    %p2405 = scmp.le.s32.totalorder 2, %s12
    // Predicated region
    $region57: #{block_forward.2} parent=5 // pred_check
      %p2406 = pneg %p2405
    $region58: #{block_forward.2} parent=5 // pred_check_branch
      %2408 = sbr.rel (%p2406) target = $region60
    $region59: #{block_forward.2} parent=5 // pred_region
      %s2409 = ssub.s32 %s12, 2
      // Predicated region
      $region61: #{block_forward.2} parent=59 // pred_check
        %p2410 = pneg %p109
      $region62: #{block_forward.2} parent=59 // pred_check_branch
        %2412 = sbr.rel (%p2410) target = $region64
      $region63: #{block_forward.2} parent=59 // pred_region
        %s2413 = smul.u32 32, %s18
        %p2414 = scmp.lt.s32.totalorder %s2413, 63
        %s2415 = scalar_select %p2414, %s2413, 63
        %s2416 = smul.addr %s2415, 8
        %s2417 = scalar_lea.vmem %s3, %s2416
      $region64: #{block_forward.2} parent=59 // pred_fallthru
        _
    $region60: #{block_forward.2} parent=5 // pred_fallthru
      _
  $region6: #{block_forward.2} parent=0 // loop_footer
    %s16 = sadd.s32 1, %s12
  $region7: #{block_forward.2} parent=0 // loop_footer_branch
    %11 = sbr.rel target = $region3
  $region8: #{block_forward.2} parent=0 // loop_exit
    _

</llo_original>
